<compile_context>
chip_gen: v6e
topology: v6e:2x2x1
jax: 0.10.0
libtpu: 0.0.40
codegen_flags: <defaults>
</compile_context>

<pallas_src>
import jax
import jax.numpy as jnp
import numpy as np
from jax.experimental import pallas as pl
from jax.experimental.pallas import tpu as pltpu


def seq2seq_attn_kernel(x_enc_ref, prev_ref,
                        wxe_ref, whe_ref, be_ref,
                        wxd_prev_ref, wxd_ctx_ref, whd_ref, bd_ref,
                        ow_ref, ob_ref,
                        preds_ref,
                        dech_ref):
    T, HP = x_enc_ref.shape           # static Python ints (T=8, HP=128)

    def gates_to_hc(gates, c):
        # Gate columns were permuted in the wrapper to [i, f, o, g]:
        # one sigmoid over a contiguous 3*HP slice, one tanh on the last HP slice.
        # Every slice boundary is a multiple of 128 lanes (vreg-aligned).
        ifo = jax.nn.sigmoid(gates[:, :3 * HP])
        g_g = jnp.tanh(gates[:, 3 * HP:])
        i_g = ifo[:, 0 * HP:1 * HP]
        f_g = ifo[:, 1 * HP:2 * HP]
        o_g = ifo[:, 2 * HP:3 * HP]
        c_new = f_g * c + i_g * g_g
        h_new = o_g * jnp.tanh(c_new)
        return h_new, c_new

    # ---------------- encoder ----------------
    # Hoisted, batched input projection: one (T, HP) @ (HP, 4HP) MXU dot (f32,
    # off the serial critical path).
    xpe = (jnp.dot(x_enc_ref[...], wxe_ref[...],
                   preferred_element_type=jnp.float32) + be_ref[...])

    whe = whe_ref[...]                # (HP, 4HP) bf16, resident across the 8 steps

    h = jnp.zeros((1, HP), jnp.float32)
    c = jnp.zeros((1, HP), jnp.float32)
    ctx = jnp.zeros((1, HP), jnp.float32)
    for t in range(T):                # fully unrolled, static slices
        gates = xpe[t:t + 1, :] + jnp.dot(h.astype(jnp.bfloat16), whe,
                                          preferred_element_type=jnp.float32)
        h, c = gates_to_hc(gates, c)
        ctx = ctx + h                 # running sum == attention context (exact:
                                      # softmax over a size-1 dim is identically 1)

    # ---------------- decoder ----------------
    # Batched input projection: relu(prev) @ Wx_prev + context @ Wx_ctx + b for all
    # T teacher-forced steps at once (context is constant across steps).
    prev_act = jnp.maximum(prev_ref[...], 0.0)                       # (T, HP)
    ctx_proj = jnp.dot(ctx, wxd_ctx_ref[...],
                       preferred_element_type=jnp.float32)           # (1, 4HP)
    xpd = (jnp.dot(prev_act, wxd_prev_ref[...],
                   preferred_element_type=jnp.float32) + ctx_proj + bd_ref[...])

    whd = whd_ref[...]                # loaded after whe's last use (no overlap)

    for t in range(T):
        gates = xpd[t:t + 1, :] + jnp.dot(h.astype(jnp.bfloat16), whd,
                                          preferred_element_type=jnp.float32)
        h, c = gates_to_hc(gates, c)
        dech_ref[pl.ds(t, 1), :] = h  # full-lane (HP=128) unmasked row store

    # ---------------- batched, lane-dense output projection ----------------
    preds_ref[...] = (jnp.dot(dech_ref[...], ow_ref[...],
                              preferred_element_type=jnp.float32) + ob_ref[...])


def _permute_pad_gate_cols(w, H, HP):
    """(R, 4H) with gate order [i, f, g, o] -> (R, 4*HP) ordered [i, f, o, g],
    each gate block zero-padded from H to HP columns."""
    i = w[:, 0 * H:1 * H]
    f = w[:, 1 * H:2 * H]
    g = w[:, 2 * H:3 * H]
    o = w[:, 3 * H:4 * H]
    pad = lambda x: jnp.pad(x, ((0, 0), (0, HP - H)))
    return jnp.concatenate([pad(i), pad(f), pad(o), pad(g)], axis=1)


def init_params(key, vocab_size, hidden_dim=64, attn_size=128):
    ks = jax.random.split(key, 17)
    kh = 1.0 / np.sqrt(hidden_dim)
    ka = 1.0 / np.sqrt(attn_size)

    def u(k, shape, bound):
        return jax.random.uniform(k, shape, jnp.float32, -bound, bound)

    return dict(
        embed=jax.random.normal(ks[0], (vocab_size, hidden_dim), jnp.float32),
        # encoder LSTM(hidden -> hidden); weights pre-transposed to (in, 4H), [i,f,g,o]
        wxe=u(ks[1], (hidden_dim, 4 * hidden_dim), kh),
        whe=u(ks[2], (hidden_dim, 4 * hidden_dim), kh),
        be=u(ks[3], (1, 4 * hidden_dim), kh) + u(ks[4], (1, 4 * hidden_dim), kh),
        # decoder LSTM(2*hidden -> hidden)
        wxd=u(ks[5], (2 * hidden_dim, 4 * hidden_dim), kh),
        whd=u(ks[6], (hidden_dim, 4 * hidden_dim), kh),
        bd=u(ks[7], (1, 4 * hidden_dim), kh) + u(ks[8], (1, 4 * hidden_dim), kh),
        # attention linears U, W, V (kept for module fidelity; they provably do
        # not affect the output because softmax over a size-1 dim is identically 1)
        uw=u(ks[9], (hidden_dim, attn_size), kh), ub=u(ks[10], (1, attn_size), kh),
        ww=u(ks[11], (hidden_dim, attn_size), kh), wb=u(ks[12], (1, attn_size), kh),
        vw=u(ks[13], (attn_size, 1), ka), vb=u(ks[14], (1, 1), ka),
        # output projection
        ow=u(ks[15], (hidden_dim, vocab_size), kh),
        ob=u(ks[16], (1, vocab_size), kh),
    )


@jax.jit
def forward(params, input_ids, gold_ids):
    """Teacher-forced forward pass. Returns (predictions [T, vocab], predicted_seq [T])."""
    E = params["embed"]
    H = E.shape[1]
    T = input_ids.shape[0]
    vocab = params["ow"].shape[1]
    HP = max(128, ((H + 127) // 128) * 128)       # vreg-aligned hidden width
    VPAD = ((vocab + 127) // 128) * 128           # lane-dense padded output width

    # glue: embedding gathers done in plain JAX
    x_enc = E[input_ids].astype(jnp.float32)                                  # (T, H)
    # teacher forcing: prev_0 = zeros, prev_t = embeds(gold[t-1]) for t > 0
    prev_seq = jnp.concatenate(
        [jnp.zeros((1, H), jnp.float32), E[gold_ids[:-1]].astype(jnp.float32)], axis=0)

    # pad feature dim H -> HP with zeros (exact: padded lanes of h/c stay 0)
    x_enc_p = jnp.pad(x_enc, ((0, 0), (0, HP - H)))
    prev_p = jnp.pad(prev_seq, ((0, 0), (0, HP - H)))
    pad_rows = lambda w: jnp.pad(w, ((0, HP - H), (0, 0)))

    # gate-column permutation [i,f,g,o] -> [i,f,o,g] + padding; recurrent weights in
    # bf16 (matmul operands only; accumulation stays f32 inside the kernel).
    wxe_p = _permute_pad_gate_cols(pad_rows(params["wxe"]), H, HP)
    whe_p = _permute_pad_gate_cols(pad_rows(params["whe"]), H, HP).astype(jnp.bfloat16)
    be_p = _permute_pad_gate_cols(params["be"], H, HP)

    # split decoder input-weight rows so the per-step concat disappears:
    # x = [prev, context]  =>  x @ wxd = prev @ wxd[:H] + context @ wxd[H:]
    wxd_prev = _permute_pad_gate_cols(pad_rows(params["wxd"][:H]), H, HP)
    wxd_ctx = _permute_pad_gate_cols(pad_rows(params["wxd"][H:]), H, HP)
    whd_p = _permute_pad_gate_cols(pad_rows(params["whd"]), H, HP).astype(jnp.bfloat16)
    bd_p = _permute_pad_gate_cols(params["bd"], H, HP)

    # zero-pad the output projection to a lane-dense width (multiple of 128)
    ow_pad = jnp.zeros((HP, VPAD), jnp.float32).at[:H, :vocab].set(params["ow"])
    ob_pad = jnp.zeros((1, VPAD), jnp.float32).at[:, :vocab].set(params["ob"])

    args = (x_enc_p, prev_p,
            wxe_p, whe_p, be_p,
            wxd_prev, wxd_ctx, whd_p, bd_p,
            ow_pad, ob_pad)

    preds_pad = pl.pallas_call(
        seq2seq_attn_kernel,
        out_shape=jax.ShapeDtypeStruct((T, VPAD), jnp.float32),
        in_specs=[pl.BlockSpec(memory_space=pltpu.MemorySpace.VMEM)] * len(args),
        out_specs=pl.BlockSpec(memory_space=pltpu.MemorySpace.VMEM),
        scratch_shapes=[pltpu.VMEM((T, HP), jnp.float32)],   # stacked decoder hiddens
    )(*args)

    preds = preds_pad[:, :vocab]
    predicted_seq = jnp.argmax(preds, axis=1)     # torch.max(pred_i, 0) indices
    return preds, predicted_seq


def forward_ref(params, input_ids, gold_ids):
    """Pure-JAX reference mirroring the PyTorch forward (full attention arithmetic, f32)."""
    HI = jax.lax.Precision.HIGHEST
    E = params["embed"]
    H = E.shape[1]
    T = input_ids.shape[0]

    def cell(x, h, c, wx, wh, b):
        g = jnp.dot(x, wx, precision=HI) + jnp.dot(h, wh, precision=HI) + b
        i = jax.nn.sigmoid(g[:, :H]); f = jax.nn.sigmoid(g[:, H:2 * H])
        gg = jnp.tanh(g[:, 2 * H:3 * H]); o = jax.nn.sigmoid(g[:, 3 * H:])
        c = f * c + i * gg
        return o * jnp.tanh(c), c

    x_enc = E[np.asarray(input_ids)]
    h = jnp.zeros((1, H)); c = jnp.zeros((1, H))
    enc = []
    for t in range(T):
        h, c = cell(x_enc[t:t + 1], h, c, params["wxe"], params["whe"], params["be"])
        enc.append(h)
    enc_out = jnp.concatenate(enc, axis=0)

    prev_seq = jnp.concatenate([jnp.zeros((1, H)), E[np.asarray(gold_ids)[:-1]]], axis=0)
    preds = []
    for t in range(T):
        prev = jnp.maximum(prev_seq[t:t + 1], 0.0)
        w_hidden = jnp.dot(h, params["ww"], precision=HI) + params["wb"]
        poly = jnp.tanh(jnp.dot(enc_out, params["uw"], precision=HI) + params["ub"] + w_hidden)
        pv = jnp.dot(poly, params["vw"], precision=HI) + params["vb"]
        attn_w = jax.nn.softmax(pv, axis=1)                  # dim=1 on (T,1) -> ones
        context = attn_w.T @ enc_out
        x = jnp.concatenate([prev, context], axis=1)
        h, c = cell(x, h, c, params["wxd"], params["whd"], params["bd"])
        preds.append(jnp.dot(h, params["ow"], precision=HI) + params["ob"])
    preds = jnp.concatenate(preds, axis=0)
    return preds, jnp.argmax(preds, axis=1)


if __name__ == "__main__":
    VOCAB, HID, ATTN, T = 16, 64, 128, 8
    key = jax.random.PRNGKey(0)
    pkey, ikey, gkey = jax.random.split(key, 3)

    params = init_params(pkey, VOCAB, HID, ATTN)
    input_ids = jax.random.randint(ikey, (T,), 0, VOCAB, dtype=jnp.int32)
    gold_ids = jax.random.randint(gkey, (T,), 0, VOCAB, dtype=jnp.int32)

    preds, pred_seq = forward(params, input_ids, gold_ids)
    preds = jax.block_until_ready(preds)
    pred_seq = jax.block_until_ready(pred_seq)

    ref_preds, _ = forward_ref(params, input_ids, gold_ids)
    # Tolerance covers the bf16-operand recurrent matmuls (f32 accumulation); any
    # structural bug (gate permutation / padding / context) would be O(0.1+) off.
    np.testing.assert_allclose(np.asarray(preds), np.asarray(ref_preds),
                               rtol=2.5e-2, atol=2.5e-2)
    print("KERNEL_OK")
</pallas_src>

<mosaic_0001>
module attributes {stable_mosaic.version = 11 : i64} {
  func.func @seq2seq_attn_kernel(%arg0: memref<8x128xf32, #tpu.memory_space<vmem>>, %arg1: memref<8x128xf32, #tpu.memory_space<vmem>>, %arg2: memref<128x512xf32, #tpu.memory_space<vmem>>, %arg3: memref<128x512xbf16, #tpu.memory_space<vmem>>, %arg4: memref<1x512xf32, #tpu.memory_space<vmem>>, %arg5: memref<128x512xf32, #tpu.memory_space<vmem>>, %arg6: memref<128x512xf32, #tpu.memory_space<vmem>>, %arg7: memref<128x512xbf16, #tpu.memory_space<vmem>>, %arg8: memref<1x512xf32, #tpu.memory_space<vmem>>, %arg9: memref<128x128xf32, #tpu.memory_space<vmem>>, %arg10: memref<1x128xf32, #tpu.memory_space<vmem>>, %arg11: memref<8x128xf32, #tpu.memory_space<vmem>>, %arg12: memref<8x128xf32, #tpu.memory_space<vmem>>) attributes {dimension_semantics = [], scalar_prefetch = 0 : i64, scratch_operands = 1 : i64, tpu.core_type = #tpu.core_type<tc>} {
    %c0 = arith.constant 0 : index
    %c0_0 = arith.constant 0 : index
    %0 = vector.load %arg0[%c0, %c0_0] : memref<8x128xf32, #tpu.memory_space<vmem>>, vector<8x128xf32>
    %c0_1 = arith.constant 0 : index
    %c0_2 = arith.constant 0 : index
    %1 = vector.load %arg2[%c0_1, %c0_2] : memref<128x512xf32, #tpu.memory_space<vmem>>, vector<128x512xf32>
    %cst = arith.constant dense<0.000000e+00> : vector<8x512xf32>
    %2 = tpu.matmul %0, %1, %cst {dimension_numbers = #tpu.dot_dimension_numbers<[1], [0], [0], [1], [0, 0, 1, 1], [], []>} : vector<8x128xf32>, vector<128x512xf32>, vector<8x512xf32> -> vector<8x512xf32>
    %c0_3 = arith.constant 0 : index
    %c0_4 = arith.constant 0 : index
    %3 = vector.load %arg4[%c0_3, %c0_4] : memref<1x512xf32, #tpu.memory_space<vmem>>, vector<1x512xf32>
    %4 = vector.broadcast %3 : vector<1x512xf32> to vector<8x512xf32>
    %5 = arith.addf %2, %4 : vector<8x512xf32>
    %c0_5 = arith.constant 0 : index
    %c0_6 = arith.constant 0 : index
    %6 = vector.load %arg3[%c0_5, %c0_6] : memref<128x512xbf16, #tpu.memory_space<vmem>>, vector<128x512xbf16>
    %cst_7 = arith.constant 0.000000e+00 : f32
    %7 = vector.broadcast %cst_7 : f32 to vector<1x128xf32>
    %cst_8 = arith.constant 0.000000e+00 : f32
    %8 = vector.broadcast %cst_8 : f32 to vector<1x128xf32>
    %cst_9 = arith.constant 0.000000e+00 : f32
    %9 = vector.broadcast %cst_9 : f32 to vector<1x128xf32>
    %10 = vector.extract_strided_slice %5 {offsets = [0, 0], sizes = [1, 512], strides = [1, 1]} : vector<8x512xf32> to vector<1x512xf32>
    %11 = arith.truncf %7 : vector<1x128xf32> to vector<1x128xbf16>
    %cst_10 = arith.constant dense<0.000000e+00> : vector<1x512xf32>
    %12 = tpu.matmul %11, %6, %cst_10 {dimension_numbers = #tpu.dot_dimension_numbers<[1], [0], [0], [1], [0, 0, 1, 1], [], []>} : vector<1x128xbf16>, vector<128x512xbf16>, vector<1x512xf32> -> vector<1x512xf32>
    %13 = arith.addf %10, %12 : vector<1x512xf32>
    %14 = vector.extract_strided_slice %13 {offsets = [0, 0], sizes = [1, 384], strides = [1, 1]} : vector<1x512xf32> to vector<1x384xf32>
    %15 = arith.negf %14 : vector<1x384xf32>
    %16 = math.exp %15 : vector<1x384xf32>
    %cst_11 = arith.constant 1.000000e+00 : f32
    %17 = vector.broadcast %cst_11 : f32 to vector<1x384xf32>
    %18 = arith.addf %17, %16 : vector<1x384xf32>
    %19 = arith.divf %17, %18 : vector<1x384xf32>
    %20 = vector.extract_strided_slice %13 {offsets = [0, 384], sizes = [1, 128], strides = [1, 1]} : vector<1x512xf32> to vector<1x128xf32>
    %21 = math.tanh %20 : vector<1x128xf32>
    %22 = vector.extract_strided_slice %19 {offsets = [0, 0], sizes = [1, 128], strides = [1, 1]} : vector<1x384xf32> to vector<1x128xf32>
    %23 = vector.extract_strided_slice %19 {offsets = [0, 128], sizes = [1, 128], strides = [1, 1]} : vector<1x384xf32> to vector<1x128xf32>
    %24 = vector.extract_strided_slice %19 {offsets = [0, 256], sizes = [1, 128], strides = [1, 1]} : vector<1x384xf32> to vector<1x128xf32>
    %25 = arith.mulf %23, %8 : vector<1x128xf32>
    %26 = arith.mulf %22, %21 : vector<1x128xf32>
    %27 = arith.addf %25, %26 : vector<1x128xf32>
    %28 = math.tanh %27 : vector<1x128xf32>
    %29 = arith.mulf %24, %28 : vector<1x128xf32>
    %30 = arith.addf %9, %29 : vector<1x128xf32>
    %31 = vector.extract_strided_slice %5 {offsets = [1, 0], sizes = [1, 512], strides = [1, 1]} : vector<8x512xf32> to vector<1x512xf32>
    %32 = arith.truncf %29 : vector<1x128xf32> to vector<1x128xbf16>
    %cst_12 = arith.constant dense<0.000000e+00> : vector<1x512xf32>
    %33 = tpu.matmul %32, %6, %cst_12 {dimension_numbers = #tpu.dot_dimension_numbers<[1], [0], [0], [1], [0, 0, 1, 1], [], []>} : vector<1x128xbf16>, vector<128x512xbf16>, vector<1x512xf32> -> vector<1x512xf32>
    %34 = arith.addf %31, %33 : vector<1x512xf32>
    %35 = vector.extract_strided_slice %34 {offsets = [0, 0], sizes = [1, 384], strides = [1, 1]} : vector<1x512xf32> to vector<1x384xf32>
    %36 = arith.negf %35 : vector<1x384xf32>
    %37 = math.exp %36 : vector<1x384xf32>
    %cst_13 = arith.constant 1.000000e+00 : f32
    %38 = vector.broadcast %cst_13 : f32 to vector<1x384xf32>
    %39 = arith.addf %38, %37 : vector<1x384xf32>
    %40 = arith.divf %38, %39 : vector<1x384xf32>
    %41 = vector.extract_strided_slice %34 {offsets = [0, 384], sizes = [1, 128], strides = [1, 1]} : vector<1x512xf32> to vector<1x128xf32>
    %42 = math.tanh %41 : vector<1x128xf32>
    %43 = vector.extract_strided_slice %40 {offsets = [0, 0], sizes = [1, 128], strides = [1, 1]} : vector<1x384xf32> to vector<1x128xf32>
    %44 = vector.extract_strided_slice %40 {offsets = [0, 128], sizes = [1, 128], strides = [1, 1]} : vector<1x384xf32> to vector<1x128xf32>
    %45 = vector.extract_strided_slice %40 {offsets = [0, 256], sizes = [1, 128], strides = [1, 1]} : vector<1x384xf32> to vector<1x128xf32>
    %46 = arith.mulf %44, %27 : vector<1x128xf32>
    %47 = arith.mulf %43, %42 : vector<1x128xf32>
    %48 = arith.addf %46, %47 : vector<1x128xf32>
    %49 = math.tanh %48 : vector<1x128xf32>
    %50 = arith.mulf %45, %49 : vector<1x128xf32>
    %51 = arith.addf %30, %50 : vector<1x128xf32>
    %52 = vector.extract_strided_slice %5 {offsets = [2, 0], sizes = [1, 512], strides = [1, 1]} : vector<8x512xf32> to vector<1x512xf32>
    %53 = arith.truncf %50 : vector<1x128xf32> to vector<1x128xbf16>
    %cst_14 = arith.constant dense<0.000000e+00> : vector<1x512xf32>
    %54 = tpu.matmul %53, %6, %cst_14 {dimension_numbers = #tpu.dot_dimension_numbers<[1], [0], [0], [1], [0, 0, 1, 1], [], []>} : vector<1x128xbf16>, vector<128x512xbf16>, vector<1x512xf32> -> vector<1x512xf32>
    %55 = arith.addf %52, %54 : vector<1x512xf32>
    %56 = vector.extract_strided_slice %55 {offsets = [0, 0], sizes = [1, 384], strides = [1, 1]} : vector<1x512xf32> to vector<1x384xf32>
    %57 = arith.negf %56 : vector<1x384xf32>
    %58 = math.exp %57 : vector<1x384xf32>
    %cst_15 = arith.constant 1.000000e+00 : f32
    %59 = vector.broadcast %cst_15 : f32 to vector<1x384xf32>
    %60 = arith.addf %59, %58 : vector<1x384xf32>
    %61 = arith.divf %59, %60 : vector<1x384xf32>
    %62 = vector.extract_strided_slice %55 {offsets = [0, 384], sizes = [1, 128], strides = [1, 1]} : vector<1x512xf32> to vector<1x128xf32>
    %63 = math.tanh %62 : vector<1x128xf32>
    %64 = vector.extract_strided_slice %61 {offsets = [0, 0], sizes = [1, 128], strides = [1, 1]} : vector<1x384xf32> to vector<1x128xf32>
    %65 = vector.extract_strided_slice %61 {offsets = [0, 128], sizes = [1, 128], strides = [1, 1]} : vector<1x384xf32> to vector<1x128xf32>
    %66 = vector.extract_strided_slice %61 {offsets = [0, 256], sizes = [1, 128], strides = [1, 1]} : vector<1x384xf32> to vector<1x128xf32>
    %67 = arith.mulf %65, %48 : vector<1x128xf32>
    %68 = arith.mulf %64, %63 : vector<1x128xf32>
    %69 = arith.addf %67, %68 : vector<1x128xf32>
    %70 = math.tanh %69 : vector<1x128xf32>
    %71 = arith.mulf %66, %70 : vector<1x128xf32>
    %72 = arith.addf %51, %71 : vector<1x128xf32>
    %73 = vector.extract_strided_slice %5 {offsets = [3, 0], sizes = [1, 512], strides = [1, 1]} : vector<8x512xf32> to vector<1x512xf32>
    %74 = arith.truncf %71 : vector<1x128xf32> to vector<1x128xbf16>
    %cst_16 = arith.constant dense<0.000000e+00> : vector<1x512xf32>
    %75 = tpu.matmul %74, %6, %cst_16 {dimension_numbers = #tpu.dot_dimension_numbers<[1], [0], [0], [1], [0, 0, 1, 1], [], []>} : vector<1x128xbf16>, vector<128x512xbf16>, vector<1x512xf32> -> vector<1x512xf32>
    %76 = arith.addf %73, %75 : vector<1x512xf32>
    %77 = vector.extract_strided_slice %76 {offsets = [0, 0], sizes = [1, 384], strides = [1, 1]} : vector<1x512xf32> to vector<1x384xf32>
    %78 = arith.negf %77 : vector<1x384xf32>
    %79 = math.exp %78 : vector<1x384xf32>
    %cst_17 = arith.constant 1.000000e+00 : f32
    %80 = vector.broadcast %cst_17 : f32 to vector<1x384xf32>
    %81 = arith.addf %80, %79 : vector<1x384xf32>
    %82 = arith.divf %80, %81 : vector<1x384xf32>
    %83 = vector.extract_strided_slice %76 {offsets = [0, 384], sizes = [1, 128], strides = [1, 1]} : vector<1x512xf32> to vector<1x128xf32>
    %84 = math.tanh %83 : vector<1x128xf32>
    %85 = vector.extract_strided_slice %82 {offsets = [0, 0], sizes = [1, 128], strides = [1, 1]} : vector<1x384xf32> to vector<1x128xf32>
    %86 = vector.extract_strided_slice %82 {offsets = [0, 128], sizes = [1, 128], strides = [1, 1]} : vector<1x384xf32> to vector<1x128xf32>
    %87 = vector.extract_strided_slice %82 {offsets = [0, 256], sizes = [1, 128], strides = [1, 1]} : vector<1x384xf32> to vector<1x128xf32>
    %88 = arith.mulf %86, %69 : vector<1x128xf32>
    %89 = arith.mulf %85, %84 : vector<1x128xf32>
    %90 = arith.addf %88, %89 : vector<1x128xf32>
    %91 = math.tanh %90 : vector<1x128xf32>
    %92 = arith.mulf %87, %91 : vector<1x128xf32>
    %93 = arith.addf %72, %92 : vector<1x128xf32>
    %94 = vector.extract_strided_slice %5 {offsets = [4, 0], sizes = [1, 512], strides = [1, 1]} : vector<8x512xf32> to vector<1x512xf32>
    %95 = arith.truncf %92 : vector<1x128xf32> to vector<1x128xbf16>
    %cst_18 = arith.constant dense<0.000000e+00> : vector<1x512xf32>
    %96 = tpu.matmul %95, %6, %cst_18 {dimension_numbers = #tpu.dot_dimension_numbers<[1], [0], [0], [1], [0, 0, 1, 1], [], []>} : vector<1x128xbf16>, vector<128x512xbf16>, vector<1x512xf32> -> vector<1x512xf32>
    %97 = arith.addf %94, %96 : vector<1x512xf32>
    %98 = vector.extract_strided_slice %97 {offsets = [0, 0], sizes = [1, 384], strides = [1, 1]} : vector<1x512xf32> to vector<1x384xf32>
    %99 = arith.negf %98 : vector<1x384xf32>
    %100 = math.exp %99 : vector<1x384xf32>
    %cst_19 = arith.constant 1.000000e+00 : f32
    %101 = vector.broadcast %cst_19 : f32 to vector<1x384xf32>
    %102 = arith.addf %101, %100 : vector<1x384xf32>
    %103 = arith.divf %101, %102 : vector<1x384xf32>
    %104 = vector.extract_strided_slice %97 {offsets = [0, 384], sizes = [1, 128], strides = [1, 1]} : vector<1x512xf32> to vector<1x128xf32>
    %105 = math.tanh %104 : vector<1x128xf32>
    %106 = vector.extract_strided_slice %103 {offsets = [0, 0], sizes = [1, 128], strides = [1, 1]} : vector<1x384xf32> to vector<1x128xf32>
    %107 = vector.extract_strided_slice %103 {offsets = [0, 128], sizes = [1, 128], strides = [1, 1]} : vector<1x384xf32> to vector<1x128xf32>
    %108 = vector.extract_strided_slice %103 {offsets = [0, 256], sizes = [1, 128], strides = [1, 1]} : vector<1x384xf32> to vector<1x128xf32>
    %109 = arith.mulf %107, %90 : vector<1x128xf32>
    %110 = arith.mulf %106, %105 : vector<1x128xf32>
    %111 = arith.addf %109, %110 : vector<1x128xf32>
    %112 = math.tanh %111 : vector<1x128xf32>
    %113 = arith.mulf %108, %112 : vector<1x128xf32>
    %114 = arith.addf %93, %113 : vector<1x128xf32>
    %115 = vector.extract_strided_slice %5 {offsets = [5, 0], sizes = [1, 512], strides = [1, 1]} : vector<8x512xf32> to vector<1x512xf32>
    %116 = arith.truncf %113 : vector<1x128xf32> to vector<1x128xbf16>
    %cst_20 = arith.constant dense<0.000000e+00> : vector<1x512xf32>
    %117 = tpu.matmul %116, %6, %cst_20 {dimension_numbers = #tpu.dot_dimension_numbers<[1], [0], [0], [1], [0, 0, 1, 1], [], []>} : vector<1x128xbf16>, vector<128x512xbf16>, vector<1x512xf32> -> vector<1x512xf32>
    %118 = arith.addf %115, %117 : vector<1x512xf32>
    %119 = vector.extract_strided_slice %118 {offsets = [0, 0], sizes = [1, 384], strides = [1, 1]} : vector<1x512xf32> to vector<1x384xf32>
    %120 = arith.negf %119 : vector<1x384xf32>
    %121 = math.exp %120 : vector<1x384xf32>
    %cst_21 = arith.constant 1.000000e+00 : f32
    %122 = vector.broadcast %cst_21 : f32 to vector<1x384xf32>
    %123 = arith.addf %122, %121 : vector<1x384xf32>
    %124 = arith.divf %122, %123 : vector<1x384xf32>
    %125 = vector.extract_strided_slice %118 {offsets = [0, 384], sizes = [1, 128], strides = [1, 1]} : vector<1x512xf32> to vector<1x128xf32>
    %126 = math.tanh %125 : vector<1x128xf32>
    %127 = vector.extract_strided_slice %124 {offsets = [0, 0], sizes = [1, 128], strides = [1, 1]} : vector<1x384xf32> to vector<1x128xf32>
    %128 = vector.extract_strided_slice %124 {offsets = [0, 128], sizes = [1, 128], strides = [1, 1]} : vector<1x384xf32> to vector<1x128xf32>
    %129 = vector.extract_strided_slice %124 {offsets = [0, 256], sizes = [1, 128], strides = [1, 1]} : vector<1x384xf32> to vector<1x128xf32>
    %130 = arith.mulf %128, %111 : vector<1x128xf32>
    %131 = arith.mulf %127, %126 : vector<1x128xf32>
    %132 = arith.addf %130, %131 : vector<1x128xf32>
    %133 = math.tanh %132 : vector<1x128xf32>
    %134 = arith.mulf %129, %133 : vector<1x128xf32>
    %135 = arith.addf %114, %134 : vector<1x128xf32>
    %136 = vector.extract_strided_slice %5 {offsets = [6, 0], sizes = [1, 512], strides = [1, 1]} : vector<8x512xf32> to vector<1x512xf32>
    %137 = arith.truncf %134 : vector<1x128xf32> to vector<1x128xbf16>
    %cst_22 = arith.constant dense<0.000000e+00> : vector<1x512xf32>
    %138 = tpu.matmul %137, %6, %cst_22 {dimension_numbers = #tpu.dot_dimension_numbers<[1], [0], [0], [1], [0, 0, 1, 1], [], []>} : vector<1x128xbf16>, vector<128x512xbf16>, vector<1x512xf32> -> vector<1x512xf32>
    %139 = arith.addf %136, %138 : vector<1x512xf32>
    %140 = vector.extract_strided_slice %139 {offsets = [0, 0], sizes = [1, 384], strides = [1, 1]} : vector<1x512xf32> to vector<1x384xf32>
    %141 = arith.negf %140 : vector<1x384xf32>
    %142 = math.exp %141 : vector<1x384xf32>
    %cst_23 = arith.constant 1.000000e+00 : f32
    %143 = vector.broadcast %cst_23 : f32 to vector<1x384xf32>
    %144 = arith.addf %143, %142 : vector<1x384xf32>
    %145 = arith.divf %143, %144 : vector<1x384xf32>
    %146 = vector.extract_strided_slice %139 {offsets = [0, 384], sizes = [1, 128], strides = [1, 1]} : vector<1x512xf32> to vector<1x128xf32>
    %147 = math.tanh %146 : vector<1x128xf32>
    %148 = vector.extract_strided_slice %145 {offsets = [0, 0], sizes = [1, 128], strides = [1, 1]} : vector<1x384xf32> to vector<1x128xf32>
    %149 = vector.extract_strided_slice %145 {offsets = [0, 128], sizes = [1, 128], strides = [1, 1]} : vector<1x384xf32> to vector<1x128xf32>
    %150 = vector.extract_strided_slice %145 {offsets = [0, 256], sizes = [1, 128], strides = [1, 1]} : vector<1x384xf32> to vector<1x128xf32>
    %151 = arith.mulf %149, %132 : vector<1x128xf32>
    %152 = arith.mulf %148, %147 : vector<1x128xf32>
    %153 = arith.addf %151, %152 : vector<1x128xf32>
    %154 = math.tanh %153 : vector<1x128xf32>
    %155 = arith.mulf %150, %154 : vector<1x128xf32>
    %156 = arith.addf %135, %155 : vector<1x128xf32>
    %157 = vector.extract_strided_slice %5 {offsets = [7, 0], sizes = [1, 512], strides = [1, 1]} : vector<8x512xf32> to vector<1x512xf32>
    %158 = arith.truncf %155 : vector<1x128xf32> to vector<1x128xbf16>
    %cst_24 = arith.constant dense<0.000000e+00> : vector<1x512xf32>
    %159 = tpu.matmul %158, %6, %cst_24 {dimension_numbers = #tpu.dot_dimension_numbers<[1], [0], [0], [1], [0, 0, 1, 1], [], []>} : vector<1x128xbf16>, vector<128x512xbf16>, vector<1x512xf32> -> vector<1x512xf32>
    %160 = arith.addf %157, %159 : vector<1x512xf32>
    %161 = vector.extract_strided_slice %160 {offsets = [0, 0], sizes = [1, 384], strides = [1, 1]} : vector<1x512xf32> to vector<1x384xf32>
    %162 = arith.negf %161 : vector<1x384xf32>
    %163 = math.exp %162 : vector<1x384xf32>
    %cst_25 = arith.constant 1.000000e+00 : f32
    %164 = vector.broadcast %cst_25 : f32 to vector<1x384xf32>
    %165 = arith.addf %164, %163 : vector<1x384xf32>
    %166 = arith.divf %164, %165 : vector<1x384xf32>
    %167 = vector.extract_strided_slice %160 {offsets = [0, 384], sizes = [1, 128], strides = [1, 1]} : vector<1x512xf32> to vector<1x128xf32>
    %168 = math.tanh %167 : vector<1x128xf32>
    %169 = vector.extract_strided_slice %166 {offsets = [0, 0], sizes = [1, 128], strides = [1, 1]} : vector<1x384xf32> to vector<1x128xf32>
    %170 = vector.extract_strided_slice %166 {offsets = [0, 128], sizes = [1, 128], strides = [1, 1]} : vector<1x384xf32> to vector<1x128xf32>
    %171 = vector.extract_strided_slice %166 {offsets = [0, 256], sizes = [1, 128], strides = [1, 1]} : vector<1x384xf32> to vector<1x128xf32>
    %172 = arith.mulf %170, %153 : vector<1x128xf32>
    %173 = arith.mulf %169, %168 : vector<1x128xf32>
    %174 = arith.addf %172, %173 : vector<1x128xf32>
    %175 = math.tanh %174 : vector<1x128xf32>
    %176 = arith.mulf %171, %175 : vector<1x128xf32>
    %177 = arith.addf %156, %176 : vector<1x128xf32>
    %c0_26 = arith.constant 0 : index
    %c0_27 = arith.constant 0 : index
    %178 = vector.load %arg1[%c0_26, %c0_27] : memref<8x128xf32, #tpu.memory_space<vmem>>, vector<8x128xf32>
    %cst_28 = arith.constant 0.000000e+00 : f32
    %179 = vector.broadcast %cst_28 : f32 to vector<8x128xf32>
    %180 = arith.maximumf %178, %179 : vector<8x128xf32>
    %c0_29 = arith.constant 0 : index
    %c0_30 = arith.constant 0 : index
    %181 = vector.load %arg6[%c0_29, %c0_30] : memref<128x512xf32, #tpu.memory_space<vmem>>, vector<128x512xf32>
    %cst_31 = arith.constant dense<0.000000e+00> : vector<1x512xf32>
    %182 = tpu.matmul %177, %181, %cst_31 {dimension_numbers = #tpu.dot_dimension_numbers<[1], [0], [0], [1], [0, 0, 1, 1], [], []>} : vector<1x128xf32>, vector<128x512xf32>, vector<1x512xf32> -> vector<1x512xf32>
    %c0_32 = arith.constant 0 : index
    %c0_33 = arith.constant 0 : index
    %183 = vector.load %arg5[%c0_32, %c0_33] : memref<128x512xf32, #tpu.memory_space<vmem>>, vector<128x512xf32>
    %cst_34 = arith.constant dense<0.000000e+00> : vector<8x512xf32>
    %184 = tpu.matmul %180, %183, %cst_34 {dimension_numbers = #tpu.dot_dimension_numbers<[1], [0], [0], [1], [0, 0, 1, 1], [], []>} : vector<8x128xf32>, vector<128x512xf32>, vector<8x512xf32> -> vector<8x512xf32>
    %185 = vector.broadcast %182 : vector<1x512xf32> to vector<8x512xf32>
    %186 = arith.addf %184, %185 : vector<8x512xf32>
    %c0_35 = arith.constant 0 : index
    %c0_36 = arith.constant 0 : index
    %187 = vector.load %arg8[%c0_35, %c0_36] : memref<1x512xf32, #tpu.memory_space<vmem>>, vector<1x512xf32>
    %188 = vector.broadcast %187 : vector<1x512xf32> to vector<8x512xf32>
    %189 = arith.addf %186, %188 : vector<8x512xf32>
    %c0_37 = arith.constant 0 : index
    %c0_38 = arith.constant 0 : index
    %190 = vector.load %arg7[%c0_37, %c0_38] : memref<128x512xbf16, #tpu.memory_space<vmem>>, vector<128x512xbf16>
    %191 = vector.extract_strided_slice %189 {offsets = [0, 0], sizes = [1, 512], strides = [1, 1]} : vector<8x512xf32> to vector<1x512xf32>
    %192 = arith.truncf %176 : vector<1x128xf32> to vector<1x128xbf16>
    %cst_39 = arith.constant dense<0.000000e+00> : vector<1x512xf32>
    %193 = tpu.matmul %192, %190, %cst_39 {dimension_numbers = #tpu.dot_dimension_numbers<[1], [0], [0], [1], [0, 0, 1, 1], [], []>} : vector<1x128xbf16>, vector<128x512xbf16>, vector<1x512xf32> -> vector<1x512xf32>
    %194 = arith.addf %191, %193 : vector<1x512xf32>
    %195 = vector.extract_strided_slice %194 {offsets = [0, 0], sizes = [1, 384], strides = [1, 1]} : vector<1x512xf32> to vector<1x384xf32>
    %196 = arith.negf %195 : vector<1x384xf32>
    %197 = math.exp %196 : vector<1x384xf32>
    %cst_40 = arith.constant 1.000000e+00 : f32
    %198 = vector.broadcast %cst_40 : f32 to vector<1x384xf32>
    %199 = arith.addf %198, %197 : vector<1x384xf32>
    %200 = arith.divf %198, %199 : vector<1x384xf32>
    %201 = vector.extract_strided_slice %194 {offsets = [0, 384], sizes = [1, 128], strides = [1, 1]} : vector<1x512xf32> to vector<1x128xf32>
    %202 = math.tanh %201 : vector<1x128xf32>
    %203 = vector.extract_strided_slice %200 {offsets = [0, 0], sizes = [1, 128], strides = [1, 1]} : vector<1x384xf32> to vector<1x128xf32>
    %204 = vector.extract_strided_slice %200 {offsets = [0, 128], sizes = [1, 128], strides = [1, 1]} : vector<1x384xf32> to vector<1x128xf32>
    %205 = vector.extract_strided_slice %200 {offsets = [0, 256], sizes = [1, 128], strides = [1, 1]} : vector<1x384xf32> to vector<1x128xf32>
    %206 = arith.mulf %204, %174 : vector<1x128xf32>
    %207 = arith.mulf %203, %202 : vector<1x128xf32>
    %208 = arith.addf %206, %207 : vector<1x128xf32>
    %209 = math.tanh %208 : vector<1x128xf32>
    %210 = arith.mulf %205, %209 : vector<1x128xf32>
    %c0_41 = arith.constant 0 : index
    %c0_42 = arith.constant 0 : index
    %211 = vector.load %arg12[%c0_41, %c0_42] : memref<8x128xf32, #tpu.memory_space<vmem>>, vector<1x128xf32>
    tpu.vector_store %arg12[%c0_41, %c0_42], %210 {strides = array<i32>} : memref<8x128xf32, #tpu.memory_space<vmem>>, vector<1x128xf32>,
    %212 = vector.extract_strided_slice %189 {offsets = [1, 0], sizes = [1, 512], strides = [1, 1]} : vector<8x512xf32> to vector<1x512xf32>
    %213 = arith.truncf %210 : vector<1x128xf32> to vector<1x128xbf16>
    %cst_43 = arith.constant dense<0.000000e+00> : vector<1x512xf32>
    %214 = tpu.matmul %213, %190, %cst_43 {dimension_numbers = #tpu.dot_dimension_numbers<[1], [0], [0], [1], [0, 0, 1, 1], [], []>} : vector<1x128xbf16>, vector<128x512xbf16>, vector<1x512xf32> -> vector<1x512xf32>
    %215 = arith.addf %212, %214 : vector<1x512xf32>
    %216 = vector.extract_strided_slice %215 {offsets = [0, 0], sizes = [1, 384], strides = [1, 1]} : vector<1x512xf32> to vector<1x384xf32>
    %217 = arith.negf %216 : vector<1x384xf32>
    %218 = math.exp %217 : vector<1x384xf32>
    %cst_44 = arith.constant 1.000000e+00 : f32
    %219 = vector.broadcast %cst_44 : f32 to vector<1x384xf32>
    %220 = arith.addf %219, %218 : vector<1x384xf32>
    %221 = arith.divf %219, %220 : vector<1x384xf32>
    %222 = vector.extract_strided_slice %215 {offsets = [0, 384], sizes = [1, 128], strides = [1, 1]} : vector<1x512xf32> to vector<1x128xf32>
    %223 = math.tanh %222 : vector<1x128xf32>
    %224 = vector.extract_strided_slice %221 {offsets = [0, 0], sizes = [1, 128], strides = [1, 1]} : vector<1x384xf32> to vector<1x128xf32>
    %225 = vector.extract_strided_slice %221 {offsets = [0, 128], sizes = [1, 128], strides = [1, 1]} : vector<1x384xf32> to vector<1x128xf32>
    %226 = vector.extract_strided_slice %221 {offsets = [0, 256], sizes = [1, 128], strides = [1, 1]} : vector<1x384xf32> to vector<1x128xf32>
    %227 = arith.mulf %225, %208 : vector<1x128xf32>
    %228 = arith.mulf %224, %223 : vector<1x128xf32>
    %229 = arith.addf %227, %228 : vector<1x128xf32>
    %230 = math.tanh %229 : vector<1x128xf32>
    %231 = arith.mulf %226, %230 : vector<1x128xf32>
    %c1 = arith.constant 1 : index
    %c0_45 = arith.constant 0 : index
    %232 = vector.load %arg12[%c1, %c0_45] : memref<8x128xf32, #tpu.memory_space<vmem>>, vector<1x128xf32>
    tpu.vector_store %arg12[%c1, %c0_45], %231 {strides = array<i32>} : memref<8x128xf32, #tpu.memory_space<vmem>>, vector<1x128xf32>,
    %233 = vector.extract_strided_slice %189 {offsets = [2, 0], sizes = [1, 512], strides = [1, 1]} : vector<8x512xf32> to vector<1x512xf32>
    %234 = arith.truncf %231 : vector<1x128xf32> to vector<1x128xbf16>
    %cst_46 = arith.constant dense<0.000000e+00> : vector<1x512xf32>
    %235 = tpu.matmul %234, %190, %cst_46 {dimension_numbers = #tpu.dot_dimension_numbers<[1], [0], [0], [1], [0, 0, 1, 1], [], []>} : vector<1x128xbf16>, vector<128x512xbf16>, vector<1x512xf32> -> vector<1x512xf32>
    %236 = arith.addf %233, %235 : vector<1x512xf32>
    %237 = vector.extract_strided_slice %236 {offsets = [0, 0], sizes = [1, 384], strides = [1, 1]} : vector<1x512xf32> to vector<1x384xf32>
    %238 = arith.negf %237 : vector<1x384xf32>
    %239 = math.exp %238 : vector<1x384xf32>
    %cst_47 = arith.constant 1.000000e+00 : f32
    %240 = vector.broadcast %cst_47 : f32 to vector<1x384xf32>
    %241 = arith.addf %240, %239 : vector<1x384xf32>
    %242 = arith.divf %240, %241 : vector<1x384xf32>
    %243 = vector.extract_strided_slice %236 {offsets = [0, 384], sizes = [1, 128], strides = [1, 1]} : vector<1x512xf32> to vector<1x128xf32>
    %244 = math.tanh %243 : vector<1x128xf32>
    %245 = vector.extract_strided_slice %242 {offsets = [0, 0], sizes = [1, 128], strides = [1, 1]} : vector<1x384xf32> to vector<1x128xf32>
    %246 = vector.extract_strided_slice %242 {offsets = [0, 128], sizes = [1, 128], strides = [1, 1]} : vector<1x384xf32> to vector<1x128xf32>
    %247 = vector.extract_strided_slice %242 {offsets = [0, 256], sizes = [1, 128], strides = [1, 1]} : vector<1x384xf32> to vector<1x128xf32>
    %248 = arith.mulf %246, %229 : vector<1x128xf32>
    %249 = arith.mulf %245, %244 : vector<1x128xf32>
    %250 = arith.addf %248, %249 : vector<1x128xf32>
    %251 = math.tanh %250 : vector<1x128xf32>
    %252 = arith.mulf %247, %251 : vector<1x128xf32>
    %c2 = arith.constant 2 : index
    %c0_48 = arith.constant 0 : index
    %253 = vector.load %arg12[%c2, %c0_48] : memref<8x128xf32, #tpu.memory_space<vmem>>, vector<1x128xf32>
    tpu.vector_store %arg12[%c2, %c0_48], %252 {strides = array<i32>} : memref<8x128xf32, #tpu.memory_space<vmem>>, vector<1x128xf32>,
    %254 = vector.extract_strided_slice %189 {offsets = [3, 0], sizes = [1, 512], strides = [1, 1]} : vector<8x512xf32> to vector<1x512xf32>
    %255 = arith.truncf %252 : vector<1x128xf32> to vector<1x128xbf16>
    %cst_49 = arith.constant dense<0.000000e+00> : vector<1x512xf32>
    %256 = tpu.matmul %255, %190, %cst_49 {dimension_numbers = #tpu.dot_dimension_numbers<[1], [0], [0], [1], [0, 0, 1, 1], [], []>} : vector<1x128xbf16>, vector<128x512xbf16>, vector<1x512xf32> -> vector<1x512xf32>
    %257 = arith.addf %254, %256 : vector<1x512xf32>
    %258 = vector.extract_strided_slice %257 {offsets = [0, 0], sizes = [1, 384], strides = [1, 1]} : vector<1x512xf32> to vector<1x384xf32>
    %259 = arith.negf %258 : vector<1x384xf32>
    %260 = math.exp %259 : vector<1x384xf32>
    %cst_50 = arith.constant 1.000000e+00 : f32
    %261 = vector.broadcast %cst_50 : f32 to vector<1x384xf32>
    %262 = arith.addf %261, %260 : vector<1x384xf32>
    %263 = arith.divf %261, %262 : vector<1x384xf32>
    %264 = vector.extract_strided_slice %257 {offsets = [0, 384], sizes = [1, 128], strides = [1, 1]} : vector<1x512xf32> to vector<1x128xf32>
    %265 = math.tanh %264 : vector<1x128xf32>
    %266 = vector.extract_strided_slice %263 {offsets = [0, 0], sizes = [1, 128], strides = [1, 1]} : vector<1x384xf32> to vector<1x128xf32>
    %267 = vector.extract_strided_slice %263 {offsets = [0, 128], sizes = [1, 128], strides = [1, 1]} : vector<1x384xf32> to vector<1x128xf32>
    %268 = vector.extract_strided_slice %263 {offsets = [0, 256], sizes = [1, 128], strides = [1, 1]} : vector<1x384xf32> to vector<1x128xf32>
    %269 = arith.mulf %267, %250 : vector<1x128xf32>
    %270 = arith.mulf %266, %265 : vector<1x128xf32>
    %271 = arith.addf %269, %270 : vector<1x128xf32>
    %272 = math.tanh %271 : vector<1x128xf32>
    %273 = arith.mulf %268, %272 : vector<1x128xf32>
    %c3 = arith.constant 3 : index
    %c0_51 = arith.constant 0 : index
    %274 = vector.load %arg12[%c3, %c0_51] : memref<8x128xf32, #tpu.memory_space<vmem>>, vector<1x128xf32>
    tpu.vector_store %arg12[%c3, %c0_51], %273 {strides = array<i32>} : memref<8x128xf32, #tpu.memory_space<vmem>>, vector<1x128xf32>,
    %275 = vector.extract_strided_slice %189 {offsets = [4, 0], sizes = [1, 512], strides = [1, 1]} : vector<8x512xf32> to vector<1x512xf32>
    %276 = arith.truncf %273 : vector<1x128xf32> to vector<1x128xbf16>
    %cst_52 = arith.constant dense<0.000000e+00> : vector<1x512xf32>
    %277 = tpu.matmul %276, %190, %cst_52 {dimension_numbers = #tpu.dot_dimension_numbers<[1], [0], [0], [1], [0, 0, 1, 1], [], []>} : vector<1x128xbf16>, vector<128x512xbf16>, vector<1x512xf32> -> vector<1x512xf32>
    %278 = arith.addf %275, %277 : vector<1x512xf32>
    %279 = vector.extract_strided_slice %278 {offsets = [0, 0], sizes = [1, 384], strides = [1, 1]} : vector<1x512xf32> to vector<1x384xf32>
    %280 = arith.negf %279 : vector<1x384xf32>
    %281 = math.exp %280 : vector<1x384xf32>
    %cst_53 = arith.constant 1.000000e+00 : f32
    %282 = vector.broadcast %cst_53 : f32 to vector<1x384xf32>
    %283 = arith.addf %282, %281 : vector<1x384xf32>
    %284 = arith.divf %282, %283 : vector<1x384xf32>
    %285 = vector.extract_strided_slice %278 {offsets = [0, 384], sizes = [1, 128], strides = [1, 1]} : vector<1x512xf32> to vector<1x128xf32>
    %286 = math.tanh %285 : vector<1x128xf32>
    %287 = vector.extract_strided_slice %284 {offsets = [0, 0], sizes = [1, 128], strides = [1, 1]} : vector<1x384xf32> to vector<1x128xf32>
    %288 = vector.extract_strided_slice %284 {offsets = [0, 128], sizes = [1, 128], strides = [1, 1]} : vector<1x384xf32> to vector<1x128xf32>
    %289 = vector.extract_strided_slice %284 {offsets = [0, 256], sizes = [1, 128], strides = [1, 1]} : vector<1x384xf32> to vector<1x128xf32>
    %290 = arith.mulf %288, %271 : vector<1x128xf32>
    %291 = arith.mulf %287, %286 : vector<1x128xf32>
    %292 = arith.addf %290, %291 : vector<1x128xf32>
    %293 = math.tanh %292 : vector<1x128xf32>
    %294 = arith.mulf %289, %293 : vector<1x128xf32>
    %c4 = arith.constant 4 : index
    %c0_54 = arith.constant 0 : index
    %295 = vector.load %arg12[%c4, %c0_54] : memref<8x128xf32, #tpu.memory_space<vmem>>, vector<1x128xf32>
    tpu.vector_store %arg12[%c4, %c0_54], %294 {strides = array<i32>} : memref<8x128xf32, #tpu.memory_space<vmem>>, vector<1x128xf32>,
    %296 = vector.extract_strided_slice %189 {offsets = [5, 0], sizes = [1, 512], strides = [1, 1]} : vector<8x512xf32> to vector<1x512xf32>
    %297 = arith.truncf %294 : vector<1x128xf32> to vector<1x128xbf16>
    %cst_55 = arith.constant dense<0.000000e+00> : vector<1x512xf32>
    %298 = tpu.matmul %297, %190, %cst_55 {dimension_numbers = #tpu.dot_dimension_numbers<[1], [0], [0], [1], [0, 0, 1, 1], [], []>} : vector<1x128xbf16>, vector<128x512xbf16>, vector<1x512xf32> -> vector<1x512xf32>
    %299 = arith.addf %296, %298 : vector<1x512xf32>
    %300 = vector.extract_strided_slice %299 {offsets = [0, 0], sizes = [1, 384], strides = [1, 1]} : vector<1x512xf32> to vector<1x384xf32>
    %301 = arith.negf %300 : vector<1x384xf32>
    %302 = math.exp %301 : vector<1x384xf32>
    %cst_56 = arith.constant 1.000000e+00 : f32
    %303 = vector.broadcast %cst_56 : f32 to vector<1x384xf32>
    %304 = arith.addf %303, %302 : vector<1x384xf32>
    %305 = arith.divf %303, %304 : vector<1x384xf32>
    %306 = vector.extract_strided_slice %299 {offsets = [0, 384], sizes = [1, 128], strides = [1, 1]} : vector<1x512xf32> to vector<1x128xf32>
    %307 = math.tanh %306 : vector<1x128xf32>
    %308 = vector.extract_strided_slice %305 {offsets = [0, 0], sizes = [1, 128], strides = [1, 1]} : vector<1x384xf32> to vector<1x128xf32>
    %309 = vector.extract_strided_slice %305 {offsets = [0, 128], sizes = [1, 128], strides = [1, 1]} : vector<1x384xf32> to vector<1x128xf32>
    %310 = vector.extract_strided_slice %305 {offsets = [0, 256], sizes = [1, 128], strides = [1, 1]} : vector<1x384xf32> to vector<1x128xf32>
    %311 = arith.mulf %309, %292 : vector<1x128xf32>
    %312 = arith.mulf %308, %307 : vector<1x128xf32>
    %313 = arith.addf %311, %312 : vector<1x128xf32>
    %314 = math.tanh %313 : vector<1x128xf32>
    %315 = arith.mulf %310, %314 : vector<1x128xf32>
    %c5 = arith.constant 5 : index
    %c0_57 = arith.constant 0 : index
    %316 = vector.load %arg12[%c5, %c0_57] : memref<8x128xf32, #tpu.memory_space<vmem>>, vector<1x128xf32>
    tpu.vector_store %arg12[%c5, %c0_57], %315 {strides = array<i32>} : memref<8x128xf32, #tpu.memory_space<vmem>>, vector<1x128xf32>,
    %317 = vector.extract_strided_slice %189 {offsets = [6, 0], sizes = [1, 512], strides = [1, 1]} : vector<8x512xf32> to vector<1x512xf32>
    %318 = arith.truncf %315 : vector<1x128xf32> to vector<1x128xbf16>
    %cst_58 = arith.constant dense<0.000000e+00> : vector<1x512xf32>
    %319 = tpu.matmul %318, %190, %cst_58 {dimension_numbers = #tpu.dot_dimension_numbers<[1], [0], [0], [1], [0, 0, 1, 1], [], []>} : vector<1x128xbf16>, vector<128x512xbf16>, vector<1x512xf32> -> vector<1x512xf32>
    %320 = arith.addf %317, %319 : vector<1x512xf32>
    %321 = vector.extract_strided_slice %320 {offsets = [0, 0], sizes = [1, 384], strides = [1, 1]} : vector<1x512xf32> to vector<1x384xf32>
    %322 = arith.negf %321 : vector<1x384xf32>
    %323 = math.exp %322 : vector<1x384xf32>
    %cst_59 = arith.constant 1.000000e+00 : f32
    %324 = vector.broadcast %cst_59 : f32 to vector<1x384xf32>
    %325 = arith.addf %324, %323 : vector<1x384xf32>
    %326 = arith.divf %324, %325 : vector<1x384xf32>
    %327 = vector.extract_strided_slice %320 {offsets = [0, 384], sizes = [1, 128], strides = [1, 1]} : vector<1x512xf32> to vector<1x128xf32>
    %328 = math.tanh %327 : vector<1x128xf32>
    %329 = vector.extract_strided_slice %326 {offsets = [0, 0], sizes = [1, 128], strides = [1, 1]} : vector<1x384xf32> to vector<1x128xf32>
    %330 = vector.extract_strided_slice %326 {offsets = [0, 128], sizes = [1, 128], strides = [1, 1]} : vector<1x384xf32> to vector<1x128xf32>
    %331 = vector.extract_strided_slice %326 {offsets = [0, 256], sizes = [1, 128], strides = [1, 1]} : vector<1x384xf32> to vector<1x128xf32>
    %332 = arith.mulf %330, %313 : vector<1x128xf32>
    %333 = arith.mulf %329, %328 : vector<1x128xf32>
    %334 = arith.addf %332, %333 : vector<1x128xf32>
    %335 = math.tanh %334 : vector<1x128xf32>
    %336 = arith.mulf %331, %335 : vector<1x128xf32>
    %c6 = arith.constant 6 : index
    %c0_60 = arith.constant 0 : index
    %337 = vector.load %arg12[%c6, %c0_60] : memref<8x128xf32, #tpu.memory_space<vmem>>, vector<1x128xf32>
    tpu.vector_store %arg12[%c6, %c0_60], %336 {strides = array<i32>} : memref<8x128xf32, #tpu.memory_space<vmem>>, vector<1x128xf32>,
    %338 = vector.extract_strided_slice %189 {offsets = [7, 0], sizes = [1, 512], strides = [1, 1]} : vector<8x512xf32> to vector<1x512xf32>
    %339 = arith.truncf %336 : vector<1x128xf32> to vector<1x128xbf16>
    %cst_61 = arith.constant dense<0.000000e+00> : vector<1x512xf32>
    %340 = tpu.matmul %339, %190, %cst_61 {dimension_numbers = #tpu.dot_dimension_numbers<[1], [0], [0], [1], [0, 0, 1, 1], [], []>} : vector<1x128xbf16>, vector<128x512xbf16>, vector<1x512xf32> -> vector<1x512xf32>
    %341 = arith.addf %338, %340 : vector<1x512xf32>
    %342 = vector.extract_strided_slice %341 {offsets = [0, 0], sizes = [1, 384], strides = [1, 1]} : vector<1x512xf32> to vector<1x384xf32>
    %343 = arith.negf %342 : vector<1x384xf32>
    %344 = math.exp %343 : vector<1x384xf32>
    %cst_62 = arith.constant 1.000000e+00 : f32
    %345 = vector.broadcast %cst_62 : f32 to vector<1x384xf32>
    %346 = arith.addf %345, %344 : vector<1x384xf32>
    %347 = arith.divf %345, %346 : vector<1x384xf32>
    %348 = vector.extract_strided_slice %341 {offsets = [0, 384], sizes = [1, 128], strides = [1, 1]} : vector<1x512xf32> to vector<1x128xf32>
    %349 = math.tanh %348 : vector<1x128xf32>
    %350 = vector.extract_strided_slice %347 {offsets = [0, 0], sizes = [1, 128], strides = [1, 1]} : vector<1x384xf32> to vector<1x128xf32>
    %351 = vector.extract_strided_slice %347 {offsets = [0, 128], sizes = [1, 128], strides = [1, 1]} : vector<1x384xf32> to vector<1x128xf32>
    %352 = vector.extract_strided_slice %347 {offsets = [0, 256], sizes = [1, 128], strides = [1, 1]} : vector<1x384xf32> to vector<1x128xf32>
    %353 = arith.mulf %351, %334 : vector<1x128xf32>
    %354 = arith.mulf %350, %349 : vector<1x128xf32>
    %355 = arith.addf %353, %354 : vector<1x128xf32>
    %356 = math.tanh %355 : vector<1x128xf32>
    %357 = arith.mulf %352, %356 : vector<1x128xf32>
    %c7 = arith.constant 7 : index
    %c0_63 = arith.constant 0 : index
    %358 = vector.load %arg12[%c7, %c0_63] : memref<8x128xf32, #tpu.memory_space<vmem>>, vector<1x128xf32>
    tpu.vector_store %arg12[%c7, %c0_63], %357 {strides = array<i32>} : memref<8x128xf32, #tpu.memory_space<vmem>>, vector<1x128xf32>,
    %c0_64 = arith.constant 0 : index
    %c0_65 = arith.constant 0 : index
    %359 = vector.load %arg12[%c0_64, %c0_65] : memref<8x128xf32, #tpu.memory_space<vmem>>, vector<8x128xf32>
    %c0_66 = arith.constant 0 : index
    %c0_67 = arith.constant 0 : index
    %360 = vector.load %arg9[%c0_66, %c0_67] : memref<128x128xf32, #tpu.memory_space<vmem>>, vector<128x128xf32>
    %cst_68 = arith.constant dense<0.000000e+00> : vector<8x128xf32>
    %361 = tpu.matmul %359, %360, %cst_68 {dimension_numbers = #tpu.dot_dimension_numbers<[1], [0], [0], [1], [0, 0, 1, 1], [], []>} : vector<8x128xf32>, vector<128x128xf32>, vector<8x128xf32> -> vector<8x128xf32>
    %c0_69 = arith.constant 0 : index
    %c0_70 = arith.constant 0 : index
    %362 = vector.load %arg10[%c0_69, %c0_70] : memref<1x128xf32, #tpu.memory_space<vmem>>, vector<1x128xf32>
    %363 = vector.broadcast %362 : vector<1x128xf32> to vector<8x128xf32>
    %364 = arith.addf %361, %363 : vector<8x128xf32>
    %c0_71 = arith.constant 0 : index
    %c0_72 = arith.constant 0 : index
    %365 = vector.load %arg11[%c0_71, %c0_72] : memref<8x128xf32, #tpu.memory_space<vmem>>, vector<8x128xf32>
    tpu.vector_store %arg11[%c0_71, %c0_72], %364 {strides = array<i32>} : memref<8x128xf32, #tpu.memory_space<vmem>>, vector<8x128xf32>,
    return
  }
}

</mosaic_0001>

<llo_original>
// kernel: forward.1
$region0: #{forward.1}
  #allocation0 [shape = 'u32[]', space=smem, size = 0x4, offset = 0x4, fixed_abs, tag = 'smem constant byte address 0x4 - core index']
  #allocation1 [shape = 'u32[144,128]{1,0:T(1,128)}', space=vmem, size = 0x12000, scoped, tag = 'internal scratch']
  #allocation2 [shape = 'f32[8,128]{1,0:T(8,128)}', space=vmem, size = 0x1000, scoped, tag = 'scratch operand']
  %s0 = inlined_call_operand.vmem [shape: f32[8,128], index: 0, kind: input, shape index: {}]
  %s1 = inlined_call_operand.vmem [shape: f32[8,128], index: 1, kind: input, shape index: {}]
  %s2 = inlined_call_operand.vmem [shape: f32[128,512], index: 2, kind: input, shape index: {}]
  %s3 = inlined_call_operand.vmem [shape: bf16[128,512], index: 3, kind: input, shape index: {}]
  %s4 = inlined_call_operand.vmem [shape: f32[1,512], index: 4, kind: input, shape index: {}]
  %s5 = inlined_call_operand.vmem [shape: f32[128,512], index: 5, kind: input, shape index: {}]
  %s6 = inlined_call_operand.vmem [shape: f32[128,512], index: 6, kind: input, shape index: {}]
  %s7 = inlined_call_operand.vmem [shape: bf16[128,512], index: 7, kind: input, shape index: {}]
  %s8 = inlined_call_operand.vmem [shape: f32[1,512], index: 8, kind: input, shape index: {}]
  %s9 = inlined_call_operand.vmem [shape: f32[128,128], index: 9, kind: input, shape index: {}]
  %s10 = inlined_call_operand.vmem [shape: f32[1,128], index: 10, kind: input, shape index: {}]
  %s11 = inlined_call_operand.vmem [shape: f32[8,128], index: 11, kind: output, shape index: {}]
  %s12 = sld [smem:[#allocation0]]
  $region54: #{forward.1} parent=0
    _
  %s14 = ssub.s32 1, %s12
  %s15 = scalar_select 0, %s14, %s12
  // Predicated region
  $region2: #{forward.1} parent=0 // pred_check
    _
  $region3: #{forward.1} parent=0 // pred_check_branch
    %17 = sbr.rel (0) target = $region5
  $region4: #{forward.1} parent=0 // pred_region
    _
  $region5: #{forward.1} parent=0 // pred_fallthru
    _
  // Predicated region
  $region6: #{forward.1} parent=0 // pred_check
    _
  $region7: #{forward.1} parent=0 // pred_check_branch
    %19 = sbr.rel (0) target = $region9
  $region8: #{forward.1} parent=0 // pred_region
    _
  $region9: #{forward.1} parent=0 // pred_fallthru
    _
  // Predicated region
  $region10: #{forward.1} parent=0 // pred_check
    _
  $region11: #{forward.1} parent=0 // pred_check_branch
    %21 = sbr.rel (0) target = $region13
  $region12: #{forward.1} parent=0 // pred_region
    _
  $region13: #{forward.1} parent=0 // pred_fallthru
    _
  // Predicated region
  $region14: #{forward.1} parent=0 // pred_check
    _
  $region15: #{forward.1} parent=0 // pred_check_branch
    %23 = sbr.rel (0) target = $region17
  $region16: #{forward.1} parent=0 // pred_region
    _
  $region17: #{forward.1} parent=0 // pred_fallthru
    _
  // Predicated region
  $region18: #{forward.1} parent=0 // pred_check
    _
  $region19: #{forward.1} parent=0 // pred_check_branch
    %25 = sbr.rel (0) target = $region21
  $region20: #{forward.1} parent=0 // pred_region
    _
  $region21: #{forward.1} parent=0 // pred_fallthru
    _
  // Predicated region
  $region22: #{forward.1} parent=0 // pred_check
    _
  $region23: #{forward.1} parent=0 // pred_check_branch
    %27 = sbr.rel (0) target = $region25
  $region24: #{forward.1} parent=0 // pred_region
    _
  $region25: #{forward.1} parent=0 // pred_fallthru
    _
  // Predicated region
  $region26: #{forward.1} parent=0 // pred_check
    _
  $region27: #{forward.1} parent=0 // pred_check_branch
    %29 = sbr.rel (0) target = $region29
  $region28: #{forward.1} parent=0 // pred_region
    _
  $region29: #{forward.1} parent=0 // pred_fallthru
    _
  // Predicated region
  $region30: #{forward.1} parent=0 // pred_check
    _
  $region31: #{forward.1} parent=0 // pred_check_branch
    %31 = sbr.rel (0) target = $region33
  $region32: #{forward.1} parent=0 // pred_region
    _
  $region33: #{forward.1} parent=0 // pred_fallthru
    _
  // Predicated region
  $region34: #{forward.1} parent=0 // pred_check
    _
  $region35: #{forward.1} parent=0 // pred_check_branch
    %33 = sbr.rel (0) target = $region37
  $region36: #{forward.1} parent=0 // pred_region
    _
  $region37: #{forward.1} parent=0 // pred_fallthru
    _
  // Predicated region
  $region38: #{forward.1} parent=0 // pred_check
    _
  $region39: #{forward.1} parent=0 // pred_check_branch
    %35 = sbr.rel (0) target = $region41
  $region40: #{forward.1} parent=0 // pred_region
    _
  $region41: #{forward.1} parent=0 // pred_fallthru
    _
  // Predicated region
  $region42: #{forward.1} parent=0 // pred_check
    _
  $region43: #{forward.1} parent=0 // pred_check_branch
    %37 = sbr.rel (0) target = $region45
  $region44: #{forward.1} parent=0 // pred_region
    _
  $region45: #{forward.1} parent=0 // pred_fallthru
    _
  %v39 = vld [vmem:[%s0] sm:$0xff]
  %v40 = vld [vmem:[%s2] sm:$0xff]
  %v41 = vld [vmem:[%s2 + $0x8] sm:$0xff]
  %v42 = vld [vmem:[%s2 + $0x10] sm:$0xff]
  %v43 = vld [vmem:[%s2 + $0x18] sm:$0xff]
  %v44 = vld [vmem:[%s2 + $0x20] sm:$0xff]
  %v45 = vld [vmem:[%s2 + $0x28] sm:$0xff]
  %v46 = vld [vmem:[%s2 + $0x30] sm:$0xff]
  %v47 = vld [vmem:[%s2 + $0x38] sm:$0xff]
  %v48 = vld [vmem:[%s2 + $0x40] sm:$0xff]
  %v49 = vld [vmem:[%s2 + $0x48] sm:$0xff]
  %v50 = vld [vmem:[%s2 + $0x50] sm:$0xff]
  %v51 = vld [vmem:[%s2 + $0x58] sm:$0xff]
  %v52 = vld [vmem:[%s2 + $0x60] sm:$0xff]
  %v53 = vld [vmem:[%s2 + $0x68] sm:$0xff]
  %v54 = vld [vmem:[%s2 + $0x70] sm:$0xff]
  %v55 = vld [vmem:[%s2 + $0x78] sm:$0xff]
  %v56 = vld [vmem:[%s2 + $0x80] sm:$0xff]
  %v57 = vld [vmem:[%s2 + $0x88] sm:$0xff]
  %v58 = vld [vmem:[%s2 + $0x90] sm:$0xff]
  %v59 = vld [vmem:[%s2 + $0x98] sm:$0xff]
  %v60 = vld [vmem:[%s2 + $0xa0] sm:$0xff]
  %v61 = vld [vmem:[%s2 + $0xa8] sm:$0xff]
  %v62 = vld [vmem:[%s2 + $0xb0] sm:$0xff]
  %v63 = vld [vmem:[%s2 + $0xb8] sm:$0xff]
  %v64 = vld [vmem:[%s2 + $0xc0] sm:$0xff]
  %v65 = vld [vmem:[%s2 + $0xc8] sm:$0xff]
  %v66 = vld [vmem:[%s2 + $0xd0] sm:$0xff]
  %v67 = vld [vmem:[%s2 + $0xd8] sm:$0xff]
  %v68 = vld [vmem:[%s2 + $0xe0] sm:$0xff]
  %v69 = vld [vmem:[%s2 + $0xe8] sm:$0xff]
  %v70 = vld [vmem:[%s2 + $0xf0] sm:$0xff]
  %v71 = vld [vmem:[%s2 + $0xf8] sm:$0xff]
  %v72 = vld [vmem:[%s2 + $0x100] sm:$0xff]
  %v73 = vld [vmem:[%s2 + $0x108] sm:$0xff]
  %v74 = vld [vmem:[%s2 + $0x110] sm:$0xff]
  %v75 = vld [vmem:[%s2 + $0x118] sm:$0xff]
  %v76 = vld [vmem:[%s2 + $0x120] sm:$0xff]
  %v77 = vld [vmem:[%s2 + $0x128] sm:$0xff]
  %v78 = vld [vmem:[%s2 + $0x130] sm:$0xff]
  %v79 = vld [vmem:[%s2 + $0x138] sm:$0xff]
  %v80 = vld [vmem:[%s2 + $0x140] sm:$0xff]
  %v81 = vld [vmem:[%s2 + $0x148] sm:$0xff]
  %v82 = vld [vmem:[%s2 + $0x150] sm:$0xff]
  %v83 = vld [vmem:[%s2 + $0x158] sm:$0xff]
  %v84 = vld [vmem:[%s2 + $0x160] sm:$0xff]
  %v85 = vld [vmem:[%s2 + $0x168] sm:$0xff]
  %v86 = vld [vmem:[%s2 + $0x170] sm:$0xff]
  %v87 = vld [vmem:[%s2 + $0x178] sm:$0xff]
  %v88 = vld [vmem:[%s2 + $0x180] sm:$0xff]
  %v89 = vld [vmem:[%s2 + $0x188] sm:$0xff]
  %v90 = vld [vmem:[%s2 + $0x190] sm:$0xff]
  %v91 = vld [vmem:[%s2 + $0x198] sm:$0xff]
  %v92 = vld [vmem:[%s2 + $0x1a0] sm:$0xff]
  %v93 = vld [vmem:[%s2 + $0x1a8] sm:$0xff]
  %v94 = vld [vmem:[%s2 + $0x1b0] sm:$0xff]
  %v95 = vld [vmem:[%s2 + $0x1b8] sm:$0xff]
  %v96 = vld [vmem:[%s2 + $0x1c0] sm:$0xff]
  %v97 = vld [vmem:[%s2 + $0x1c8] sm:$0xff]
  %v98 = vld [vmem:[%s2 + $0x1d0] sm:$0xff]
  %v99 = vld [vmem:[%s2 + $0x1d8] sm:$0xff]
  %v100 = vld [vmem:[%s2 + $0x1e0] sm:$0xff]
  %v101 = vld [vmem:[%s2 + $0x1e8] sm:$0xff]
  %v102 = vld [vmem:[%s2 + $0x1f0] sm:$0xff]
  %v103 = vld [vmem:[%s2 + $0x1f8] sm:$0xff]
  %v104 = vld [vmem:[%s4] sm:$0xf]
  %v106 = vlaneseq
  %v107 = vshrl.u32 %v106, 7
  %v108 = vsub.s32 0, %v107
  %v109 = vrot.slane %v104, %v108
  %v110 = vlaneseq
  %v111 = vshrl.u32 %v110, 7
  %v112 = vsub.s32 1, %v111
  %v113 = vrot.slane %v104, %v112
  %v114 = vlaneseq
  %v115 = vshrl.u32 %v114, 7
  %v116 = vsub.s32 2, %v115
  %v117 = vrot.slane %v104, %v116
  %v118 = vlaneseq
  %v119 = vshrl.u32 %v118, 7
  %v120 = vsub.s32 3, %v119
  %v121 = vrot.slane %v104, %v120
  %126 = vmatprep.subr.mxu0 %v101
  %127 = vmatpush1.msra.mxu0 %v100
  %128 = vmatprep.subr.mxu0 %v97
  %129 = vmatpush1.msra.mxu0 %v96
  %130 = vmatprep.subr.mxu0 %v93
  %131 = vmatpush1.msra.mxu0 %v92
  %132 = vmatprep.subr.mxu0 %v89
  %133 = vmatpush1.msra.mxu0 %v88
  %134 = vmatprep.subr.mxu0 %v85
  %135 = vmatpush1.msra.mxu0 %v84
  %136 = vmatprep.subr.mxu0 %v81
  %137 = vmatpush1.msra.mxu0 %v80
  %138 = vmatprep.subr.mxu0 %v77
  %139 = vmatpush1.msra.mxu0 %v76
  %140 = vmatprep.subr.mxu0 %v73
  %141 = vmatpush1.msra.mxu0 %v72
  %142 = vmatprep.subr.mxu0 %v69
  %143 = vmatpush1.msra.mxu0 %v68
  %144 = vmatprep.subr.mxu0 %v65
  %145 = vmatpush1.msra.mxu0 %v64
  %146 = vmatprep.subr.mxu0 %v61
  %147 = vmatpush1.msra.mxu0 %v60
  %148 = vmatprep.subr.mxu0 %v57
  %149 = vmatpush1.msra.mxu0 %v56
  %150 = vmatprep.subr.mxu0 %v53
  %151 = vmatpush1.msra.mxu0 %v52
  %152 = vmatprep.subr.mxu0 %v49
  %153 = vmatpush1.msra.mxu0 %v48
  %154 = vmatprep.subr.mxu0 %v45
  %155 = vmatpush1.msra.mxu0 %v44
  %156 = vmatprep.subr.mxu0 %v41
  %157 = vmatpush1.msra.mxu0 %v40
  %158 = vmatprep.subr.mxu0 0.0
  %159 = vmatpush2.msra.mxu0 0.0
  %160 = vmatprep.subr.mxu0 0.0
  %161 = vmatpush2.msra.mxu0 0.0
  %162 = vmatprep.subr.mxu0 0.0
  %163 = vmatpush2.msra.mxu0 0.0
  %164 = vmatprep.subr.mxu0 0.0
  %165 = vmatpush2.msra.mxu0 0.0
  %166 = vmatprep.subr.mxu0 0.0
  %167 = vmatpush2.msra.mxu0 0.0
  %168 = vmatprep.subr.mxu0 0.0
  %169 = vmatpush2.msra.mxu0 0.0
  %170 = vmatprep.subr.mxu0 0.0
  %171 = vmatpush2.msra.mxu0 0.0
  %172 = vmatprep.subr.mxu0 0.0
  %173 = vmatpush2.msra.mxu0 0.0
  %174 = vmatprep.subr.mxu0 0.0
  %175 = vmatpush2.msra.mxu0 0.0
  %176 = vmatprep.subr.mxu0 0.0
  %177 = vmatpush2.msra.mxu0 0.0
  %178 = vmatprep.subr.mxu0 0.0
  %179 = vmatpush2.msra.mxu0 0.0
  %180 = vmatprep.subr.mxu0 0.0
  %181 = vmatpush2.msra.mxu0 0.0
  %182 = vmatprep.subr.mxu0 0.0
  %183 = vmatpush2.msra.mxu0 0.0
  %184 = vmatprep.subr.mxu0 0.0
  %185 = vmatpush2.msra.mxu0 0.0
  %186 = vmatprep.subr.mxu0 0.0
  %187 = vmatpush2.msra.mxu0 0.0
  %188 = vmatprep.subr.mxu0 0.0
  %189 = vmatpush2.msra.mxu0 0.0
  %190 = vmatprep.mubr.f32.mxu0 0.0
  %191 = vmatmul.mubr.f32.gmra.mxu0 %v39
  %v192 = vpop.f32.mrf.mxu0
  %v193 = vadd.f32 %v109, %v192
  %v194 = vpop.f32.mrf.mxu0
  %v195 = vadd.f32 %v113, %v194
  %196 = vdwg.mxu0
  %197 = vmatprep.subr.mxu0 %v103
  %198 = vmatpush1.msra.mxu0 %v102
  %199 = vmatprep.subr.mxu0 %v99
  %200 = vmatpush1.msra.mxu0 %v98
  %201 = vmatprep.subr.mxu0 %v95
  %202 = vmatpush1.msra.mxu0 %v94
  %203 = vmatprep.subr.mxu0 %v91
  %204 = vmatpush1.msra.mxu0 %v90
  %205 = vmatprep.subr.mxu0 %v87
  %206 = vmatpush1.msra.mxu0 %v86
  %207 = vmatprep.subr.mxu0 %v83
  %208 = vmatpush1.msra.mxu0 %v82
  %209 = vmatprep.subr.mxu0 %v79
  %210 = vmatpush1.msra.mxu0 %v78
  %211 = vmatprep.subr.mxu0 %v75
  %212 = vmatpush1.msra.mxu0 %v74
  %213 = vmatprep.subr.mxu0 %v71
  %214 = vmatpush1.msra.mxu0 %v70
  %215 = vmatprep.subr.mxu0 %v67
  %216 = vmatpush1.msra.mxu0 %v66
  %217 = vmatprep.subr.mxu0 %v63
  %218 = vmatpush1.msra.mxu0 %v62
  %219 = vmatprep.subr.mxu0 %v59
  %220 = vmatpush1.msra.mxu0 %v58
  %221 = vmatprep.subr.mxu0 %v55
  %222 = vmatpush1.msra.mxu0 %v54
  %223 = vmatprep.subr.mxu0 %v51
  %224 = vmatpush1.msra.mxu0 %v50
  %225 = vmatprep.subr.mxu0 %v47
  %226 = vmatpush1.msra.mxu0 %v46
  %227 = vmatprep.subr.mxu0 %v43
  %228 = vmatpush1.msra.mxu0 %v42
  %229 = vmatprep.subr.mxu0 0.0
  %230 = vmatpush2.msra.mxu0 0.0
  %231 = vmatprep.subr.mxu0 0.0
  %232 = vmatpush2.msra.mxu0 0.0
  %233 = vmatprep.subr.mxu0 0.0
  %234 = vmatpush2.msra.mxu0 0.0
  %235 = vmatprep.subr.mxu0 0.0
  %236 = vmatpush2.msra.mxu0 0.0
  %237 = vmatprep.subr.mxu0 0.0
  %238 = vmatpush2.msra.mxu0 0.0
  %239 = vmatprep.subr.mxu0 0.0
  %240 = vmatpush2.msra.mxu0 0.0
  %241 = vmatprep.subr.mxu0 0.0
  %242 = vmatpush2.msra.mxu0 0.0
  %243 = vmatprep.subr.mxu0 0.0
  %244 = vmatpush2.msra.mxu0 0.0
  %245 = vmatprep.subr.mxu0 0.0
  %246 = vmatpush2.msra.mxu0 0.0
  %247 = vmatprep.subr.mxu0 0.0
  %248 = vmatpush2.msra.mxu0 0.0
  %249 = vmatprep.subr.mxu0 0.0
  %250 = vmatpush2.msra.mxu0 0.0
  %251 = vmatprep.subr.mxu0 0.0
  %252 = vmatpush2.msra.mxu0 0.0
  %253 = vmatprep.subr.mxu0 0.0
  %254 = vmatpush2.msra.mxu0 0.0
  %255 = vmatprep.subr.mxu0 0.0
  %256 = vmatpush2.msra.mxu0 0.0
  %257 = vmatprep.subr.mxu0 0.0
  %258 = vmatpush2.msra.mxu0 0.0
  %259 = vmatprep.subr.mxu0 0.0
  %260 = vmatpush2.msra.mxu0 0.0
  %261 = vmatprep.mubr.f32.mxu0 0.0
  %262 = vmatmul.mubr.f32.gmra.mxu0 %v39
  %v263 = vpop.f32.mrf.mxu0
  %v264 = vadd.f32 %v117, %v263
  %v265 = vpop.f32.mrf.mxu0
  %v266 = vadd.f32 %v121, %v265
  %267 = vdwg.mxu0
  %v268 = vld [vmem:[%s3] sm:$0xff]
  %v269 = vld [vmem:[%s3 + $0x8] sm:$0xff]
  %v270 = vld [vmem:[%s3 + $0x10] sm:$0xff]
  %v271 = vld [vmem:[%s3 + $0x18] sm:$0xff]
  %v272 = vld [vmem:[%s3 + $0x20] sm:$0xff]
  %v273 = vld [vmem:[%s3 + $0x28] sm:$0xff]
  %v274 = vld [vmem:[%s3 + $0x30] sm:$0xff]
  %v275 = vld [vmem:[%s3 + $0x38] sm:$0xff]
  %v276 = vld [vmem:[%s3 + $0x40] sm:$0xff]
  %v277 = vld [vmem:[%s3 + $0x48] sm:$0xff]
  %v278 = vld [vmem:[%s3 + $0x50] sm:$0xff]
  %v279 = vld [vmem:[%s3 + $0x58] sm:$0xff]
  %v280 = vld [vmem:[%s3 + $0x60] sm:$0xff]
  %v281 = vld [vmem:[%s3 + $0x68] sm:$0xff]
  %v282 = vld [vmem:[%s3 + $0x70] sm:$0xff]
  %v283 = vld [vmem:[%s3 + $0x78] sm:$0xff]
  %v284 = vld [vmem:[%s3 + $0x80] sm:$0xff]
  %v285 = vld [vmem:[%s3 + $0x88] sm:$0xff]
  %v286 = vld [vmem:[%s3 + $0x90] sm:$0xff]
  %v287 = vld [vmem:[%s3 + $0x98] sm:$0xff]
  %v288 = vld [vmem:[%s3 + $0xa0] sm:$0xff]
  %v289 = vld [vmem:[%s3 + $0xa8] sm:$0xff]
  %v290 = vld [vmem:[%s3 + $0xb0] sm:$0xff]
  %v291 = vld [vmem:[%s3 + $0xb8] sm:$0xff]
  %v292 = vld [vmem:[%s3 + $0xc0] sm:$0xff]
  %v293 = vld [vmem:[%s3 + $0xc8] sm:$0xff]
  %v294 = vld [vmem:[%s3 + $0xd0] sm:$0xff]
  %v295 = vld [vmem:[%s3 + $0xd8] sm:$0xff]
  %v296 = vld [vmem:[%s3 + $0xe0] sm:$0xff]
  %v297 = vld [vmem:[%s3 + $0xe8] sm:$0xff]
  %v298 = vld [vmem:[%s3 + $0xf0] sm:$0xff]
  %v299 = vld [vmem:[%s3 + $0xf8] sm:$0xff]
  %v332 = vunpack.c.l.b16 %v268
  %v333 = vunpack.c.h.b16 %v268
  %v334 = vunpack.c.l.b16 %v269
  %v335 = vunpack.c.h.b16 %v269
  %v336 = vunpack.c.l.b16 %v270
  %v337 = vunpack.c.h.b16 %v270
  %v338 = vunpack.c.l.b16 %v271
  %v339 = vunpack.c.h.b16 %v271
  %v340 = vunpack.c.l.b16 %v272
  %v341 = vunpack.c.h.b16 %v272
  %v342 = vunpack.c.l.b16 %v273
  %v343 = vunpack.c.h.b16 %v273
  %v344 = vunpack.c.l.b16 %v274
  %v345 = vunpack.c.h.b16 %v274
  %v346 = vunpack.c.l.b16 %v275
  %v347 = vunpack.c.h.b16 %v275
  %v348 = vunpack.c.l.b16 %v276
  %v349 = vunpack.c.h.b16 %v276
  %v350 = vunpack.c.l.b16 %v277
  %v351 = vunpack.c.h.b16 %v277
  %v352 = vunpack.c.l.b16 %v278
  %v353 = vunpack.c.h.b16 %v278
  %v354 = vunpack.c.l.b16 %v279
  %v355 = vunpack.c.h.b16 %v279
  %v356 = vunpack.c.l.b16 %v280
  %v357 = vunpack.c.h.b16 %v280
  %v358 = vunpack.c.l.b16 %v281
  %v359 = vunpack.c.h.b16 %v281
  %v360 = vunpack.c.l.b16 %v282
  %v361 = vunpack.c.h.b16 %v282
  %v362 = vunpack.c.l.b16 %v283
  %v363 = vunpack.c.h.b16 %v283
  %v364 = vunpack.c.l.b16 %v284
  %v365 = vunpack.c.h.b16 %v284
  %v366 = vunpack.c.l.b16 %v285
  %v367 = vunpack.c.h.b16 %v285
  %v368 = vunpack.c.l.b16 %v286
  %v369 = vunpack.c.h.b16 %v286
  %v370 = vunpack.c.l.b16 %v287
  %v371 = vunpack.c.h.b16 %v287
  %v372 = vunpack.c.l.b16 %v288
  %v373 = vunpack.c.h.b16 %v288
  %v374 = vunpack.c.l.b16 %v289
  %v375 = vunpack.c.h.b16 %v289
  %v376 = vunpack.c.l.b16 %v290
  %v377 = vunpack.c.h.b16 %v290
  %v378 = vunpack.c.l.b16 %v291
  %v379 = vunpack.c.h.b16 %v291
  %v380 = vunpack.c.l.b16 %v292
  %v381 = vunpack.c.h.b16 %v292
  %v382 = vunpack.c.l.b16 %v293
  %v383 = vunpack.c.h.b16 %v293
  %v384 = vunpack.c.l.b16 %v294
  %v385 = vunpack.c.h.b16 %v294
  %v386 = vunpack.c.l.b16 %v295
  %v387 = vunpack.c.h.b16 %v295
  %v388 = vunpack.c.l.b16 %v296
  %v389 = vunpack.c.h.b16 %v296
  %v390 = vunpack.c.l.b16 %v297
  %v391 = vunpack.c.h.b16 %v297
  %v392 = vunpack.c.l.b16 %v298
  %v393 = vunpack.c.h.b16 %v298
  %v394 = vunpack.c.l.b16 %v299
  %v395 = vunpack.c.h.b16 %v299
  %v396 = vpack.c.b16 %v336, %v332
  %v397 = vpack.c.b16 %v337, %v333
  %v398 = vpack.c.b16 %v338, %v334
  %v399 = vpack.c.b16 %v339, %v335
  %v400 = vpack.c.b16 %v344, %v340
  %v401 = vpack.c.b16 %v345, %v341
  %v402 = vpack.c.b16 %v346, %v342
  %v403 = vpack.c.b16 %v347, %v343
  %v404 = vpack.c.b16 %v352, %v348
  %v405 = vpack.c.b16 %v353, %v349
  %v406 = vpack.c.b16 %v354, %v350
  %v407 = vpack.c.b16 %v355, %v351
  %v408 = vpack.c.b16 %v360, %v356
  %v409 = vpack.c.b16 %v361, %v357
  %v410 = vpack.c.b16 %v362, %v358
  %v411 = vpack.c.b16 %v363, %v359
  %v412 = vpack.c.b16 %v368, %v364
  %v413 = vpack.c.b16 %v369, %v365
  %v414 = vpack.c.b16 %v370, %v366
  %v415 = vpack.c.b16 %v371, %v367
  %v416 = vpack.c.b16 %v376, %v372
  %v417 = vpack.c.b16 %v377, %v373
  %v418 = vpack.c.b16 %v378, %v374
  %v419 = vpack.c.b16 %v379, %v375
  %v420 = vpack.c.b16 %v384, %v380
  %v421 = vpack.c.b16 %v385, %v381
  %v422 = vpack.c.b16 %v386, %v382
  %v423 = vpack.c.b16 %v387, %v383
  %v424 = vpack.c.b16 %v392, %v388
  %v425 = vpack.c.b16 %v393, %v389
  %v426 = vpack.c.b16 %v394, %v390
  %v427 = vpack.c.b16 %v395, %v391
  %460 = vmatprep.subr.bf16.mxu0 %v425
  %461 = vmatpush1.bf16.msra.mxu0 %v424
  %462 = vmatprep.subr.bf16.mxu0 %v421
  %463 = vmatpush1.bf16.msra.mxu0 %v420
  %464 = vmatprep.subr.bf16.mxu0 %v417
  %465 = vmatpush1.bf16.msra.mxu0 %v416
  %466 = vmatprep.subr.bf16.mxu0 %v413
  %467 = vmatpush1.bf16.msra.mxu0 %v412
  %468 = vmatprep.subr.bf16.mxu0 %v409
  %469 = vmatpush1.bf16.msra.mxu0 %v408
  %470 = vmatprep.subr.bf16.mxu0 %v405
  %471 = vmatpush1.bf16.msra.mxu0 %v404
  %472 = vmatprep.subr.bf16.mxu0 %v401
  %473 = vmatpush1.bf16.msra.mxu0 %v400
  %474 = vmatprep.subr.bf16.mxu0 %v397
  %475 = vmatpush1.bf16.msra.mxu0 %v396
  %476 = vmatprep.subr.bf16.mxu0 0
  %477 = vmatpush2.bf16.msra.mxu0 0
  %478 = vmatprep.subr.bf16.mxu0 0
  %479 = vmatpush2.bf16.msra.mxu0 0
  %480 = vmatprep.subr.bf16.mxu0 0
  %481 = vmatpush2.bf16.msra.mxu0 0
  %482 = vmatprep.subr.bf16.mxu0 0
  %483 = vmatpush2.bf16.msra.mxu0 0
  %484 = vmatprep.subr.bf16.mxu0 0
  %485 = vmatpush2.bf16.msra.mxu0 0
  %486 = vmatprep.subr.bf16.mxu0 0
  %487 = vmatpush2.bf16.msra.mxu0 0
  %488 = vmatprep.subr.bf16.mxu0 0
  %489 = vmatpush2.bf16.msra.mxu0 0
  %490 = vmatprep.subr.bf16.mxu0 0
  %491 = vmatpush2.bf16.msra.mxu0 0
  %492 = vmatprep.mubr.bf16.mxu0 0
  %493 = vmatmul.mubr.bf16.gmra.mxu0 0
  %v494 = vpop.f32.mrf.mxu0
  %v495 = vadd.f32 0.0, %v494
  %v496 = vpop.f32.mrf.mxu0
  %v497 = vadd.f32 0.0, %v496
  %v498 = vpop.f32.mrf.mxu0
  %v499 = vpop.f32.mrf.mxu0
  %500 = vdwg.mxu0
  %501 = vmatprep.subr.bf16.mxu0 %v427
  %502 = vmatpush1.bf16.msra.mxu0 %v426
  %503 = vmatprep.subr.bf16.mxu0 %v423
  %504 = vmatpush1.bf16.msra.mxu0 %v422
  %505 = vmatprep.subr.bf16.mxu0 %v419
  %506 = vmatpush1.bf16.msra.mxu0 %v418
  %507 = vmatprep.subr.bf16.mxu0 %v415
  %508 = vmatpush1.bf16.msra.mxu0 %v414
  %509 = vmatprep.subr.bf16.mxu0 %v411
  %510 = vmatpush1.bf16.msra.mxu0 %v410
  %511 = vmatprep.subr.bf16.mxu0 %v407
  %512 = vmatpush1.bf16.msra.mxu0 %v406
  %513 = vmatprep.subr.bf16.mxu0 %v403
  %514 = vmatpush1.bf16.msra.mxu0 %v402
  %515 = vmatprep.subr.bf16.mxu0 %v399
  %516 = vmatpush1.bf16.msra.mxu0 %v398
  %517 = vmatprep.subr.bf16.mxu0 0
  %518 = vmatpush2.bf16.msra.mxu0 0
  %519 = vmatprep.subr.bf16.mxu0 0
  %520 = vmatpush2.bf16.msra.mxu0 0
  %521 = vmatprep.subr.bf16.mxu0 0
  %522 = vmatpush2.bf16.msra.mxu0 0
  %523 = vmatprep.subr.bf16.mxu0 0
  %524 = vmatpush2.bf16.msra.mxu0 0
  %525 = vmatprep.subr.bf16.mxu0 0
  %526 = vmatpush2.bf16.msra.mxu0 0
  %527 = vmatprep.subr.bf16.mxu0 0
  %528 = vmatpush2.bf16.msra.mxu0 0
  %529 = vmatprep.subr.bf16.mxu0 0
  %530 = vmatpush2.bf16.msra.mxu0 0
  %531 = vmatprep.subr.bf16.mxu0 0
  %532 = vmatpush2.bf16.msra.mxu0 0
  %533 = vmatprep.mubr.bf16.mxu0 0
  %534 = vmatmul.mubr.bf16.gmra.mxu0 0
  %v535 = vpop.f32.mrf.mxu0
  %v536 = vadd.f32 0.0, %v535
  %v537 = vpop.f32.mrf.mxu0
  %v538 = vadd.f32 0.0, %v537
  %v539 = vpop.f32.mrf.mxu0
  %v540 = vpop.f32.mrf.mxu0
  %541 = vdwg.mxu0
  %v542 = vadd.f32 %v193, %v495
  %v543 = vadd.f32 %v195, %v497
  %v544 = vadd.f32 %v264, %v536
  %v545 = vadd.f32 %v266, %v538
  %v546 = vxor.u32 %v542, 2147483648
  %v547 = vxor.u32 %v543, 2147483648
  %v548 = vxor.u32 %v544, 2147483648
  %v549 = vmul.f32 %v546, 1.442695
  %v550 = vpow.pop %v549
  %v551 = vmul.f32 %v547, 1.442695
  %v552 = vpow.pop %v551
  %v553 = vmul.f32 %v548, 1.442695
  %v554 = vpow.pop %v553
  %v555 = vadd.f32 %v550, 1.0
  %v556 = vadd.f32 %v552, 1.0
  %v557 = vadd.f32 %v554, 1.0
  %v558 = vrcp.pop %v555
  %v559 = vmul.f32 1.0, %v558
  %v560 = vrcp.pop %v556
  %v561 = vmul.f32 1.0, %v560
  %v562 = vrcp.pop %v557
  %v563 = vmul.f32 1.0, %v562
  %v564 = vtanh.pop %v545
  %v565 = vmul.f32 %v561, 0.0
  %v566 = vmul.f32 %v559, %v564
  %v567 = vadd.f32 %v565, %v566
  %v568 = vtanh.pop %v567
  %v569 = vmul.f32 %v563, %v568
  %v570 = vadd.f32 %v569, 0.0
  %v571 = vpack.c.bf16 %v569, %v569
  %572 = vmatprep.subr.bf16.mxu0 %v425
  %573 = vmatpush1.bf16.msra.mxu0 %v424
  %574 = vmatprep.subr.bf16.mxu0 %v421
  %575 = vmatpush1.bf16.msra.mxu0 %v420
  %576 = vmatprep.subr.bf16.mxu0 %v417
  %577 = vmatpush1.bf16.msra.mxu0 %v416
  %578 = vmatprep.subr.bf16.mxu0 %v413
  %579 = vmatpush1.bf16.msra.mxu0 %v412
  %580 = vmatprep.subr.bf16.mxu0 %v409
  %581 = vmatpush1.bf16.msra.mxu0 %v408
  %582 = vmatprep.subr.bf16.mxu0 %v405
  %583 = vmatpush1.bf16.msra.mxu0 %v404
  %584 = vmatprep.subr.bf16.mxu0 %v401
  %585 = vmatpush1.bf16.msra.mxu0 %v400
  %586 = vmatprep.subr.bf16.mxu0 %v397
  %587 = vmatpush1.bf16.msra.mxu0 %v396
  %588 = vmatprep.subr.bf16.mxu0 0
  %589 = vmatpush2.bf16.msra.mxu0 0
  %590 = vmatprep.subr.bf16.mxu0 0
  %591 = vmatpush2.bf16.msra.mxu0 0
  %592 = vmatprep.subr.bf16.mxu0 0
  %593 = vmatpush2.bf16.msra.mxu0 0
  %594 = vmatprep.subr.bf16.mxu0 0
  %595 = vmatpush2.bf16.msra.mxu0 0
  %596 = vmatprep.subr.bf16.mxu0 0
  %597 = vmatpush2.bf16.msra.mxu0 0
  %598 = vmatprep.subr.bf16.mxu0 0
  %599 = vmatpush2.bf16.msra.mxu0 0
  %600 = vmatprep.subr.bf16.mxu0 0
  %601 = vmatpush2.bf16.msra.mxu0 0
  %602 = vmatprep.subr.bf16.mxu0 0
  %603 = vmatpush2.bf16.msra.mxu0 0
  %604 = vmatprep.mubr.bf16.mxu0 0
  %605 = vmatmul.mubr.bf16.gmra.mxu0 %v571
  %v606 = vpop.f32.mrf.mxu0
  %v607 = vadd.f32 0.0, %v606
  %v608 = vpop.f32.mrf.mxu0
  %v609 = vadd.f32 0.0, %v608
  %v610 = vpop.f32.mrf.mxu0
  %v611 = vpop.f32.mrf.mxu0
  %612 = vdwg.mxu0
  %613 = vmatprep.subr.bf16.mxu0 %v427
  %614 = vmatpush1.bf16.msra.mxu0 %v426
  %615 = vmatprep.subr.bf16.mxu0 %v423
  %616 = vmatpush1.bf16.msra.mxu0 %v422
  %617 = vmatprep.subr.bf16.mxu0 %v419
  %618 = vmatpush1.bf16.msra.mxu0 %v418
  %619 = vmatprep.subr.bf16.mxu0 %v415
  %620 = vmatpush1.bf16.msra.mxu0 %v414
  %621 = vmatprep.subr.bf16.mxu0 %v411
  %622 = vmatpush1.bf16.msra.mxu0 %v410
  %623 = vmatprep.subr.bf16.mxu0 %v407
  %624 = vmatpush1.bf16.msra.mxu0 %v406
  %625 = vmatprep.subr.bf16.mxu0 %v403
  %626 = vmatpush1.bf16.msra.mxu0 %v402
  %627 = vmatprep.subr.bf16.mxu0 %v399
  %628 = vmatpush1.bf16.msra.mxu0 %v398
  %629 = vmatprep.subr.bf16.mxu0 0
  %630 = vmatpush2.bf16.msra.mxu0 0
  %631 = vmatprep.subr.bf16.mxu0 0
  %632 = vmatpush2.bf16.msra.mxu0 0
  %633 = vmatprep.subr.bf16.mxu0 0
  %634 = vmatpush2.bf16.msra.mxu0 0
  %635 = vmatprep.subr.bf16.mxu0 0
  %636 = vmatpush2.bf16.msra.mxu0 0
  %637 = vmatprep.subr.bf16.mxu0 0
  %638 = vmatpush2.bf16.msra.mxu0 0
  %639 = vmatprep.subr.bf16.mxu0 0
  %640 = vmatpush2.bf16.msra.mxu0 0
  %641 = vmatprep.subr.bf16.mxu0 0
  %642 = vmatpush2.bf16.msra.mxu0 0
  %643 = vmatprep.subr.bf16.mxu0 0
  %644 = vmatpush2.bf16.msra.mxu0 0
  %645 = vmatprep.mubr.bf16.mxu0 0
  %646 = vmatmul.mubr.bf16.gmra.mxu0 %v571
  %v647 = vpop.f32.mrf.mxu0
  %v648 = vadd.f32 0.0, %v647
  %v649 = vpop.f32.mrf.mxu0
  %v650 = vadd.f32 0.0, %v649
  %v651 = vpop.f32.mrf.mxu0
  %v652 = vpop.f32.mrf.mxu0
  %653 = vdwg.mxu0
  %v658 = vrot.slane %v607, 7
  %v659 = vrot.slane %v609, 7
  %v660 = vrot.slane %v648, 7
  %v661 = vrot.slane %v650, 7
  %v666 = vadd.f32 %v193, %v658
  %v667 = vadd.f32 %v195, %v659
  %v668 = vadd.f32 %v264, %v660
  %v669 = vadd.f32 %v266, %v661
  %v670 = vxor.u32 %v666, 2147483648
  %v671 = vxor.u32 %v667, 2147483648
  %v672 = vxor.u32 %v668, 2147483648
  %v673 = vmul.f32 %v670, 1.442695
  %v674 = vpow.pop %v673
  %v675 = vmul.f32 %v671, 1.442695
  %v676 = vpow.pop %v675
  %v677 = vmul.f32 %v672, 1.442695
  %v678 = vpow.pop %v677
  %v679 = vadd.f32 %v674, 1.0
  %v680 = vadd.f32 %v676, 1.0
  %v681 = vadd.f32 %v678, 1.0
  %v682 = vrcp.pop %v679
  %v683 = vmul.f32 1.0, %v682
  %v684 = vrcp.pop %v680
  %v685 = vmul.f32 1.0, %v684
  %v686 = vrcp.pop %v681
  %v687 = vmul.f32 1.0, %v686
  %v688 = vtanh.pop %v669
  %v690 = vrot.slane %v567, 7
  %v692 = vmul.f32 %v685, %v690
  %v693 = vmul.f32 %v683, %v688
  %v694 = vadd.f32 %v692, %v693
  %v695 = vtanh.pop %v694
  %v696 = vmul.f32 %v687, %v695
  %v698 = vrot.slane %v696, 1
  %v700 = vadd.f32 %v570, %v698
  %v701 = vpack.c.bf16 %v696, %v696
  %v703 = vshrl.u32 %v701, 16
  %706 = vmatprep.subr.bf16.mxu0 %v425
  %707 = vmatpush1.bf16.msra.mxu0 %v424
  %708 = vmatprep.subr.bf16.mxu0 %v421
  %709 = vmatpush1.bf16.msra.mxu0 %v420
  %710 = vmatprep.subr.bf16.mxu0 %v417
  %711 = vmatpush1.bf16.msra.mxu0 %v416
  %712 = vmatprep.subr.bf16.mxu0 %v413
  %713 = vmatpush1.bf16.msra.mxu0 %v412
  %714 = vmatprep.subr.bf16.mxu0 %v409
  %715 = vmatpush1.bf16.msra.mxu0 %v408
  %716 = vmatprep.subr.bf16.mxu0 %v405
  %717 = vmatpush1.bf16.msra.mxu0 %v404
  %718 = vmatprep.subr.bf16.mxu0 %v401
  %719 = vmatpush1.bf16.msra.mxu0 %v400
  %720 = vmatprep.subr.bf16.mxu0 %v397
  %721 = vmatpush1.bf16.msra.mxu0 %v396
  %722 = vmatprep.subr.bf16.mxu0 0
  %723 = vmatpush2.bf16.msra.mxu0 0
  %724 = vmatprep.subr.bf16.mxu0 0
  %725 = vmatpush2.bf16.msra.mxu0 0
  %726 = vmatprep.subr.bf16.mxu0 0
  %727 = vmatpush2.bf16.msra.mxu0 0
  %728 = vmatprep.subr.bf16.mxu0 0
  %729 = vmatpush2.bf16.msra.mxu0 0
  %730 = vmatprep.subr.bf16.mxu0 0
  %731 = vmatpush2.bf16.msra.mxu0 0
  %732 = vmatprep.subr.bf16.mxu0 0
  %733 = vmatpush2.bf16.msra.mxu0 0
  %734 = vmatprep.subr.bf16.mxu0 0
  %735 = vmatpush2.bf16.msra.mxu0 0
  %736 = vmatprep.subr.bf16.mxu0 0
  %737 = vmatpush2.bf16.msra.mxu0 0
  %738 = vmatprep.mubr.bf16.mxu0 0
  %739 = vmatmul.mubr.bf16.gmra.mxu0 %v703
  %v740 = vpop.f32.mrf.mxu0
  %v741 = vadd.f32 0.0, %v740
  %v742 = vpop.f32.mrf.mxu0
  %v743 = vadd.f32 0.0, %v742
  %v744 = vpop.f32.mrf.mxu0
  %v745 = vpop.f32.mrf.mxu0
  %746 = vdwg.mxu0
  %747 = vmatprep.subr.bf16.mxu0 %v427
  %748 = vmatpush1.bf16.msra.mxu0 %v426
  %749 = vmatprep.subr.bf16.mxu0 %v423
  %750 = vmatpush1.bf16.msra.mxu0 %v422
  %751 = vmatprep.subr.bf16.mxu0 %v419
  %752 = vmatpush1.bf16.msra.mxu0 %v418
  %753 = vmatprep.subr.bf16.mxu0 %v415
  %754 = vmatpush1.bf16.msra.mxu0 %v414
  %755 = vmatprep.subr.bf16.mxu0 %v411
  %756 = vmatpush1.bf16.msra.mxu0 %v410
  %757 = vmatprep.subr.bf16.mxu0 %v407
  %758 = vmatpush1.bf16.msra.mxu0 %v406
  %759 = vmatprep.subr.bf16.mxu0 %v403
  %760 = vmatpush1.bf16.msra.mxu0 %v402
  %761 = vmatprep.subr.bf16.mxu0 %v399
  %762 = vmatpush1.bf16.msra.mxu0 %v398
  %763 = vmatprep.subr.bf16.mxu0 0
  %764 = vmatpush2.bf16.msra.mxu0 0
  %765 = vmatprep.subr.bf16.mxu0 0
  %766 = vmatpush2.bf16.msra.mxu0 0
  %767 = vmatprep.subr.bf16.mxu0 0
  %768 = vmatpush2.bf16.msra.mxu0 0
  %769 = vmatprep.subr.bf16.mxu0 0
  %770 = vmatpush2.bf16.msra.mxu0 0
  %771 = vmatprep.subr.bf16.mxu0 0
  %772 = vmatpush2.bf16.msra.mxu0 0
  %773 = vmatprep.subr.bf16.mxu0 0
  %774 = vmatpush2.bf16.msra.mxu0 0
  %775 = vmatprep.subr.bf16.mxu0 0
  %776 = vmatpush2.bf16.msra.mxu0 0
  %777 = vmatprep.subr.bf16.mxu0 0
  %778 = vmatpush2.bf16.msra.mxu0 0
  %779 = vmatprep.mubr.bf16.mxu0 0
  %780 = vmatmul.mubr.bf16.gmra.mxu0 %v703
  %v781 = vpop.f32.mrf.mxu0
  %v782 = vadd.f32 0.0, %v781
  %v783 = vpop.f32.mrf.mxu0
  %v784 = vadd.f32 0.0, %v783
  %v785 = vpop.f32.mrf.mxu0
  %v786 = vpop.f32.mrf.mxu0
  %787 = vdwg.mxu0
  %v792 = vrot.slane %v741, 6
  %v793 = vrot.slane %v743, 6
  %v794 = vrot.slane %v782, 6
  %v795 = vrot.slane %v784, 6
  %v800 = vadd.f32 %v193, %v792
  %v801 = vadd.f32 %v195, %v793
  %v802 = vadd.f32 %v264, %v794
  %v803 = vadd.f32 %v266, %v795
  %v804 = vxor.u32 %v800, 2147483648
  %v805 = vxor.u32 %v801, 2147483648
  %v806 = vxor.u32 %v802, 2147483648
  %v807 = vmul.f32 %v804, 1.442695
  %v808 = vpow.pop %v807
  %v809 = vmul.f32 %v805, 1.442695
  %v810 = vpow.pop %v809
  %v811 = vmul.f32 %v806, 1.442695
  %v812 = vpow.pop %v811
  %v813 = vadd.f32 %v808, 1.0
  %v814 = vadd.f32 %v810, 1.0
  %v815 = vadd.f32 %v812, 1.0
  %v816 = vrcp.pop %v813
  %v817 = vmul.f32 1.0, %v816
  %v818 = vrcp.pop %v814
  %v819 = vmul.f32 1.0, %v818
  %v820 = vrcp.pop %v815
  %v821 = vmul.f32 1.0, %v820
  %v822 = vtanh.pop %v803
  %v824 = vrot.slane %v694, 7
  %v826 = vmul.f32 %v819, %v824
  %v827 = vmul.f32 %v817, %v822
  %v828 = vadd.f32 %v826, %v827
  %v829 = vtanh.pop %v828
  %v830 = vmul.f32 %v821, %v829
  %v832 = vrot.slane %v830, 2
  %v834 = vadd.f32 %v700, %v832
  %v835 = vpack.c.bf16 %v830, %v830
  %v837 = vrot.slane %v835, 1
  %839 = vmatprep.subr.bf16.mxu0 %v425
  %840 = vmatpush1.bf16.msra.mxu0 %v424
  %841 = vmatprep.subr.bf16.mxu0 %v421
  %842 = vmatpush1.bf16.msra.mxu0 %v420
  %843 = vmatprep.subr.bf16.mxu0 %v417
  %844 = vmatpush1.bf16.msra.mxu0 %v416
  %845 = vmatprep.subr.bf16.mxu0 %v413
  %846 = vmatpush1.bf16.msra.mxu0 %v412
  %847 = vmatprep.subr.bf16.mxu0 %v409
  %848 = vmatpush1.bf16.msra.mxu0 %v408
  %849 = vmatprep.subr.bf16.mxu0 %v405
  %850 = vmatpush1.bf16.msra.mxu0 %v404
  %851 = vmatprep.subr.bf16.mxu0 %v401
  %852 = vmatpush1.bf16.msra.mxu0 %v400
  %853 = vmatprep.subr.bf16.mxu0 %v397
  %854 = vmatpush1.bf16.msra.mxu0 %v396
  %855 = vmatprep.subr.bf16.mxu0 0
  %856 = vmatpush2.bf16.msra.mxu0 0
  %857 = vmatprep.subr.bf16.mxu0 0
  %858 = vmatpush2.bf16.msra.mxu0 0
  %859 = vmatprep.subr.bf16.mxu0 0
  %860 = vmatpush2.bf16.msra.mxu0 0
  %861 = vmatprep.subr.bf16.mxu0 0
  %862 = vmatpush2.bf16.msra.mxu0 0
  %863 = vmatprep.subr.bf16.mxu0 0
  %864 = vmatpush2.bf16.msra.mxu0 0
  %865 = vmatprep.subr.bf16.mxu0 0
  %866 = vmatpush2.bf16.msra.mxu0 0
  %867 = vmatprep.subr.bf16.mxu0 0
  %868 = vmatpush2.bf16.msra.mxu0 0
  %869 = vmatprep.subr.bf16.mxu0 0
  %870 = vmatpush2.bf16.msra.mxu0 0
  %871 = vmatprep.mubr.bf16.mxu0 0
  %872 = vmatmul.mubr.bf16.gmra.mxu0 %v837
  %v873 = vpop.f32.mrf.mxu0
  %v874 = vadd.f32 0.0, %v873
  %v875 = vpop.f32.mrf.mxu0
  %v876 = vadd.f32 0.0, %v875
  %v877 = vpop.f32.mrf.mxu0
  %v878 = vpop.f32.mrf.mxu0
  %879 = vdwg.mxu0
  %880 = vmatprep.subr.bf16.mxu0 %v427
  %881 = vmatpush1.bf16.msra.mxu0 %v426
  %882 = vmatprep.subr.bf16.mxu0 %v423
  %883 = vmatpush1.bf16.msra.mxu0 %v422
  %884 = vmatprep.subr.bf16.mxu0 %v419
  %885 = vmatpush1.bf16.msra.mxu0 %v418
  %886 = vmatprep.subr.bf16.mxu0 %v415
  %887 = vmatpush1.bf16.msra.mxu0 %v414
  %888 = vmatprep.subr.bf16.mxu0 %v411
  %889 = vmatpush1.bf16.msra.mxu0 %v410
  %890 = vmatprep.subr.bf16.mxu0 %v407
  %891 = vmatpush1.bf16.msra.mxu0 %v406
  %892 = vmatprep.subr.bf16.mxu0 %v403
  %893 = vmatpush1.bf16.msra.mxu0 %v402
  %894 = vmatprep.subr.bf16.mxu0 %v399
  %895 = vmatpush1.bf16.msra.mxu0 %v398
  %896 = vmatprep.subr.bf16.mxu0 0
  %897 = vmatpush2.bf16.msra.mxu0 0
  %898 = vmatprep.subr.bf16.mxu0 0
  %899 = vmatpush2.bf16.msra.mxu0 0
  %900 = vmatprep.subr.bf16.mxu0 0
  %901 = vmatpush2.bf16.msra.mxu0 0
  %902 = vmatprep.subr.bf16.mxu0 0
  %903 = vmatpush2.bf16.msra.mxu0 0
  %904 = vmatprep.subr.bf16.mxu0 0
  %905 = vmatpush2.bf16.msra.mxu0 0
  %906 = vmatprep.subr.bf16.mxu0 0
  %907 = vmatpush2.bf16.msra.mxu0 0
  %908 = vmatprep.subr.bf16.mxu0 0
  %909 = vmatpush2.bf16.msra.mxu0 0
  %910 = vmatprep.subr.bf16.mxu0 0
  %911 = vmatpush2.bf16.msra.mxu0 0
  %912 = vmatprep.mubr.bf16.mxu0 0
  %913 = vmatmul.mubr.bf16.gmra.mxu0 %v837
  %v914 = vpop.f32.mrf.mxu0
  %v915 = vadd.f32 0.0, %v914
  %v916 = vpop.f32.mrf.mxu0
  %v917 = vadd.f32 0.0, %v916
  %v918 = vpop.f32.mrf.mxu0
  %v919 = vpop.f32.mrf.mxu0
  %920 = vdwg.mxu0
  %v925 = vrot.slane %v874, 5
  %v926 = vrot.slane %v876, 5
  %v927 = vrot.slane %v915, 5
  %v928 = vrot.slane %v917, 5
  %v933 = vadd.f32 %v193, %v925
  %v934 = vadd.f32 %v195, %v926
  %v935 = vadd.f32 %v264, %v927
  %v936 = vadd.f32 %v266, %v928
  %v937 = vxor.u32 %v933, 2147483648
  %v938 = vxor.u32 %v934, 2147483648
  %v939 = vxor.u32 %v935, 2147483648
  %v940 = vmul.f32 %v937, 1.442695
  %v941 = vpow.pop %v940
  %v942 = vmul.f32 %v938, 1.442695
  %v943 = vpow.pop %v942
  %v944 = vmul.f32 %v939, 1.442695
  %v945 = vpow.pop %v944
  %v946 = vadd.f32 %v941, 1.0
  %v947 = vadd.f32 %v943, 1.0
  %v948 = vadd.f32 %v945, 1.0
  %v949 = vrcp.pop %v946
  %v950 = vmul.f32 1.0, %v949
  %v951 = vrcp.pop %v947
  %v952 = vmul.f32 1.0, %v951
  %v953 = vrcp.pop %v948
  %v954 = vmul.f32 1.0, %v953
  %v955 = vtanh.pop %v936
  %v957 = vrot.slane %v828, 7
  %v959 = vmul.f32 %v952, %v957
  %v960 = vmul.f32 %v950, %v955
  %v961 = vadd.f32 %v959, %v960
  %v962 = vtanh.pop %v961
  %v963 = vmul.f32 %v954, %v962
  %v965 = vrot.slane %v963, 3
  %v967 = vadd.f32 %v834, %v965
  %v968 = vpack.c.bf16 %v963, %v963
  %v970 = vshrl.u32 %v968, 16
  %v972 = vrot.slane %v970, 1
  %974 = vmatprep.subr.bf16.mxu0 %v425
  %975 = vmatpush1.bf16.msra.mxu0 %v424
  %976 = vmatprep.subr.bf16.mxu0 %v421
  %977 = vmatpush1.bf16.msra.mxu0 %v420
  %978 = vmatprep.subr.bf16.mxu0 %v417
  %979 = vmatpush1.bf16.msra.mxu0 %v416
  %980 = vmatprep.subr.bf16.mxu0 %v413
  %981 = vmatpush1.bf16.msra.mxu0 %v412
  %982 = vmatprep.subr.bf16.mxu0 %v409
  %983 = vmatpush1.bf16.msra.mxu0 %v408
  %984 = vmatprep.subr.bf16.mxu0 %v405
  %985 = vmatpush1.bf16.msra.mxu0 %v404
  %986 = vmatprep.subr.bf16.mxu0 %v401
  %987 = vmatpush1.bf16.msra.mxu0 %v400
  %988 = vmatprep.subr.bf16.mxu0 %v397
  %989 = vmatpush1.bf16.msra.mxu0 %v396
  %990 = vmatprep.subr.bf16.mxu0 0
  %991 = vmatpush2.bf16.msra.mxu0 0
  %992 = vmatprep.subr.bf16.mxu0 0
  %993 = vmatpush2.bf16.msra.mxu0 0
  %994 = vmatprep.subr.bf16.mxu0 0
  %995 = vmatpush2.bf16.msra.mxu0 0
  %996 = vmatprep.subr.bf16.mxu0 0
  %997 = vmatpush2.bf16.msra.mxu0 0
  %998 = vmatprep.subr.bf16.mxu0 0
  %999 = vmatpush2.bf16.msra.mxu0 0
  %1000 = vmatprep.subr.bf16.mxu0 0
  %1001 = vmatpush2.bf16.msra.mxu0 0
  %1002 = vmatprep.subr.bf16.mxu0 0
  %1003 = vmatpush2.bf16.msra.mxu0 0
  %1004 = vmatprep.subr.bf16.mxu0 0
  %1005 = vmatpush2.bf16.msra.mxu0 0
  %1006 = vmatprep.mubr.bf16.mxu0 0
  %1007 = vmatmul.mubr.bf16.gmra.mxu0 %v972
  %v1008 = vpop.f32.mrf.mxu0
  %v1009 = vadd.f32 0.0, %v1008
  %v1010 = vpop.f32.mrf.mxu0
  %v1011 = vadd.f32 0.0, %v1010
  %v1012 = vpop.f32.mrf.mxu0
  %v1013 = vpop.f32.mrf.mxu0
  %1014 = vdwg.mxu0
  %1015 = vmatprep.subr.bf16.mxu0 %v427
  %1016 = vmatpush1.bf16.msra.mxu0 %v426
  %1017 = vmatprep.subr.bf16.mxu0 %v423
  %1018 = vmatpush1.bf16.msra.mxu0 %v422
  %1019 = vmatprep.subr.bf16.mxu0 %v419
  %1020 = vmatpush1.bf16.msra.mxu0 %v418
  %1021 = vmatprep.subr.bf16.mxu0 %v415
  %1022 = vmatpush1.bf16.msra.mxu0 %v414
  %1023 = vmatprep.subr.bf16.mxu0 %v411
  %1024 = vmatpush1.bf16.msra.mxu0 %v410
  %1025 = vmatprep.subr.bf16.mxu0 %v407
  %1026 = vmatpush1.bf16.msra.mxu0 %v406
  %1027 = vmatprep.subr.bf16.mxu0 %v403
  %1028 = vmatpush1.bf16.msra.mxu0 %v402
  %1029 = vmatprep.subr.bf16.mxu0 %v399
  %1030 = vmatpush1.bf16.msra.mxu0 %v398
  %1031 = vmatprep.subr.bf16.mxu0 0
  %1032 = vmatpush2.bf16.msra.mxu0 0
  %1033 = vmatprep.subr.bf16.mxu0 0
  %1034 = vmatpush2.bf16.msra.mxu0 0
  %1035 = vmatprep.subr.bf16.mxu0 0
  %1036 = vmatpush2.bf16.msra.mxu0 0
  %1037 = vmatprep.subr.bf16.mxu0 0
  %1038 = vmatpush2.bf16.msra.mxu0 0
  %1039 = vmatprep.subr.bf16.mxu0 0
  %1040 = vmatpush2.bf16.msra.mxu0 0
  %1041 = vmatprep.subr.bf16.mxu0 0
  %1042 = vmatpush2.bf16.msra.mxu0 0
  %1043 = vmatprep.subr.bf16.mxu0 0
  %1044 = vmatpush2.bf16.msra.mxu0 0
  %1045 = vmatprep.subr.bf16.mxu0 0
  %1046 = vmatpush2.bf16.msra.mxu0 0
  %1047 = vmatprep.mubr.bf16.mxu0 0
  %1048 = vmatmul.mubr.bf16.gmra.mxu0 %v972
  %v1049 = vpop.f32.mrf.mxu0
  %v1050 = vadd.f32 0.0, %v1049
  %v1051 = vpop.f32.mrf.mxu0
  %v1052 = vadd.f32 0.0, %v1051
  %v1053 = vpop.f32.mrf.mxu0
  %v1054 = vpop.f32.mrf.mxu0
  %1055 = vdwg.mxu0
  %v1060 = vrot.slane %v1009, 4
  %v1061 = vrot.slane %v1011, 4
  %v1062 = vrot.slane %v1050, 4
  %v1063 = vrot.slane %v1052, 4
  %v1068 = vadd.f32 %v193, %v1060
  %v1069 = vadd.f32 %v195, %v1061
  %v1070 = vadd.f32 %v264, %v1062
  %v1071 = vadd.f32 %v266, %v1063
  %v1072 = vxor.u32 %v1068, 2147483648
  %v1073 = vxor.u32 %v1069, 2147483648
  %v1074 = vxor.u32 %v1070, 2147483648
  %v1075 = vmul.f32 %v1072, 1.442695
  %v1076 = vpow.pop %v1075
  %v1077 = vmul.f32 %v1073, 1.442695
  %v1078 = vpow.pop %v1077
  %v1079 = vmul.f32 %v1074, 1.442695
  %v1080 = vpow.pop %v1079
  %v1081 = vadd.f32 %v1076, 1.0
  %v1082 = vadd.f32 %v1078, 1.0
  %v1083 = vadd.f32 %v1080, 1.0
  %v1084 = vrcp.pop %v1081
  %v1085 = vmul.f32 1.0, %v1084
  %v1086 = vrcp.pop %v1082
  %v1087 = vmul.f32 1.0, %v1086
  %v1088 = vrcp.pop %v1083
  %v1089 = vmul.f32 1.0, %v1088
  %v1090 = vtanh.pop %v1071
  %v1092 = vrot.slane %v961, 7
  %v1094 = vmul.f32 %v1087, %v1092
  %v1095 = vmul.f32 %v1085, %v1090
  %v1096 = vadd.f32 %v1094, %v1095
  %v1097 = vtanh.pop %v1096
  %v1098 = vmul.f32 %v1089, %v1097
  %v1100 = vrot.slane %v1098, 4
  %v1102 = vadd.f32 %v967, %v1100
  %v1103 = vpack.c.bf16 %v1098, %v1098
  %v1105 = vrot.slane %v1103, 2
  %1107 = vmatprep.subr.bf16.mxu0 %v425
  %1108 = vmatpush1.bf16.msra.mxu0 %v424
  %1109 = vmatprep.subr.bf16.mxu0 %v421
  %1110 = vmatpush1.bf16.msra.mxu0 %v420
  %1111 = vmatprep.subr.bf16.mxu0 %v417
  %1112 = vmatpush1.bf16.msra.mxu0 %v416
  %1113 = vmatprep.subr.bf16.mxu0 %v413
  %1114 = vmatpush1.bf16.msra.mxu0 %v412
  %1115 = vmatprep.subr.bf16.mxu0 %v409
  %1116 = vmatpush1.bf16.msra.mxu0 %v408
  %1117 = vmatprep.subr.bf16.mxu0 %v405
  %1118 = vmatpush1.bf16.msra.mxu0 %v404
  %1119 = vmatprep.subr.bf16.mxu0 %v401
  %1120 = vmatpush1.bf16.msra.mxu0 %v400
  %1121 = vmatprep.subr.bf16.mxu0 %v397
  %1122 = vmatpush1.bf16.msra.mxu0 %v396
  %1123 = vmatprep.subr.bf16.mxu0 0
  %1124 = vmatpush2.bf16.msra.mxu0 0
  %1125 = vmatprep.subr.bf16.mxu0 0
  %1126 = vmatpush2.bf16.msra.mxu0 0
  %1127 = vmatprep.subr.bf16.mxu0 0
  %1128 = vmatpush2.bf16.msra.mxu0 0
  %1129 = vmatprep.subr.bf16.mxu0 0
  %1130 = vmatpush2.bf16.msra.mxu0 0
  %1131 = vmatprep.subr.bf16.mxu0 0
  %1132 = vmatpush2.bf16.msra.mxu0 0
  %1133 = vmatprep.subr.bf16.mxu0 0
  %1134 = vmatpush2.bf16.msra.mxu0 0
  %1135 = vmatprep.subr.bf16.mxu0 0
  %1136 = vmatpush2.bf16.msra.mxu0 0
  %1137 = vmatprep.subr.bf16.mxu0 0
  %1138 = vmatpush2.bf16.msra.mxu0 0
  %1139 = vmatprep.mubr.bf16.mxu0 0
  %1140 = vmatmul.mubr.bf16.gmra.mxu0 %v1105
  %v1141 = vpop.f32.mrf.mxu0
  %v1142 = vadd.f32 0.0, %v1141
  %v1143 = vpop.f32.mrf.mxu0
  %v1144 = vadd.f32 0.0, %v1143
  %v1145 = vpop.f32.mrf.mxu0
  %v1146 = vpop.f32.mrf.mxu0
  %1147 = vdwg.mxu0
  %1148 = vmatprep.subr.bf16.mxu0 %v427
  %1149 = vmatpush1.bf16.msra.mxu0 %v426
  %1150 = vmatprep.subr.bf16.mxu0 %v423
  %1151 = vmatpush1.bf16.msra.mxu0 %v422
  %1152 = vmatprep.subr.bf16.mxu0 %v419
  %1153 = vmatpush1.bf16.msra.mxu0 %v418
  %1154 = vmatprep.subr.bf16.mxu0 %v415
  %1155 = vmatpush1.bf16.msra.mxu0 %v414
  %1156 = vmatprep.subr.bf16.mxu0 %v411
  %1157 = vmatpush1.bf16.msra.mxu0 %v410
  %1158 = vmatprep.subr.bf16.mxu0 %v407
  %1159 = vmatpush1.bf16.msra.mxu0 %v406
  %1160 = vmatprep.subr.bf16.mxu0 %v403
  %1161 = vmatpush1.bf16.msra.mxu0 %v402
  %1162 = vmatprep.subr.bf16.mxu0 %v399
  %1163 = vmatpush1.bf16.msra.mxu0 %v398
  %1164 = vmatprep.subr.bf16.mxu0 0
  %1165 = vmatpush2.bf16.msra.mxu0 0
  %1166 = vmatprep.subr.bf16.mxu0 0
  %1167 = vmatpush2.bf16.msra.mxu0 0
  %1168 = vmatprep.subr.bf16.mxu0 0
  %1169 = vmatpush2.bf16.msra.mxu0 0
  %1170 = vmatprep.subr.bf16.mxu0 0
  %1171 = vmatpush2.bf16.msra.mxu0 0
  %1172 = vmatprep.subr.bf16.mxu0 0
  %1173 = vmatpush2.bf16.msra.mxu0 0
  %1174 = vmatprep.subr.bf16.mxu0 0
  %1175 = vmatpush2.bf16.msra.mxu0 0
  %1176 = vmatprep.subr.bf16.mxu0 0
  %1177 = vmatpush2.bf16.msra.mxu0 0
  %1178 = vmatprep.subr.bf16.mxu0 0
  %1179 = vmatpush2.bf16.msra.mxu0 0
  %1180 = vmatprep.mubr.bf16.mxu0 0
  %1181 = vmatmul.mubr.bf16.gmra.mxu0 %v1105
  %v1182 = vpop.f32.mrf.mxu0
  %v1183 = vadd.f32 0.0, %v1182
  %v1184 = vpop.f32.mrf.mxu0
  %v1185 = vadd.f32 0.0, %v1184
  %v1186 = vpop.f32.mrf.mxu0
  %v1187 = vpop.f32.mrf.mxu0
  %1188 = vdwg.mxu0
  %v1193 = vrot.slane %v1142, 3
  %v1194 = vrot.slane %v1144, 3
  %v1195 = vrot.slane %v1183, 3
  %v1196 = vrot.slane %v1185, 3
  %v1201 = vadd.f32 %v193, %v1193
  %v1202 = vadd.f32 %v195, %v1194
  %v1203 = vadd.f32 %v264, %v1195
  %v1204 = vadd.f32 %v266, %v1196
  %v1205 = vxor.u32 %v1201, 2147483648
  %v1206 = vxor.u32 %v1202, 2147483648
  %v1207 = vxor.u32 %v1203, 2147483648
  %v1208 = vmul.f32 %v1205, 1.442695
  %v1209 = vpow.pop %v1208
  %v1210 = vmul.f32 %v1206, 1.442695
  %v1211 = vpow.pop %v1210
  %v1212 = vmul.f32 %v1207, 1.442695
  %v1213 = vpow.pop %v1212
  %v1214 = vadd.f32 %v1209, 1.0
  %v1215 = vadd.f32 %v1211, 1.0
  %v1216 = vadd.f32 %v1213, 1.0
  %v1217 = vrcp.pop %v1214
  %v1218 = vmul.f32 1.0, %v1217
  %v1219 = vrcp.pop %v1215
  %v1220 = vmul.f32 1.0, %v1219
  %v1221 = vrcp.pop %v1216
  %v1222 = vmul.f32 1.0, %v1221
  %v1223 = vtanh.pop %v1204
  %v1225 = vrot.slane %v1096, 7
  %v1227 = vmul.f32 %v1220, %v1225
  %v1228 = vmul.f32 %v1218, %v1223
  %v1229 = vadd.f32 %v1227, %v1228
  %v1230 = vtanh.pop %v1229
  %v1231 = vmul.f32 %v1222, %v1230
  %v1233 = vrot.slane %v1231, 5
  %v1235 = vadd.f32 %v1102, %v1233
  %v1236 = vpack.c.bf16 %v1231, %v1231
  %v1238 = vshrl.u32 %v1236, 16
  %v1240 = vrot.slane %v1238, 2
  %1242 = vmatprep.subr.bf16.mxu0 %v425
  %1243 = vmatpush1.bf16.msra.mxu0 %v424
  %1244 = vmatprep.subr.bf16.mxu0 %v421
  %1245 = vmatpush1.bf16.msra.mxu0 %v420
  %1246 = vmatprep.subr.bf16.mxu0 %v417
  %1247 = vmatpush1.bf16.msra.mxu0 %v416
  %1248 = vmatprep.subr.bf16.mxu0 %v413
  %1249 = vmatpush1.bf16.msra.mxu0 %v412
  %1250 = vmatprep.subr.bf16.mxu0 %v409
  %1251 = vmatpush1.bf16.msra.mxu0 %v408
  %1252 = vmatprep.subr.bf16.mxu0 %v405
  %1253 = vmatpush1.bf16.msra.mxu0 %v404
  %1254 = vmatprep.subr.bf16.mxu0 %v401
  %1255 = vmatpush1.bf16.msra.mxu0 %v400
  %1256 = vmatprep.subr.bf16.mxu0 %v397
  %1257 = vmatpush1.bf16.msra.mxu0 %v396
  %1258 = vmatprep.subr.bf16.mxu0 0
  %1259 = vmatpush2.bf16.msra.mxu0 0
  %1260 = vmatprep.subr.bf16.mxu0 0
  %1261 = vmatpush2.bf16.msra.mxu0 0
  %1262 = vmatprep.subr.bf16.mxu0 0
  %1263 = vmatpush2.bf16.msra.mxu0 0
  %1264 = vmatprep.subr.bf16.mxu0 0
  %1265 = vmatpush2.bf16.msra.mxu0 0
  %1266 = vmatprep.subr.bf16.mxu0 0
  %1267 = vmatpush2.bf16.msra.mxu0 0
  %1268 = vmatprep.subr.bf16.mxu0 0
  %1269 = vmatpush2.bf16.msra.mxu0 0
  %1270 = vmatprep.subr.bf16.mxu0 0
  %1271 = vmatpush2.bf16.msra.mxu0 0
  %1272 = vmatprep.subr.bf16.mxu0 0
  %1273 = vmatpush2.bf16.msra.mxu0 0
  %1274 = vmatprep.mubr.bf16.mxu0 0
  %1275 = vmatmul.mubr.bf16.gmra.mxu0 %v1240
  %v1276 = vpop.f32.mrf.mxu0
  %v1277 = vadd.f32 0.0, %v1276
  %v1278 = vpop.f32.mrf.mxu0
  %v1279 = vadd.f32 0.0, %v1278
  %v1280 = vpop.f32.mrf.mxu0
  %v1281 = vpop.f32.mrf.mxu0
  %1282 = vdwg.mxu0
  %1283 = vmatprep.subr.bf16.mxu0 %v427
  %1284 = vmatpush1.bf16.msra.mxu0 %v426
  %1285 = vmatprep.subr.bf16.mxu0 %v423
  %1286 = vmatpush1.bf16.msra.mxu0 %v422
  %1287 = vmatprep.subr.bf16.mxu0 %v419
  %1288 = vmatpush1.bf16.msra.mxu0 %v418
  %1289 = vmatprep.subr.bf16.mxu0 %v415
  %1290 = vmatpush1.bf16.msra.mxu0 %v414
  %1291 = vmatprep.subr.bf16.mxu0 %v411
  %1292 = vmatpush1.bf16.msra.mxu0 %v410
  %1293 = vmatprep.subr.bf16.mxu0 %v407
  %1294 = vmatpush1.bf16.msra.mxu0 %v406
  %1295 = vmatprep.subr.bf16.mxu0 %v403
  %1296 = vmatpush1.bf16.msra.mxu0 %v402
  %1297 = vmatprep.subr.bf16.mxu0 %v399
  %1298 = vmatpush1.bf16.msra.mxu0 %v398
  %1299 = vmatprep.subr.bf16.mxu0 0
  %1300 = vmatpush2.bf16.msra.mxu0 0
  %1301 = vmatprep.subr.bf16.mxu0 0
  %1302 = vmatpush2.bf16.msra.mxu0 0
  %1303 = vmatprep.subr.bf16.mxu0 0
  %1304 = vmatpush2.bf16.msra.mxu0 0
  %1305 = vmatprep.subr.bf16.mxu0 0
  %1306 = vmatpush2.bf16.msra.mxu0 0
  %1307 = vmatprep.subr.bf16.mxu0 0
  %1308 = vmatpush2.bf16.msra.mxu0 0
  %1309 = vmatprep.subr.bf16.mxu0 0
  %1310 = vmatpush2.bf16.msra.mxu0 0
  %1311 = vmatprep.subr.bf16.mxu0 0
  %1312 = vmatpush2.bf16.msra.mxu0 0
  %1313 = vmatprep.subr.bf16.mxu0 0
  %1314 = vmatpush2.bf16.msra.mxu0 0
  %1315 = vmatprep.mubr.bf16.mxu0 0
  %1316 = vmatmul.mubr.bf16.gmra.mxu0 %v1240
  %v1317 = vpop.f32.mrf.mxu0
  %v1318 = vadd.f32 0.0, %v1317
  %v1319 = vpop.f32.mrf.mxu0
  %v1320 = vadd.f32 0.0, %v1319
  %v1321 = vpop.f32.mrf.mxu0
  %v1322 = vpop.f32.mrf.mxu0
  %1323 = vdwg.mxu0
  %v1328 = vrot.slane %v1277, 2
  %v1329 = vrot.slane %v1279, 2
  %v1330 = vrot.slane %v1318, 2
  %v1331 = vrot.slane %v1320, 2
  %v1336 = vadd.f32 %v193, %v1328
  %v1337 = vadd.f32 %v195, %v1329
  %v1338 = vadd.f32 %v264, %v1330
  %v1339 = vadd.f32 %v266, %v1331
  %v1340 = vxor.u32 %v1336, 2147483648
  %v1341 = vxor.u32 %v1337, 2147483648
  %v1342 = vxor.u32 %v1338, 2147483648
  %v1343 = vmul.f32 %v1340, 1.442695
  %v1344 = vpow.pop %v1343
  %v1345 = vmul.f32 %v1341, 1.442695
  %v1346 = vpow.pop %v1345
  %v1347 = vmul.f32 %v1342, 1.442695
  %v1348 = vpow.pop %v1347
  %v1349 = vadd.f32 %v1344, 1.0
  %v1350 = vadd.f32 %v1346, 1.0
  %v1351 = vadd.f32 %v1348, 1.0
  %v1352 = vrcp.pop %v1349
  %v1353 = vmul.f32 1.0, %v1352
  %v1354 = vrcp.pop %v1350
  %v1355 = vmul.f32 1.0, %v1354
  %v1356 = vrcp.pop %v1351
  %v1357 = vmul.f32 1.0, %v1356
  %v1358 = vtanh.pop %v1339
  %v1360 = vrot.slane %v1229, 7
  %v1362 = vmul.f32 %v1355, %v1360
  %v1363 = vmul.f32 %v1353, %v1358
  %v1364 = vadd.f32 %v1362, %v1363
  %v1365 = vtanh.pop %v1364
  %v1366 = vmul.f32 %v1357, %v1365
  %v1368 = vrot.slane %v1366, 6
  %v1370 = vadd.f32 %v1235, %v1368
  %v1371 = vpack.c.bf16 %v1366, %v1366
  %v1373 = vrot.slane %v1371, 3
  %1375 = vmatprep.subr.bf16.mxu0 %v425
  %1376 = vmatpush1.bf16.msra.mxu0 %v424
  %1377 = vmatprep.subr.bf16.mxu0 %v421
  %1378 = vmatpush1.bf16.msra.mxu0 %v420
  %1379 = vmatprep.subr.bf16.mxu0 %v417
  %1380 = vmatpush1.bf16.msra.mxu0 %v416
  %1381 = vmatprep.subr.bf16.mxu0 %v413
  %1382 = vmatpush1.bf16.msra.mxu0 %v412
  %1383 = vmatprep.subr.bf16.mxu0 %v409
  %1384 = vmatpush1.bf16.msra.mxu0 %v408
  %1385 = vmatprep.subr.bf16.mxu0 %v405
  %1386 = vmatpush1.bf16.msra.mxu0 %v404
  %1387 = vmatprep.subr.bf16.mxu0 %v401
  %1388 = vmatpush1.bf16.msra.mxu0 %v400
  %1389 = vmatprep.subr.bf16.mxu0 %v397
  %1390 = vmatpush1.bf16.msra.mxu0 %v396
  %1391 = vmatprep.subr.bf16.mxu0 0
  %1392 = vmatpush2.bf16.msra.mxu0 0
  %1393 = vmatprep.subr.bf16.mxu0 0
  %1394 = vmatpush2.bf16.msra.mxu0 0
  %1395 = vmatprep.subr.bf16.mxu0 0
  %1396 = vmatpush2.bf16.msra.mxu0 0
  %1397 = vmatprep.subr.bf16.mxu0 0
  %1398 = vmatpush2.bf16.msra.mxu0 0
  %1399 = vmatprep.subr.bf16.mxu0 0
  %1400 = vmatpush2.bf16.msra.mxu0 0
  %1401 = vmatprep.subr.bf16.mxu0 0
  %1402 = vmatpush2.bf16.msra.mxu0 0
  %1403 = vmatprep.subr.bf16.mxu0 0
  %1404 = vmatpush2.bf16.msra.mxu0 0
  %1405 = vmatprep.subr.bf16.mxu0 0
  %1406 = vmatpush2.bf16.msra.mxu0 0
  %1407 = vmatprep.mubr.bf16.mxu0 0
  %1408 = vmatmul.mubr.bf16.gmra.mxu0 %v1373
  %v1409 = vpop.f32.mrf.mxu0
  %v1410 = vadd.f32 0.0, %v1409
  %v1411 = vpop.f32.mrf.mxu0
  %v1412 = vadd.f32 0.0, %v1411
  %v1413 = vpop.f32.mrf.mxu0
  %v1414 = vpop.f32.mrf.mxu0
  %1415 = vdwg.mxu0
  %1416 = vmatprep.subr.bf16.mxu0 %v427
  %1417 = vmatpush1.bf16.msra.mxu0 %v426
  %1418 = vmatprep.subr.bf16.mxu0 %v423
  %1419 = vmatpush1.bf16.msra.mxu0 %v422
  %1420 = vmatprep.subr.bf16.mxu0 %v419
  %1421 = vmatpush1.bf16.msra.mxu0 %v418
  %1422 = vmatprep.subr.bf16.mxu0 %v415
  %1423 = vmatpush1.bf16.msra.mxu0 %v414
  %1424 = vmatprep.subr.bf16.mxu0 %v411
  %1425 = vmatpush1.bf16.msra.mxu0 %v410
  %1426 = vmatprep.subr.bf16.mxu0 %v407
  %1427 = vmatpush1.bf16.msra.mxu0 %v406
  %1428 = vmatprep.subr.bf16.mxu0 %v403
  %1429 = vmatpush1.bf16.msra.mxu0 %v402
  %1430 = vmatprep.subr.bf16.mxu0 %v399
  %1431 = vmatpush1.bf16.msra.mxu0 %v398
  %1432 = vmatprep.subr.bf16.mxu0 0
  %1433 = vmatpush2.bf16.msra.mxu0 0
  %1434 = vmatprep.subr.bf16.mxu0 0
  %1435 = vmatpush2.bf16.msra.mxu0 0
  %1436 = vmatprep.subr.bf16.mxu0 0
  %1437 = vmatpush2.bf16.msra.mxu0 0
  %1438 = vmatprep.subr.bf16.mxu0 0
  %1439 = vmatpush2.bf16.msra.mxu0 0
  %1440 = vmatprep.subr.bf16.mxu0 0
  %1441 = vmatpush2.bf16.msra.mxu0 0
  %1442 = vmatprep.subr.bf16.mxu0 0
  %1443 = vmatpush2.bf16.msra.mxu0 0
  %1444 = vmatprep.subr.bf16.mxu0 0
  %1445 = vmatpush2.bf16.msra.mxu0 0
  %1446 = vmatprep.subr.bf16.mxu0 0
  %1447 = vmatpush2.bf16.msra.mxu0 0
  %1448 = vmatprep.mubr.bf16.mxu0 0
  %1449 = vmatmul.mubr.bf16.gmra.mxu0 %v1373
  %v1450 = vpop.f32.mrf.mxu0
  %v1451 = vadd.f32 0.0, %v1450
  %v1452 = vpop.f32.mrf.mxu0
  %v1453 = vadd.f32 0.0, %v1452
  %v1454 = vpop.f32.mrf.mxu0
  %v1455 = vpop.f32.mrf.mxu0
  %1456 = vdwg.mxu0
  %v1461 = vrot.slane %v1410, 1
  %v1462 = vrot.slane %v1412, 1
  %v1463 = vrot.slane %v1451, 1
  %v1464 = vrot.slane %v1453, 1
  %v1469 = vadd.f32 %v193, %v1461
  %v1470 = vadd.f32 %v195, %v1462
  %v1471 = vadd.f32 %v264, %v1463
  %v1472 = vadd.f32 %v266, %v1464
  %v1473 = vxor.u32 %v1469, 2147483648
  %v1474 = vxor.u32 %v1470, 2147483648
  %v1475 = vxor.u32 %v1471, 2147483648
  %v1476 = vmul.f32 %v1473, 1.442695
  %v1477 = vpow.pop %v1476
  %v1478 = vmul.f32 %v1474, 1.442695
  %v1479 = vpow.pop %v1478
  %v1480 = vmul.f32 %v1475, 1.442695
  %v1481 = vpow.pop %v1480
  %v1482 = vadd.f32 %v1477, 1.0
  %v1483 = vadd.f32 %v1479, 1.0
  %v1484 = vadd.f32 %v1481, 1.0
  %v1485 = vrcp.pop %v1482
  %v1486 = vmul.f32 1.0, %v1485
  %v1487 = vrcp.pop %v1483
  %v1488 = vmul.f32 1.0, %v1487
  %v1489 = vrcp.pop %v1484
  %v1490 = vmul.f32 1.0, %v1489
  %v1491 = vtanh.pop %v1472
  %v1493 = vrot.slane %v1364, 7
  %v1495 = vmul.f32 %v1488, %v1493
  %v1496 = vmul.f32 %v1486, %v1491
  %v1497 = vadd.f32 %v1495, %v1496
  %v1498 = vtanh.pop %v1497
  %v1499 = vmul.f32 %v1490, %v1498
  %v1501 = vrot.slane %v1499, 7
  %v1503 = vadd.f32 %v1370, %v1501
  %v1504 = vld [vmem:[%s1] sm:$0xff]
  %v1505 = vmax.f32 %v1504, 0.0
  %v1506 = vld [vmem:[%s6] sm:$0xff]
  %v1507 = vld [vmem:[%s6 + $0x8] sm:$0xff]
  %v1508 = vld [vmem:[%s6 + $0x10] sm:$0xff]
  %v1509 = vld [vmem:[%s6 + $0x18] sm:$0xff]
  %v1510 = vld [vmem:[%s6 + $0x20] sm:$0xff]
  %v1511 = vld [vmem:[%s6 + $0x28] sm:$0xff]
  %v1512 = vld [vmem:[%s6 + $0x30] sm:$0xff]
  %v1513 = vld [vmem:[%s6 + $0x38] sm:$0xff]
  %v1514 = vld [vmem:[%s6 + $0x40] sm:$0xff]
  %v1515 = vld [vmem:[%s6 + $0x48] sm:$0xff]
  %v1516 = vld [vmem:[%s6 + $0x50] sm:$0xff]
  %v1517 = vld [vmem:[%s6 + $0x58] sm:$0xff]
  %v1518 = vld [vmem:[%s6 + $0x60] sm:$0xff]
  %v1519 = vld [vmem:[%s6 + $0x68] sm:$0xff]
  %v1520 = vld [vmem:[%s6 + $0x70] sm:$0xff]
  %v1521 = vld [vmem:[%s6 + $0x78] sm:$0xff]
  %v1522 = vld [vmem:[%s6 + $0x80] sm:$0xff]
  %v1523 = vld [vmem:[%s6 + $0x88] sm:$0xff]
  %v1524 = vld [vmem:[%s6 + $0x90] sm:$0xff]
  %v1525 = vld [vmem:[%s6 + $0x98] sm:$0xff]
  %v1526 = vld [vmem:[%s6 + $0xa0] sm:$0xff]
  %v1527 = vld [vmem:[%s6 + $0xa8] sm:$0xff]
  %v1528 = vld [vmem:[%s6 + $0xb0] sm:$0xff]
  %v1529 = vld [vmem:[%s6 + $0xb8] sm:$0xff]
  %v1530 = vld [vmem:[%s6 + $0xc0] sm:$0xff]
  %v1531 = vld [vmem:[%s6 + $0xc8] sm:$0xff]
  %v1532 = vld [vmem:[%s6 + $0xd0] sm:$0xff]
  %v1533 = vld [vmem:[%s6 + $0xd8] sm:$0xff]
  %v1534 = vld [vmem:[%s6 + $0xe0] sm:$0xff]
  %v1535 = vld [vmem:[%s6 + $0xe8] sm:$0xff]
  %v1536 = vld [vmem:[%s6 + $0xf0] sm:$0xff]
  %v1537 = vld [vmem:[%s6 + $0xf8] sm:$0xff]
  %v1538 = vld [vmem:[%s6 + $0x100] sm:$0xff]
  %v1539 = vld [vmem:[%s6 + $0x108] sm:$0xff]
  %v1540 = vld [vmem:[%s6 + $0x110] sm:$0xff]
  %v1541 = vld [vmem:[%s6 + $0x118] sm:$0xff]
  %v1542 = vld [vmem:[%s6 + $0x120] sm:$0xff]
  %v1543 = vld [vmem:[%s6 + $0x128] sm:$0xff]
  %v1544 = vld [vmem:[%s6 + $0x130] sm:$0xff]
  %v1545 = vld [vmem:[%s6 + $0x138] sm:$0xff]
  %v1546 = vld [vmem:[%s6 + $0x140] sm:$0xff]
  %v1547 = vld [vmem:[%s6 + $0x148] sm:$0xff]
  %v1548 = vld [vmem:[%s6 + $0x150] sm:$0xff]
  %v1549 = vld [vmem:[%s6 + $0x158] sm:$0xff]
  %v1550 = vld [vmem:[%s6 + $0x160] sm:$0xff]
  %v1551 = vld [vmem:[%s6 + $0x168] sm:$0xff]
  %v1552 = vld [vmem:[%s6 + $0x170] sm:$0xff]
  %v1553 = vld [vmem:[%s6 + $0x178] sm:$0xff]
  %v1554 = vld [vmem:[%s6 + $0x180] sm:$0xff]
  %v1555 = vld [vmem:[%s6 + $0x188] sm:$0xff]
  %v1556 = vld [vmem:[%s6 + $0x190] sm:$0xff]
  %v1557 = vld [vmem:[%s6 + $0x198] sm:$0xff]
  %v1558 = vld [vmem:[%s6 + $0x1a0] sm:$0xff]
  %v1559 = vld [vmem:[%s6 + $0x1a8] sm:$0xff]
  %v1560 = vld [vmem:[%s6 + $0x1b0] sm:$0xff]
  %v1561 = vld [vmem:[%s6 + $0x1b8] sm:$0xff]
  %v1562 = vld [vmem:[%s6 + $0x1c0] sm:$0xff]
  %v1563 = vld [vmem:[%s6 + $0x1c8] sm:$0xff]
  %v1564 = vld [vmem:[%s6 + $0x1d0] sm:$0xff]
  %v1565 = vld [vmem:[%s6 + $0x1d8] sm:$0xff]
  %v1566 = vld [vmem:[%s6 + $0x1e0] sm:$0xff]
  %v1567 = vld [vmem:[%s6 + $0x1e8] sm:$0xff]
  %v1568 = vld [vmem:[%s6 + $0x1f0] sm:$0xff]
  %v1569 = vld [vmem:[%s6 + $0x1f8] sm:$0xff]
  %1570 = vmatprep.subr.mxu0 %v1567
  %1571 = vmatpush1.msra.mxu0 %v1566
  %1572 = vmatprep.subr.mxu0 %v1563
  %1573 = vmatpush1.msra.mxu0 %v1562
  %1574 = vmatprep.subr.mxu0 %v1559
  %1575 = vmatpush1.msra.mxu0 %v1558
  %1576 = vmatprep.subr.mxu0 %v1555
  %1577 = vmatpush1.msra.mxu0 %v1554
  %1578 = vmatprep.subr.mxu0 %v1551
  %1579 = vmatpush1.msra.mxu0 %v1550
  %1580 = vmatprep.subr.mxu0 %v1547
  %1581 = vmatpush1.msra.mxu0 %v1546
  %1582 = vmatprep.subr.mxu0 %v1543
  %1583 = vmatpush1.msra.mxu0 %v1542
  %1584 = vmatprep.subr.mxu0 %v1539
  %1585 = vmatpush1.msra.mxu0 %v1538
  %1586 = vmatprep.subr.mxu0 %v1535
  %1587 = vmatpush1.msra.mxu0 %v1534
  %1588 = vmatprep.subr.mxu0 %v1531
  %1589 = vmatpush1.msra.mxu0 %v1530
  %1590 = vmatprep.subr.mxu0 %v1527
  %1591 = vmatpush1.msra.mxu0 %v1526
  %1592 = vmatprep.subr.mxu0 %v1523
  %1593 = vmatpush1.msra.mxu0 %v1522
  %1594 = vmatprep.subr.mxu0 %v1519
  %1595 = vmatpush1.msra.mxu0 %v1518
  %1596 = vmatprep.subr.mxu0 %v1515
  %1597 = vmatpush1.msra.mxu0 %v1514
  %1598 = vmatprep.subr.mxu0 %v1511
  %1599 = vmatpush1.msra.mxu0 %v1510
  %1600 = vmatprep.subr.mxu0 %v1507
  %1601 = vmatpush1.msra.mxu0 %v1506
  %1602 = vmatprep.subr.mxu0 0.0
  %1603 = vmatpush2.msra.mxu0 0.0
  %1604 = vmatprep.subr.mxu0 0.0
  %1605 = vmatpush2.msra.mxu0 0.0
  %1606 = vmatprep.subr.mxu0 0.0
  %1607 = vmatpush2.msra.mxu0 0.0
  %1608 = vmatprep.subr.mxu0 0.0
  %1609 = vmatpush2.msra.mxu0 0.0
  %1610 = vmatprep.subr.mxu0 0.0
  %1611 = vmatpush2.msra.mxu0 0.0
  %1612 = vmatprep.subr.mxu0 0.0
  %1613 = vmatpush2.msra.mxu0 0.0
  %1614 = vmatprep.subr.mxu0 0.0
  %1615 = vmatpush2.msra.mxu0 0.0
  %1616 = vmatprep.subr.mxu0 0.0
  %1617 = vmatpush2.msra.mxu0 0.0
  %1618 = vmatprep.subr.mxu0 0.0
  %1619 = vmatpush2.msra.mxu0 0.0
  %1620 = vmatprep.subr.mxu0 0.0
  %1621 = vmatpush2.msra.mxu0 0.0
  %1622 = vmatprep.subr.mxu0 0.0
  %1623 = vmatpush2.msra.mxu0 0.0
  %1624 = vmatprep.subr.mxu0 0.0
  %1625 = vmatpush2.msra.mxu0 0.0
  %1626 = vmatprep.subr.mxu0 0.0
  %1627 = vmatpush2.msra.mxu0 0.0
  %1628 = vmatprep.subr.mxu0 0.0
  %1629 = vmatpush2.msra.mxu0 0.0
  %1630 = vmatprep.subr.mxu0 0.0
  %1631 = vmatpush2.msra.mxu0 0.0
  %1632 = vmatprep.subr.mxu0 0.0
  %1633 = vmatpush2.msra.mxu0 0.0
  %1634 = vmatprep.mubr.f32.mxu0 0.0
  %1635 = vmatmul.mubr.f32.gmra.mxu0 %v1503
  %v1636 = vpop.f32.mrf.mxu0
  %v1637 = vadd.f32 0.0, %v1636
  %v1638 = vpop.f32.mrf.mxu0
  %v1639 = vadd.f32 0.0, %v1638
  %1640 = vdwg.mxu0
  %1641 = vmatprep.subr.mxu0 %v1569
  %1642 = vmatpush1.msra.mxu0 %v1568
  %1643 = vmatprep.subr.mxu0 %v1565
  %1644 = vmatpush1.msra.mxu0 %v1564
  %1645 = vmatprep.subr.mxu0 %v1561
  %1646 = vmatpush1.msra.mxu0 %v1560
  %1647 = vmatprep.subr.mxu0 %v1557
  %1648 = vmatpush1.msra.mxu0 %v1556
  %1649 = vmatprep.subr.mxu0 %v1553
  %1650 = vmatpush1.msra.mxu0 %v1552
  %1651 = vmatprep.subr.mxu0 %v1549
  %1652 = vmatpush1.msra.mxu0 %v1548
  %1653 = vmatprep.subr.mxu0 %v1545
  %1654 = vmatpush1.msra.mxu0 %v1544
  %1655 = vmatprep.subr.mxu0 %v1541
  %1656 = vmatpush1.msra.mxu0 %v1540
  %1657 = vmatprep.subr.mxu0 %v1537
  %1658 = vmatpush1.msra.mxu0 %v1536
  %1659 = vmatprep.subr.mxu0 %v1533
  %1660 = vmatpush1.msra.mxu0 %v1532
  %1661 = vmatprep.subr.mxu0 %v1529
  %1662 = vmatpush1.msra.mxu0 %v1528
  %1663 = vmatprep.subr.mxu0 %v1525
  %1664 = vmatpush1.msra.mxu0 %v1524
  %1665 = vmatprep.subr.mxu0 %v1521
  %1666 = vmatpush1.msra.mxu0 %v1520
  %1667 = vmatprep.subr.mxu0 %v1517
  %1668 = vmatpush1.msra.mxu0 %v1516
  %1669 = vmatprep.subr.mxu0 %v1513
  %1670 = vmatpush1.msra.mxu0 %v1512
  %1671 = vmatprep.subr.mxu0 %v1509
  %1672 = vmatpush1.msra.mxu0 %v1508
  %1673 = vmatprep.subr.mxu0 0.0
  %1674 = vmatpush2.msra.mxu0 0.0
  %1675 = vmatprep.subr.mxu0 0.0
  %1676 = vmatpush2.msra.mxu0 0.0
  %1677 = vmatprep.subr.mxu0 0.0
  %1678 = vmatpush2.msra.mxu0 0.0
  %1679 = vmatprep.subr.mxu0 0.0
  %1680 = vmatpush2.msra.mxu0 0.0
  %1681 = vmatprep.subr.mxu0 0.0
  %1682 = vmatpush2.msra.mxu0 0.0
  %1683 = vmatprep.subr.mxu0 0.0
  %1684 = vmatpush2.msra.mxu0 0.0
  %1685 = vmatprep.subr.mxu0 0.0
  %1686 = vmatpush2.msra.mxu0 0.0
  %1687 = vmatprep.subr.mxu0 0.0
  %1688 = vmatpush2.msra.mxu0 0.0
  %1689 = vmatprep.subr.mxu0 0.0
  %1690 = vmatpush2.msra.mxu0 0.0
  %1691 = vmatprep.subr.mxu0 0.0
  %1692 = vmatpush2.msra.mxu0 0.0
  %1693 = vmatprep.subr.mxu0 0.0
  %1694 = vmatpush2.msra.mxu0 0.0
  %1695 = vmatprep.subr.mxu0 0.0
  %1696 = vmatpush2.msra.mxu0 0.0
  %1697 = vmatprep.subr.mxu0 0.0
  %1698 = vmatpush2.msra.mxu0 0.0
  %1699 = vmatprep.subr.mxu0 0.0
  %1700 = vmatpush2.msra.mxu0 0.0
  %1701 = vmatprep.subr.mxu0 0.0
  %1702 = vmatpush2.msra.mxu0 0.0
  %1703 = vmatprep.subr.mxu0 0.0
  %1704 = vmatpush2.msra.mxu0 0.0
  %1705 = vmatprep.mubr.f32.mxu0 0.0
  %1706 = vmatmul.mubr.f32.gmra.mxu0 %v1503
  %v1707 = vpop.f32.mrf.mxu0
  %v1708 = vadd.f32 0.0, %v1707
  %v1709 = vpop.f32.mrf.mxu0
  %v1710 = vadd.f32 0.0, %v1709
  %1711 = vdwg.mxu0
  %v1712 = vld [vmem:[%s5] sm:$0xff]
  %v1713 = vld [vmem:[%s5 + $0x8] sm:$0xff]
  %v1714 = vld [vmem:[%s5 + $0x10] sm:$0xff]
  %v1715 = vld [vmem:[%s5 + $0x18] sm:$0xff]
  %v1716 = vld [vmem:[%s5 + $0x20] sm:$0xff]
  %v1717 = vld [vmem:[%s5 + $0x28] sm:$0xff]
  %v1718 = vld [vmem:[%s5 + $0x30] sm:$0xff]
  %v1719 = vld [vmem:[%s5 + $0x38] sm:$0xff]
  %v1720 = vld [vmem:[%s5 + $0x40] sm:$0xff]
  %v1721 = vld [vmem:[%s5 + $0x48] sm:$0xff]
  %v1722 = vld [vmem:[%s5 + $0x50] sm:$0xff]
  %v1723 = vld [vmem:[%s5 + $0x58] sm:$0xff]
  %v1724 = vld [vmem:[%s5 + $0x60] sm:$0xff]
  %v1725 = vld [vmem:[%s5 + $0x68] sm:$0xff]
  %v1726 = vld [vmem:[%s5 + $0x70] sm:$0xff]
  %v1727 = vld [vmem:[%s5 + $0x78] sm:$0xff]
  %v1728 = vld [vmem:[%s5 + $0x80] sm:$0xff]
  %v1729 = vld [vmem:[%s5 + $0x88] sm:$0xff]
  %v1730 = vld [vmem:[%s5 + $0x90] sm:$0xff]
  %v1731 = vld [vmem:[%s5 + $0x98] sm:$0xff]
  %v1732 = vld [vmem:[%s5 + $0xa0] sm:$0xff]
  %v1733 = vld [vmem:[%s5 + $0xa8] sm:$0xff]
  %v1734 = vld [vmem:[%s5 + $0xb0] sm:$0xff]
  %v1735 = vld [vmem:[%s5 + $0xb8] sm:$0xff]
  %v1736 = vld [vmem:[%s5 + $0xc0] sm:$0xff]
  %v1737 = vld [vmem:[%s5 + $0xc8] sm:$0xff]
  %v1738 = vld [vmem:[%s5 + $0xd0] sm:$0xff]
  %v1739 = vld [vmem:[%s5 + $0xd8] sm:$0xff]
  %v1740 = vld [vmem:[%s5 + $0xe0] sm:$0xff]
  %v1741 = vld [vmem:[%s5 + $0xe8] sm:$0xff]
  %v1742 = vld [vmem:[%s5 + $0xf0] sm:$0xff]
  %v1743 = vld [vmem:[%s5 + $0xf8] sm:$0xff]
  %v1744 = vld [vmem:[%s5 + $0x100] sm:$0xff]
  %v1745 = vld [vmem:[%s5 + $0x108] sm:$0xff]
  %v1746 = vld [vmem:[%s5 + $0x110] sm:$0xff]
  %v1747 = vld [vmem:[%s5 + $0x118] sm:$0xff]
  %v1748 = vld [vmem:[%s5 + $0x120] sm:$0xff]
  %v1749 = vld [vmem:[%s5 + $0x128] sm:$0xff]
  %v1750 = vld [vmem:[%s5 + $0x130] sm:$0xff]
  %v1751 = vld [vmem:[%s5 + $0x138] sm:$0xff]
  %v1752 = vld [vmem:[%s5 + $0x140] sm:$0xff]
  %v1753 = vld [vmem:[%s5 + $0x148] sm:$0xff]
  %v1754 = vld [vmem:[%s5 + $0x150] sm:$0xff]
  %v1755 = vld [vmem:[%s5 + $0x158] sm:$0xff]
  %v1756 = vld [vmem:[%s5 + $0x160] sm:$0xff]
  %v1757 = vld [vmem:[%s5 + $0x168] sm:$0xff]
  %v1758 = vld [vmem:[%s5 + $0x170] sm:$0xff]
  %v1759 = vld [vmem:[%s5 + $0x178] sm:$0xff]
  %v1760 = vld [vmem:[%s5 + $0x180] sm:$0xff]
  %v1761 = vld [vmem:[%s5 + $0x188] sm:$0xff]
  %v1762 = vld [vmem:[%s5 + $0x190] sm:$0xff]
  %v1763 = vld [vmem:[%s5 + $0x198] sm:$0xff]
  %v1764 = vld [vmem:[%s5 + $0x1a0] sm:$0xff]
  %v1765 = vld [vmem:[%s5 + $0x1a8] sm:$0xff]
  %v1766 = vld [vmem:[%s5 + $0x1b0] sm:$0xff]
  %v1767 = vld [vmem:[%s5 + $0x1b8] sm:$0xff]
  %v1768 = vld [vmem:[%s5 + $0x1c0] sm:$0xff]
  %v1769 = vld [vmem:[%s5 + $0x1c8] sm:$0xff]
  %v1770 = vld [vmem:[%s5 + $0x1d0] sm:$0xff]
  %v1771 = vld [vmem:[%s5 + $0x1d8] sm:$0xff]
  %v1772 = vld [vmem:[%s5 + $0x1e0] sm:$0xff]
  %v1773 = vld [vmem:[%s5 + $0x1e8] sm:$0xff]
  %v1774 = vld [vmem:[%s5 + $0x1f0] sm:$0xff]
  %v1775 = vld [vmem:[%s5 + $0x1f8] sm:$0xff]
  %v1776 = vlaneseq
  %v1777 = vshrl.u32 %v1776, 7
  %v1778 = vsub.s32 0, %v1777
  %v1779 = vrot.slane %v1637, %v1778
  %v1780 = vlaneseq
  %v1781 = vshrl.u32 %v1780, 7
  %v1782 = vsub.s32 0, %v1781
  %v1783 = vrot.slane %v1639, %v1782
  %v1784 = vlaneseq
  %v1785 = vshrl.u32 %v1784, 7
  %v1786 = vsub.s32 0, %v1785
  %v1787 = vrot.slane %v1708, %v1786
  %v1788 = vlaneseq
  %v1789 = vshrl.u32 %v1788, 7
  %v1790 = vsub.s32 0, %v1789
  %v1791 = vrot.slane %v1710, %v1790
  %1792 = vmatprep.subr.mxu0 %v1773
  %1793 = vmatpush1.msra.mxu0 %v1772
  %1794 = vmatprep.subr.mxu0 %v1769
  %1795 = vmatpush1.msra.mxu0 %v1768
  %1796 = vmatprep.subr.mxu0 %v1765
  %1797 = vmatpush1.msra.mxu0 %v1764
  %1798 = vmatprep.subr.mxu0 %v1761
  %1799 = vmatpush1.msra.mxu0 %v1760
  %1800 = vmatprep.subr.mxu0 %v1757
  %1801 = vmatpush1.msra.mxu0 %v1756
  %1802 = vmatprep.subr.mxu0 %v1753
  %1803 = vmatpush1.msra.mxu0 %v1752
  %1804 = vmatprep.subr.mxu0 %v1749
  %1805 = vmatpush1.msra.mxu0 %v1748
  %1806 = vmatprep.subr.mxu0 %v1745
  %1807 = vmatpush1.msra.mxu0 %v1744
  %1808 = vmatprep.subr.mxu0 %v1741
  %1809 = vmatpush1.msra.mxu0 %v1740
  %1810 = vmatprep.subr.mxu0 %v1737
  %1811 = vmatpush1.msra.mxu0 %v1736
  %1812 = vmatprep.subr.mxu0 %v1733
  %1813 = vmatpush1.msra.mxu0 %v1732
  %1814 = vmatprep.subr.mxu0 %v1729
  %1815 = vmatpush1.msra.mxu0 %v1728
  %1816 = vmatprep.subr.mxu0 %v1725
  %1817 = vmatpush1.msra.mxu0 %v1724
  %1818 = vmatprep.subr.mxu0 %v1721
  %1819 = vmatpush1.msra.mxu0 %v1720
  %1820 = vmatprep.subr.mxu0 %v1717
  %1821 = vmatpush1.msra.mxu0 %v1716
  %1822 = vmatprep.subr.mxu0 %v1713
  %1823 = vmatpush1.msra.mxu0 %v1712
  %1824 = vmatprep.subr.mxu0 0.0
  %1825 = vmatpush2.msra.mxu0 0.0
  %1826 = vmatprep.subr.mxu0 0.0
  %1827 = vmatpush2.msra.mxu0 0.0
  %1828 = vmatprep.subr.mxu0 0.0
  %1829 = vmatpush2.msra.mxu0 0.0
  %1830 = vmatprep.subr.mxu0 0.0
  %1831 = vmatpush2.msra.mxu0 0.0
  %1832 = vmatprep.subr.mxu0 0.0
  %1833 = vmatpush2.msra.mxu0 0.0
  %1834 = vmatprep.subr.mxu0 0.0
  %1835 = vmatpush2.msra.mxu0 0.0
  %1836 = vmatprep.subr.mxu0 0.0
  %1837 = vmatpush2.msra.mxu0 0.0
  %1838 = vmatprep.subr.mxu0 0.0
  %1839 = vmatpush2.msra.mxu0 0.0
  %1840 = vmatprep.subr.mxu0 0.0
  %1841 = vmatpush2.msra.mxu0 0.0
  %1842 = vmatprep.subr.mxu0 0.0
  %1843 = vmatpush2.msra.mxu0 0.0
  %1844 = vmatprep.subr.mxu0 0.0
  %1845 = vmatpush2.msra.mxu0 0.0
  %1846 = vmatprep.subr.mxu0 0.0
  %1847 = vmatpush2.msra.mxu0 0.0
  %1848 = vmatprep.subr.mxu0 0.0
  %1849 = vmatpush2.msra.mxu0 0.0
  %1850 = vmatprep.subr.mxu0 0.0
  %1851 = vmatpush2.msra.mxu0 0.0
  %1852 = vmatprep.subr.mxu0 0.0
  %1853 = vmatpush2.msra.mxu0 0.0
  %1854 = vmatprep.subr.mxu0 0.0
  %1855 = vmatpush2.msra.mxu0 0.0
  %1856 = vmatprep.mubr.f32.mxu0 0.0
  %1857 = vmatmul.mubr.f32.gmra.mxu0 %v1505
  %v1858 = vpop.f32.mrf.mxu0
  %v1859 = vadd.f32 %v1779, %v1858
  %v1860 = vpop.f32.mrf.mxu0
  %v1861 = vadd.f32 %v1783, %v1860
  %1862 = vdwg.mxu0
  %1863 = vmatprep.subr.mxu0 %v1775
  %1864 = vmatpush1.msra.mxu0 %v1774
  %1865 = vmatprep.subr.mxu0 %v1771
  %1866 = vmatpush1.msra.mxu0 %v1770
  %1867 = vmatprep.subr.mxu0 %v1767
  %1868 = vmatpush1.msra.mxu0 %v1766
  %1869 = vmatprep.subr.mxu0 %v1763
  %1870 = vmatpush1.msra.mxu0 %v1762
  %1871 = vmatprep.subr.mxu0 %v1759
  %1872 = vmatpush1.msra.mxu0 %v1758
  %1873 = vmatprep.subr.mxu0 %v1755
  %1874 = vmatpush1.msra.mxu0 %v1754
  %1875 = vmatprep.subr.mxu0 %v1751
  %1876 = vmatpush1.msra.mxu0 %v1750
  %1877 = vmatprep.subr.mxu0 %v1747
  %1878 = vmatpush1.msra.mxu0 %v1746
  %1879 = vmatprep.subr.mxu0 %v1743
  %1880 = vmatpush1.msra.mxu0 %v1742
  %1881 = vmatprep.subr.mxu0 %v1739
  %1882 = vmatpush1.msra.mxu0 %v1738
  %1883 = vmatprep.subr.mxu0 %v1735
  %1884 = vmatpush1.msra.mxu0 %v1734
  %1885 = vmatprep.subr.mxu0 %v1731
  %1886 = vmatpush1.msra.mxu0 %v1730
  %1887 = vmatprep.subr.mxu0 %v1727
  %1888 = vmatpush1.msra.mxu0 %v1726
  %1889 = vmatprep.subr.mxu0 %v1723
  %1890 = vmatpush1.msra.mxu0 %v1722
  %1891 = vmatprep.subr.mxu0 %v1719
  %1892 = vmatpush1.msra.mxu0 %v1718
  %1893 = vmatprep.subr.mxu0 %v1715
  %1894 = vmatpush1.msra.mxu0 %v1714
  %1895 = vmatprep.subr.mxu0 0.0
  %1896 = vmatpush2.msra.mxu0 0.0
  %1897 = vmatprep.subr.mxu0 0.0
  %1898 = vmatpush2.msra.mxu0 0.0
  %1899 = vmatprep.subr.mxu0 0.0
  %1900 = vmatpush2.msra.mxu0 0.0
  %1901 = vmatprep.subr.mxu0 0.0
  %1902 = vmatpush2.msra.mxu0 0.0
  %1903 = vmatprep.subr.mxu0 0.0
  %1904 = vmatpush2.msra.mxu0 0.0
  %1905 = vmatprep.subr.mxu0 0.0
  %1906 = vmatpush2.msra.mxu0 0.0
  %1907 = vmatprep.subr.mxu0 0.0
  %1908 = vmatpush2.msra.mxu0 0.0
  %1909 = vmatprep.subr.mxu0 0.0
  %1910 = vmatpush2.msra.mxu0 0.0
  %1911 = vmatprep.subr.mxu0 0.0
  %1912 = vmatpush2.msra.mxu0 0.0
  %1913 = vmatprep.subr.mxu0 0.0
  %1914 = vmatpush2.msra.mxu0 0.0
  %1915 = vmatprep.subr.mxu0 0.0
  %1916 = vmatpush2.msra.mxu0 0.0
  %1917 = vmatprep.subr.mxu0 0.0
  %1918 = vmatpush2.msra.mxu0 0.0
  %1919 = vmatprep.subr.mxu0 0.0
  %1920 = vmatpush2.msra.mxu0 0.0
  %1921 = vmatprep.subr.mxu0 0.0
  %1922 = vmatpush2.msra.mxu0 0.0
  %1923 = vmatprep.subr.mxu0 0.0
  %1924 = vmatpush2.msra.mxu0 0.0
  %1925 = vmatprep.subr.mxu0 0.0
  %1926 = vmatpush2.msra.mxu0 0.0
  %1927 = vmatprep.mubr.f32.mxu0 0.0
  %1928 = vmatmul.mubr.f32.gmra.mxu0 %v1505
  %v1929 = vpop.f32.mrf.mxu0
  %v1930 = vadd.f32 %v1787, %v1929
  %v1931 = vpop.f32.mrf.mxu0
  %v1932 = vadd.f32 %v1791, %v1931
  %1933 = vdwg.mxu0
  %v1934 = vld [vmem:[%s8] sm:$0xf]
  %v1936 = vlaneseq
  %v1937 = vshrl.u32 %v1936, 7
  %v1938 = vsub.s32 0, %v1937
  %v1939 = vrot.slane %v1934, %v1938
  %v1940 = vlaneseq
  %v1941 = vshrl.u32 %v1940, 7
  %v1942 = vsub.s32 1, %v1941
  %v1943 = vrot.slane %v1934, %v1942
  %v1944 = vlaneseq
  %v1945 = vshrl.u32 %v1944, 7
  %v1946 = vsub.s32 2, %v1945
  %v1947 = vrot.slane %v1934, %v1946
  %v1948 = vlaneseq
  %v1949 = vshrl.u32 %v1948, 7
  %v1950 = vsub.s32 3, %v1949
  %v1951 = vrot.slane %v1934, %v1950
  %v1956 = vadd.f32 %v1859, %v1939
  %v1957 = vadd.f32 %v1861, %v1943
  %v1958 = vadd.f32 %v1930, %v1947
  %v1959 = vadd.f32 %v1932, %v1951
  %v1960 = vld [vmem:[%s7] sm:$0xff]
  %v1961 = vld [vmem:[%s7 + $0x8] sm:$0xff]
  %v1962 = vld [vmem:[%s7 + $0x10] sm:$0xff]
  %v1963 = vld [vmem:[%s7 + $0x18] sm:$0xff]
  %v1964 = vld [vmem:[%s7 + $0x20] sm:$0xff]
  %v1965 = vld [vmem:[%s7 + $0x28] sm:$0xff]
  %v1966 = vld [vmem:[%s7 + $0x30] sm:$0xff]
  %v1967 = vld [vmem:[%s7 + $0x38] sm:$0xff]
  %v1968 = vld [vmem:[%s7 + $0x40] sm:$0xff]
  %v1969 = vld [vmem:[%s7 + $0x48] sm:$0xff]
  %v1970 = vld [vmem:[%s7 + $0x50] sm:$0xff]
  %v1971 = vld [vmem:[%s7 + $0x58] sm:$0xff]
  %v1972 = vld [vmem:[%s7 + $0x60] sm:$0xff]
  %v1973 = vld [vmem:[%s7 + $0x68] sm:$0xff]
  %v1974 = vld [vmem:[%s7 + $0x70] sm:$0xff]
  %v1975 = vld [vmem:[%s7 + $0x78] sm:$0xff]
  %v1976 = vld [vmem:[%s7 + $0x80] sm:$0xff]
  %v1977 = vld [vmem:[%s7 + $0x88] sm:$0xff]
  %v1978 = vld [vmem:[%s7 + $0x90] sm:$0xff]
  %v1979 = vld [vmem:[%s7 + $0x98] sm:$0xff]
  %v1980 = vld [vmem:[%s7 + $0xa0] sm:$0xff]
  %v1981 = vld [vmem:[%s7 + $0xa8] sm:$0xff]
  %v1982 = vld [vmem:[%s7 + $0xb0] sm:$0xff]
  %v1983 = vld [vmem:[%s7 + $0xb8] sm:$0xff]
  %v1984 = vld [vmem:[%s7 + $0xc0] sm:$0xff]
  %v1985 = vld [vmem:[%s7 + $0xc8] sm:$0xff]
  %v1986 = vld [vmem:[%s7 + $0xd0] sm:$0xff]
  %v1987 = vld [vmem:[%s7 + $0xd8] sm:$0xff]
  %v1988 = vld [vmem:[%s7 + $0xe0] sm:$0xff]
  %v1989 = vld [vmem:[%s7 + $0xe8] sm:$0xff]
  %v1990 = vld [vmem:[%s7 + $0xf0] sm:$0xff]
  %v1991 = vld [vmem:[%s7 + $0xf8] sm:$0xff]
  %v1992 = vpack.c.bf16 %v1499, %v1499
  %v1994 = vshrl.u32 %v1992, 16
  %v1996 = vrot.slane %v1994, 3
  %v2030 = vunpack.c.l.b16 %v1960
  %v2031 = vunpack.c.h.b16 %v1960
  %v2032 = vunpack.c.l.b16 %v1961
  %v2033 = vunpack.c.h.b16 %v1961
  %v2034 = vunpack.c.l.b16 %v1962
  %v2035 = vunpack.c.h.b16 %v1962
  %v2036 = vunpack.c.l.b16 %v1963
  %v2037 = vunpack.c.h.b16 %v1963
  %v2038 = vunpack.c.l.b16 %v1964
  %v2039 = vunpack.c.h.b16 %v1964
  %v2040 = vunpack.c.l.b16 %v1965
  %v2041 = vunpack.c.h.b16 %v1965
  %v2042 = vunpack.c.l.b16 %v1966
  %v2043 = vunpack.c.h.b16 %v1966
  %v2044 = vunpack.c.l.b16 %v1967
  %v2045 = vunpack.c.h.b16 %v1967
  %v2046 = vunpack.c.l.b16 %v1968
  %v2047 = vunpack.c.h.b16 %v1968
  %v2048 = vunpack.c.l.b16 %v1969
  %v2049 = vunpack.c.h.b16 %v1969
  %v2050 = vunpack.c.l.b16 %v1970
  %v2051 = vunpack.c.h.b16 %v1970
  %v2052 = vunpack.c.l.b16 %v1971
  %v2053 = vunpack.c.h.b16 %v1971
  %v2054 = vunpack.c.l.b16 %v1972
  %v2055 = vunpack.c.h.b16 %v1972
  %v2056 = vunpack.c.l.b16 %v1973
  %v2057 = vunpack.c.h.b16 %v1973
  %v2058 = vunpack.c.l.b16 %v1974
  %v2059 = vunpack.c.h.b16 %v1974
  %v2060 = vunpack.c.l.b16 %v1975
  %v2061 = vunpack.c.h.b16 %v1975
  %v2062 = vunpack.c.l.b16 %v1976
  %v2063 = vunpack.c.h.b16 %v1976
  %v2064 = vunpack.c.l.b16 %v1977
  %v2065 = vunpack.c.h.b16 %v1977
  %v2066 = vunpack.c.l.b16 %v1978
  %v2067 = vunpack.c.h.b16 %v1978
  %v2068 = vunpack.c.l.b16 %v1979
  %v2069 = vunpack.c.h.b16 %v1979
  %v2070 = vunpack.c.l.b16 %v1980
  %v2071 = vunpack.c.h.b16 %v1980
  %v2072 = vunpack.c.l.b16 %v1981
  %v2073 = vunpack.c.h.b16 %v1981
  %v2074 = vunpack.c.l.b16 %v1982
  %v2075 = vunpack.c.h.b16 %v1982
  %v2076 = vunpack.c.l.b16 %v1983
  %v2077 = vunpack.c.h.b16 %v1983
  %v2078 = vunpack.c.l.b16 %v1984
  %v2079 = vunpack.c.h.b16 %v1984
  %v2080 = vunpack.c.l.b16 %v1985
  %v2081 = vunpack.c.h.b16 %v1985
  %v2082 = vunpack.c.l.b16 %v1986
  %v2083 = vunpack.c.h.b16 %v1986
  %v2084 = vunpack.c.l.b16 %v1987
  %v2085 = vunpack.c.h.b16 %v1987
  %v2086 = vunpack.c.l.b16 %v1988
  %v2087 = vunpack.c.h.b16 %v1988
  %v2088 = vunpack.c.l.b16 %v1989
  %v2089 = vunpack.c.h.b16 %v1989
  %v2090 = vunpack.c.l.b16 %v1990
  %v2091 = vunpack.c.h.b16 %v1990
  %v2092 = vunpack.c.l.b16 %v1991
  %v2093 = vunpack.c.h.b16 %v1991
  %v2094 = vpack.c.b16 %v2034, %v2030
  %v2095 = vpack.c.b16 %v2035, %v2031
  %v2096 = vpack.c.b16 %v2036, %v2032
  %v2097 = vpack.c.b16 %v2037, %v2033
  %v2098 = vpack.c.b16 %v2042, %v2038
  %v2099 = vpack.c.b16 %v2043, %v2039
  %v2100 = vpack.c.b16 %v2044, %v2040
  %v2101 = vpack.c.b16 %v2045, %v2041
  %v2102 = vpack.c.b16 %v2050, %v2046
  %v2103 = vpack.c.b16 %v2051, %v2047
  %v2104 = vpack.c.b16 %v2052, %v2048
  %v2105 = vpack.c.b16 %v2053, %v2049
  %v2106 = vpack.c.b16 %v2058, %v2054
  %v2107 = vpack.c.b16 %v2059, %v2055
  %v2108 = vpack.c.b16 %v2060, %v2056
  %v2109 = vpack.c.b16 %v2061, %v2057
  %v2110 = vpack.c.b16 %v2066, %v2062
  %v2111 = vpack.c.b16 %v2067, %v2063
  %v2112 = vpack.c.b16 %v2068, %v2064
  %v2113 = vpack.c.b16 %v2069, %v2065
  %v2114 = vpack.c.b16 %v2074, %v2070
  %v2115 = vpack.c.b16 %v2075, %v2071
  %v2116 = vpack.c.b16 %v2076, %v2072
  %v2117 = vpack.c.b16 %v2077, %v2073
  %v2118 = vpack.c.b16 %v2082, %v2078
  %v2119 = vpack.c.b16 %v2083, %v2079
  %v2120 = vpack.c.b16 %v2084, %v2080
  %v2121 = vpack.c.b16 %v2085, %v2081
  %v2122 = vpack.c.b16 %v2090, %v2086
  %v2123 = vpack.c.b16 %v2091, %v2087
  %v2124 = vpack.c.b16 %v2092, %v2088
  %v2125 = vpack.c.b16 %v2093, %v2089
  %2158 = vmatprep.subr.bf16.mxu0 %v2123
  %2159 = vmatpush1.bf16.msra.mxu0 %v2122
  %2160 = vmatprep.subr.bf16.mxu0 %v2119
  %2161 = vmatpush1.bf16.msra.mxu0 %v2118
  %2162 = vmatprep.subr.bf16.mxu0 %v2115
  %2163 = vmatpush1.bf16.msra.mxu0 %v2114
  %2164 = vmatprep.subr.bf16.mxu0 %v2111
  %2165 = vmatpush1.bf16.msra.mxu0 %v2110
  %2166 = vmatprep.subr.bf16.mxu0 %v2107
  %2167 = vmatpush1.bf16.msra.mxu0 %v2106
  %2168 = vmatprep.subr.bf16.mxu0 %v2103
  %2169 = vmatpush1.bf16.msra.mxu0 %v2102
  %2170 = vmatprep.subr.bf16.mxu0 %v2099
  %2171 = vmatpush1.bf16.msra.mxu0 %v2098
  %2172 = vmatprep.subr.bf16.mxu0 %v2095
  %2173 = vmatpush1.bf16.msra.mxu0 %v2094
  %2174 = vmatprep.subr.bf16.mxu0 0
  %2175 = vmatpush2.bf16.msra.mxu0 0
  %2176 = vmatprep.subr.bf16.mxu0 0
  %2177 = vmatpush2.bf16.msra.mxu0 0
  %2178 = vmatprep.subr.bf16.mxu0 0
  %2179 = vmatpush2.bf16.msra.mxu0 0
  %2180 = vmatprep.subr.bf16.mxu0 0
  %2181 = vmatpush2.bf16.msra.mxu0 0
  %2182 = vmatprep.subr.bf16.mxu0 0
  %2183 = vmatpush2.bf16.msra.mxu0 0
  %2184 = vmatprep.subr.bf16.mxu0 0
  %2185 = vmatpush2.bf16.msra.mxu0 0
  %2186 = vmatprep.subr.bf16.mxu0 0
  %2187 = vmatpush2.bf16.msra.mxu0 0
  %2188 = vmatprep.subr.bf16.mxu0 0
  %2189 = vmatpush2.bf16.msra.mxu0 0
  %2190 = vmatprep.mubr.bf16.mxu0 0
  %2191 = vmatmul.mubr.bf16.gmra.mxu0 %v1996
  %v2192 = vpop.f32.mrf.mxu0
  %v2193 = vadd.f32 0.0, %v2192
  %v2194 = vpop.f32.mrf.mxu0
  %v2195 = vadd.f32 0.0, %v2194
  %v2196 = vpop.f32.mrf.mxu0
  %v2197 = vpop.f32.mrf.mxu0
  %2198 = vdwg.mxu0
  %2199 = vmatprep.subr.bf16.mxu0 %v2125
  %2200 = vmatpush1.bf16.msra.mxu0 %v2124
  %2201 = vmatprep.subr.bf16.mxu0 %v2121
  %2202 = vmatpush1.bf16.msra.mxu0 %v2120
  %2203 = vmatprep.subr.bf16.mxu0 %v2117
  %2204 = vmatpush1.bf16.msra.mxu0 %v2116
  %2205 = vmatprep.subr.bf16.mxu0 %v2113
  %2206 = vmatpush1.bf16.msra.mxu0 %v2112
  %2207 = vmatprep.subr.bf16.mxu0 %v2109
  %2208 = vmatpush1.bf16.msra.mxu0 %v2108
  %2209 = vmatprep.subr.bf16.mxu0 %v2105
  %2210 = vmatpush1.bf16.msra.mxu0 %v2104
  %2211 = vmatprep.subr.bf16.mxu0 %v2101
  %2212 = vmatpush1.bf16.msra.mxu0 %v2100
  %2213 = vmatprep.subr.bf16.mxu0 %v2097
  %2214 = vmatpush1.bf16.msra.mxu0 %v2096
  %2215 = vmatprep.subr.bf16.mxu0 0
  %2216 = vmatpush2.bf16.msra.mxu0 0
  %2217 = vmatprep.subr.bf16.mxu0 0
  %2218 = vmatpush2.bf16.msra.mxu0 0
  %2219 = vmatprep.subr.bf16.mxu0 0
  %2220 = vmatpush2.bf16.msra.mxu0 0
  %2221 = vmatprep.subr.bf16.mxu0 0
  %2222 = vmatpush2.bf16.msra.mxu0 0
  %2223 = vmatprep.subr.bf16.mxu0 0
  %2224 = vmatpush2.bf16.msra.mxu0 0
  %2225 = vmatprep.subr.bf16.mxu0 0
  %2226 = vmatpush2.bf16.msra.mxu0 0
  %2227 = vmatprep.subr.bf16.mxu0 0
  %2228 = vmatpush2.bf16.msra.mxu0 0
  %2229 = vmatprep.subr.bf16.mxu0 0
  %2230 = vmatpush2.bf16.msra.mxu0 0
  %2231 = vmatprep.mubr.bf16.mxu0 0
  %2232 = vmatmul.mubr.bf16.gmra.mxu0 %v1996
  %v2233 = vpop.f32.mrf.mxu0
  %v2234 = vadd.f32 0.0, %v2233
  %v2235 = vpop.f32.mrf.mxu0
  %v2236 = vadd.f32 0.0, %v2235
  %v2237 = vpop.f32.mrf.mxu0
  %v2238 = vpop.f32.mrf.mxu0
  %2239 = vdwg.mxu0
  %v2240 = vadd.f32 %v1956, %v2193
  %v2241 = vadd.f32 %v1957, %v2195
  %v2242 = vadd.f32 %v1958, %v2234
  %v2243 = vadd.f32 %v1959, %v2236
  %v2244 = vxor.u32 %v2240, 2147483648
  %v2245 = vxor.u32 %v2241, 2147483648
  %v2246 = vxor.u32 %v2242, 2147483648
  %v2247 = vmul.f32 %v2244, 1.442695
  %v2248 = vpow.pop %v2247
  %v2249 = vmul.f32 %v2245, 1.442695
  %v2250 = vpow.pop %v2249
  %v2251 = vmul.f32 %v2246, 1.442695
  %v2252 = vpow.pop %v2251
  %v2253 = vadd.f32 %v2248, 1.0
  %v2254 = vadd.f32 %v2250, 1.0
  %v2255 = vadd.f32 %v2252, 1.0
  %v2256 = vrcp.pop %v2253
  %v2257 = vmul.f32 1.0, %v2256
  %v2258 = vrcp.pop %v2254
  %v2259 = vmul.f32 1.0, %v2258
  %v2260 = vrcp.pop %v2255
  %v2261 = vmul.f32 1.0, %v2260
  %v2262 = vtanh.pop %v2243
  %v2264 = vrot.slane %v1497, 7
  %v2266 = vmul.f32 %v2259, %v2264
  %v2267 = vmul.f32 %v2257, %v2262
  %v2268 = vadd.f32 %v2266, %v2267
  %v2269 = vtanh.pop %v2268
  %v2270 = vmul.f32 %v2261, %v2269
  %2271 = vst [vmem:[#allocation2] sm:$0x1] %v2270
  %v2272 = vpack.c.bf16 %v2270, %v2270
  %2273 = vmatprep.subr.bf16.mxu0 %v2123
  %2274 = vmatpush1.bf16.msra.mxu0 %v2122
  %2275 = vmatprep.subr.bf16.mxu0 %v2119
  %2276 = vmatpush1.bf16.msra.mxu0 %v2118
  %2277 = vmatprep.subr.bf16.mxu0 %v2115
  %2278 = vmatpush1.bf16.msra.mxu0 %v2114
  %2279 = vmatprep.subr.bf16.mxu0 %v2111
  %2280 = vmatpush1.bf16.msra.mxu0 %v2110
  %2281 = vmatprep.subr.bf16.mxu0 %v2107
  %2282 = vmatpush1.bf16.msra.mxu0 %v2106
  %2283 = vmatprep.subr.bf16.mxu0 %v2103
  %2284 = vmatpush1.bf16.msra.mxu0 %v2102
  %2285 = vmatprep.subr.bf16.mxu0 %v2099
  %2286 = vmatpush1.bf16.msra.mxu0 %v2098
  %2287 = vmatprep.subr.bf16.mxu0 %v2095
  %2288 = vmatpush1.bf16.msra.mxu0 %v2094
  %2289 = vmatprep.subr.bf16.mxu0 0
  %2290 = vmatpush2.bf16.msra.mxu0 0
  %2291 = vmatprep.subr.bf16.mxu0 0
  %2292 = vmatpush2.bf16.msra.mxu0 0
  %2293 = vmatprep.subr.bf16.mxu0 0
  %2294 = vmatpush2.bf16.msra.mxu0 0
  %2295 = vmatprep.subr.bf16.mxu0 0
  %2296 = vmatpush2.bf16.msra.mxu0 0
  %2297 = vmatprep.subr.bf16.mxu0 0
  %2298 = vmatpush2.bf16.msra.mxu0 0
  %2299 = vmatprep.subr.bf16.mxu0 0
  %2300 = vmatpush2.bf16.msra.mxu0 0
  %2301 = vmatprep.subr.bf16.mxu0 0
  %2302 = vmatpush2.bf16.msra.mxu0 0
  %2303 = vmatprep.subr.bf16.mxu0 0
  %2304 = vmatpush2.bf16.msra.mxu0 0
  %2305 = vmatprep.mubr.bf16.mxu0 0
  %2306 = vmatmul.mubr.bf16.gmra.mxu0 %v2272
  %v2307 = vpop.f32.mrf.mxu0
  %v2308 = vadd.f32 0.0, %v2307
  %v2309 = vpop.f32.mrf.mxu0
  %v2310 = vadd.f32 0.0, %v2309
  %v2311 = vpop.f32.mrf.mxu0
  %v2312 = vpop.f32.mrf.mxu0
  %2313 = vdwg.mxu0
  %2314 = vmatprep.subr.bf16.mxu0 %v2125
  %2315 = vmatpush1.bf16.msra.mxu0 %v2124
  %2316 = vmatprep.subr.bf16.mxu0 %v2121
  %2317 = vmatpush1.bf16.msra.mxu0 %v2120
  %2318 = vmatprep.subr.bf16.mxu0 %v2117
  %2319 = vmatpush1.bf16.msra.mxu0 %v2116
  %2320 = vmatprep.subr.bf16.mxu0 %v2113
  %2321 = vmatpush1.bf16.msra.mxu0 %v2112
  %2322 = vmatprep.subr.bf16.mxu0 %v2109
  %2323 = vmatpush1.bf16.msra.mxu0 %v2108
  %2324 = vmatprep.subr.bf16.mxu0 %v2105
  %2325 = vmatpush1.bf16.msra.mxu0 %v2104
  %2326 = vmatprep.subr.bf16.mxu0 %v2101
  %2327 = vmatpush1.bf16.msra.mxu0 %v2100
  %2328 = vmatprep.subr.bf16.mxu0 %v2097
  %2329 = vmatpush1.bf16.msra.mxu0 %v2096
  %2330 = vmatprep.subr.bf16.mxu0 0
  %2331 = vmatpush2.bf16.msra.mxu0 0
  %2332 = vmatprep.subr.bf16.mxu0 0
  %2333 = vmatpush2.bf16.msra.mxu0 0
  %2334 = vmatprep.subr.bf16.mxu0 0
  %2335 = vmatpush2.bf16.msra.mxu0 0
  %2336 = vmatprep.subr.bf16.mxu0 0
  %2337 = vmatpush2.bf16.msra.mxu0 0
  %2338 = vmatprep.subr.bf16.mxu0 0
  %2339 = vmatpush2.bf16.msra.mxu0 0
  %2340 = vmatprep.subr.bf16.mxu0 0
  %2341 = vmatpush2.bf16.msra.mxu0 0
  %2342 = vmatprep.subr.bf16.mxu0 0
  %2343 = vmatpush2.bf16.msra.mxu0 0
  %2344 = vmatprep.subr.bf16.mxu0 0
  %2345 = vmatpush2.bf16.msra.mxu0 0
  %2346 = vmatprep.mubr.bf16.mxu0 0
  %2347 = vmatmul.mubr.bf16.gmra.mxu0 %v2272
  %v2348 = vpop.f32.mrf.mxu0
  %v2349 = vadd.f32 0.0, %v2348
  %v2350 = vpop.f32.mrf.mxu0
  %v2351 = vadd.f32 0.0, %v2350
  %v2352 = vpop.f32.mrf.mxu0
  %v2353 = vpop.f32.mrf.mxu0
  %2354 = vdwg.mxu0
  %v2359 = vrot.slane %v2308, 7
  %v2360 = vrot.slane %v2310, 7
  %v2361 = vrot.slane %v2349, 7
  %v2362 = vrot.slane %v2351, 7
  %v2367 = vadd.f32 %v1956, %v2359
  %v2368 = vadd.f32 %v1957, %v2360
  %v2369 = vadd.f32 %v1958, %v2361
  %v2370 = vadd.f32 %v1959, %v2362
  %v2371 = vxor.u32 %v2367, 2147483648
  %v2372 = vxor.u32 %v2368, 2147483648
  %v2373 = vxor.u32 %v2369, 2147483648
  %v2374 = vmul.f32 %v2371, 1.442695
  %v2375 = vpow.pop %v2374
  %v2376 = vmul.f32 %v2372, 1.442695
  %v2377 = vpow.pop %v2376
  %v2378 = vmul.f32 %v2373, 1.442695
  %v2379 = vpow.pop %v2378
  %v2380 = vadd.f32 %v2375, 1.0
  %v2381 = vadd.f32 %v2377, 1.0
  %v2382 = vadd.f32 %v2379, 1.0
  %v2383 = vrcp.pop %v2380
  %v2384 = vmul.f32 1.0, %v2383
  %v2385 = vrcp.pop %v2381
  %v2386 = vmul.f32 1.0, %v2385
  %v2387 = vrcp.pop %v2382
  %v2388 = vmul.f32 1.0, %v2387
  %v2389 = vtanh.pop %v2370
  %v2391 = vrot.slane %v2268, 7
  %v2393 = vmul.f32 %v2386, %v2391
  %v2394 = vmul.f32 %v2384, %v2389
  %v2395 = vadd.f32 %v2393, %v2394
  %v2396 = vtanh.pop %v2395
  %v2397 = vmul.f32 %v2388, %v2396
  %2398 = vst [vmem:[#allocation2] sm:$0x2] %v2397
  %v2399 = vpack.c.bf16 %v2397, %v2397
  %v2401 = vshrl.u32 %v2399, 16
  %2404 = vmatprep.subr.bf16.mxu0 %v2123
  %2405 = vmatpush1.bf16.msra.mxu0 %v2122
  %2406 = vmatprep.subr.bf16.mxu0 %v2119
  %2407 = vmatpush1.bf16.msra.mxu0 %v2118
  %2408 = vmatprep.subr.bf16.mxu0 %v2115
  %2409 = vmatpush1.bf16.msra.mxu0 %v2114
  %2410 = vmatprep.subr.bf16.mxu0 %v2111
  %2411 = vmatpush1.bf16.msra.mxu0 %v2110
  %2412 = vmatprep.subr.bf16.mxu0 %v2107
  %2413 = vmatpush1.bf16.msra.mxu0 %v2106
  %2414 = vmatprep.subr.bf16.mxu0 %v2103
  %2415 = vmatpush1.bf16.msra.mxu0 %v2102
  %2416 = vmatprep.subr.bf16.mxu0 %v2099
  %2417 = vmatpush1.bf16.msra.mxu0 %v2098
  %2418 = vmatprep.subr.bf16.mxu0 %v2095
  %2419 = vmatpush1.bf16.msra.mxu0 %v2094
  %2420 = vmatprep.subr.bf16.mxu0 0
  %2421 = vmatpush2.bf16.msra.mxu0 0
  %2422 = vmatprep.subr.bf16.mxu0 0
  %2423 = vmatpush2.bf16.msra.mxu0 0
  %2424 = vmatprep.subr.bf16.mxu0 0
  %2425 = vmatpush2.bf16.msra.mxu0 0
  %2426 = vmatprep.subr.bf16.mxu0 0
  %2427 = vmatpush2.bf16.msra.mxu0 0
  %2428 = vmatprep.subr.bf16.mxu0 0
  %2429 = vmatpush2.bf16.msra.mxu0 0
  %2430 = vmatprep.subr.bf16.mxu0 0
  %2431 = vmatpush2.bf16.msra.mxu0 0
  %2432 = vmatprep.subr.bf16.mxu0 0
  %2433 = vmatpush2.bf16.msra.mxu0 0
  %2434 = vmatprep.subr.bf16.mxu0 0
  %2435 = vmatpush2.bf16.msra.mxu0 0
  %2436 = vmatprep.mubr.bf16.mxu0 0
  %2437 = vmatmul.mubr.bf16.gmra.mxu0 %v2401
  %v2438 = vpop.f32.mrf.mxu0
  %v2439 = vadd.f32 0.0, %v2438
  %v2440 = vpop.f32.mrf.mxu0
  %v2441 = vadd.f32 0.0, %v2440
  %v2442 = vpop.f32.mrf.mxu0
  %v2443 = vpop.f32.mrf.mxu0
  %2444 = vdwg.mxu0
  %2445 = vmatprep.subr.bf16.mxu0 %v2125
  %2446 = vmatpush1.bf16.msra.mxu0 %v2124
  %2447 = vmatprep.subr.bf16.mxu0 %v2121
  %2448 = vmatpush1.bf16.msra.mxu0 %v2120
  %2449 = vmatprep.subr.bf16.mxu0 %v2117
  %2450 = vmatpush1.bf16.msra.mxu0 %v2116
  %2451 = vmatprep.subr.bf16.mxu0 %v2113
  %2452 = vmatpush1.bf16.msra.mxu0 %v2112
  %2453 = vmatprep.subr.bf16.mxu0 %v2109
  %2454 = vmatpush1.bf16.msra.mxu0 %v2108
  %2455 = vmatprep.subr.bf16.mxu0 %v2105
  %2456 = vmatpush1.bf16.msra.mxu0 %v2104
  %2457 = vmatprep.subr.bf16.mxu0 %v2101
  %2458 = vmatpush1.bf16.msra.mxu0 %v2100
  %2459 = vmatprep.subr.bf16.mxu0 %v2097
  %2460 = vmatpush1.bf16.msra.mxu0 %v2096
  %2461 = vmatprep.subr.bf16.mxu0 0
  %2462 = vmatpush2.bf16.msra.mxu0 0
  %2463 = vmatprep.subr.bf16.mxu0 0
  %2464 = vmatpush2.bf16.msra.mxu0 0
  %2465 = vmatprep.subr.bf16.mxu0 0
  %2466 = vmatpush2.bf16.msra.mxu0 0
  %2467 = vmatprep.subr.bf16.mxu0 0
  %2468 = vmatpush2.bf16.msra.mxu0 0
  %2469 = vmatprep.subr.bf16.mxu0 0
  %2470 = vmatpush2.bf16.msra.mxu0 0
  %2471 = vmatprep.subr.bf16.mxu0 0
  %2472 = vmatpush2.bf16.msra.mxu0 0
  %2473 = vmatprep.subr.bf16.mxu0 0
  %2474 = vmatpush2.bf16.msra.mxu0 0
  %2475 = vmatprep.subr.bf16.mxu0 0
  %2476 = vmatpush2.bf16.msra.mxu0 0
  %2477 = vmatprep.mubr.bf16.mxu0 0
  %2478 = vmatmul.mubr.bf16.gmra.mxu0 %v2401
  %v2479 = vpop.f32.mrf.mxu0
  %v2480 = vadd.f32 0.0, %v2479
  %v2481 = vpop.f32.mrf.mxu0
  %v2482 = vadd.f32 0.0, %v2481
  %v2483 = vpop.f32.mrf.mxu0
  %v2484 = vpop.f32.mrf.mxu0
  %2485 = vdwg.mxu0
  %v2490 = vrot.slane %v2439, 6
  %v2491 = vrot.slane %v2441, 6
  %v2492 = vrot.slane %v2480, 6
  %v2493 = vrot.slane %v2482, 6
  %v2498 = vadd.f32 %v1956, %v2490
  %v2499 = vadd.f32 %v1957, %v2491
  %v2500 = vadd.f32 %v1958, %v2492
  %v2501 = vadd.f32 %v1959, %v2493
  %v2502 = vxor.u32 %v2498, 2147483648
  %v2503 = vxor.u32 %v2499, 2147483648
  %v2504 = vxor.u32 %v2500, 2147483648
  %v2505 = vmul.f32 %v2502, 1.442695
  %v2506 = vpow.pop %v2505
  %v2507 = vmul.f32 %v2503, 1.442695
  %v2508 = vpow.pop %v2507
  %v2509 = vmul.f32 %v2504, 1.442695
  %v2510 = vpow.pop %v2509
  %v2511 = vadd.f32 %v2506, 1.0
  %v2512 = vadd.f32 %v2508, 1.0
  %v2513 = vadd.f32 %v2510, 1.0
  %v2514 = vrcp.pop %v2511
  %v2515 = vmul.f32 1.0, %v2514
  %v2516 = vrcp.pop %v2512
  %v2517 = vmul.f32 1.0, %v2516
  %v2518 = vrcp.pop %v2513
  %v2519 = vmul.f32 1.0, %v2518
  %v2520 = vtanh.pop %v2501
  %v2522 = vrot.slane %v2395, 7
  %v2524 = vmul.f32 %v2517, %v2522
  %v2525 = vmul.f32 %v2515, %v2520
  %v2526 = vadd.f32 %v2524, %v2525
  %v2527 = vtanh.pop %v2526
  %v2528 = vmul.f32 %v2519, %v2527
  %2529 = vst [vmem:[#allocation2] sm:$0x4] %v2528
  %v2530 = vpack.c.bf16 %v2528, %v2528
  %v2532 = vrot.slane %v2530, 1
  %2534 = vmatprep.subr.bf16.mxu0 %v2123
  %2535 = vmatpush1.bf16.msra.mxu0 %v2122
  %2536 = vmatprep.subr.bf16.mxu0 %v2119
  %2537 = vmatpush1.bf16.msra.mxu0 %v2118
  %2538 = vmatprep.subr.bf16.mxu0 %v2115
  %2539 = vmatpush1.bf16.msra.mxu0 %v2114
  %2540 = vmatprep.subr.bf16.mxu0 %v2111
  %2541 = vmatpush1.bf16.msra.mxu0 %v2110
  %2542 = vmatprep.subr.bf16.mxu0 %v2107
  %2543 = vmatpush1.bf16.msra.mxu0 %v2106
  %2544 = vmatprep.subr.bf16.mxu0 %v2103
  %2545 = vmatpush1.bf16.msra.mxu0 %v2102
  %2546 = vmatprep.subr.bf16.mxu0 %v2099
  %2547 = vmatpush1.bf16.msra.mxu0 %v2098
  %2548 = vmatprep.subr.bf16.mxu0 %v2095
  %2549 = vmatpush1.bf16.msra.mxu0 %v2094
  %2550 = vmatprep.subr.bf16.mxu0 0
  %2551 = vmatpush2.bf16.msra.mxu0 0
  %2552 = vmatprep.subr.bf16.mxu0 0
  %2553 = vmatpush2.bf16.msra.mxu0 0
  %2554 = vmatprep.subr.bf16.mxu0 0
  %2555 = vmatpush2.bf16.msra.mxu0 0
  %2556 = vmatprep.subr.bf16.mxu0 0
  %2557 = vmatpush2.bf16.msra.mxu0 0
  %2558 = vmatprep.subr.bf16.mxu0 0
  %2559 = vmatpush2.bf16.msra.mxu0 0
  %2560 = vmatprep.subr.bf16.mxu0 0
  %2561 = vmatpush2.bf16.msra.mxu0 0
  %2562 = vmatprep.subr.bf16.mxu0 0
  %2563 = vmatpush2.bf16.msra.mxu0 0
  %2564 = vmatprep.subr.bf16.mxu0 0
  %2565 = vmatpush2.bf16.msra.mxu0 0
  %2566 = vmatprep.mubr.bf16.mxu0 0
  %2567 = vmatmul.mubr.bf16.gmra.mxu0 %v2532
  %v2568 = vpop.f32.mrf.mxu0
  %v2569 = vadd.f32 0.0, %v2568
  %v2570 = vpop.f32.mrf.mxu0
  %v2571 = vadd.f32 0.0, %v2570
  %v2572 = vpop.f32.mrf.mxu0
  %v2573 = vpop.f32.mrf.mxu0
  %2574 = vdwg.mxu0
  %2575 = vmatprep.subr.bf16.mxu0 %v2125
  %2576 = vmatpush1.bf16.msra.mxu0 %v2124
  %2577 = vmatprep.subr.bf16.mxu0 %v2121
  %2578 = vmatpush1.bf16.msra.mxu0 %v2120
  %2579 = vmatprep.subr.bf16.mxu0 %v2117
  %2580 = vmatpush1.bf16.msra.mxu0 %v2116
  %2581 = vmatprep.subr.bf16.mxu0 %v2113
  %2582 = vmatpush1.bf16.msra.mxu0 %v2112
  %2583 = vmatprep.subr.bf16.mxu0 %v2109
  %2584 = vmatpush1.bf16.msra.mxu0 %v2108
  %2585 = vmatprep.subr.bf16.mxu0 %v2105
  %2586 = vmatpush1.bf16.msra.mxu0 %v2104
  %2587 = vmatprep.subr.bf16.mxu0 %v2101
  %2588 = vmatpush1.bf16.msra.mxu0 %v2100
  %2589 = vmatprep.subr.bf16.mxu0 %v2097
  %2590 = vmatpush1.bf16.msra.mxu0 %v2096
  %2591 = vmatprep.subr.bf16.mxu0 0
  %2592 = vmatpush2.bf16.msra.mxu0 0
  %2593 = vmatprep.subr.bf16.mxu0 0
  %2594 = vmatpush2.bf16.msra.mxu0 0
  %2595 = vmatprep.subr.bf16.mxu0 0
  %2596 = vmatpush2.bf16.msra.mxu0 0
  %2597 = vmatprep.subr.bf16.mxu0 0
  %2598 = vmatpush2.bf16.msra.mxu0 0
  %2599 = vmatprep.subr.bf16.mxu0 0
  %2600 = vmatpush2.bf16.msra.mxu0 0
  %2601 = vmatprep.subr.bf16.mxu0 0
  %2602 = vmatpush2.bf16.msra.mxu0 0
  %2603 = vmatprep.subr.bf16.mxu0 0
  %2604 = vmatpush2.bf16.msra.mxu0 0
  %2605 = vmatprep.subr.bf16.mxu0 0
  %2606 = vmatpush2.bf16.msra.mxu0 0
  %2607 = vmatprep.mubr.bf16.mxu0 0
  %2608 = vmatmul.mubr.bf16.gmra.mxu0 %v2532
  %v2609 = vpop.f32.mrf.mxu0
  %v2610 = vadd.f32 0.0, %v2609
  %v2611 = vpop.f32.mrf.mxu0
  %v2612 = vadd.f32 0.0, %v2611
  %v2613 = vpop.f32.mrf.mxu0
  %v2614 = vpop.f32.mrf.mxu0
  %2615 = vdwg.mxu0
  %v2620 = vrot.slane %v2569, 5
  %v2621 = vrot.slane %v2571, 5
  %v2622 = vrot.slane %v2610, 5
  %v2623 = vrot.slane %v2612, 5
  %v2628 = vadd.f32 %v1956, %v2620
  %v2629 = vadd.f32 %v1957, %v2621
  %v2630 = vadd.f32 %v1958, %v2622
  %v2631 = vadd.f32 %v1959, %v2623
  %v2632 = vxor.u32 %v2628, 2147483648
  %v2633 = vxor.u32 %v2629, 2147483648
  %v2634 = vxor.u32 %v2630, 2147483648
  %v2635 = vmul.f32 %v2632, 1.442695
  %v2636 = vpow.pop %v2635
  %v2637 = vmul.f32 %v2633, 1.442695
  %v2638 = vpow.pop %v2637
  %v2639 = vmul.f32 %v2634, 1.442695
  %v2640 = vpow.pop %v2639
  %v2641 = vadd.f32 %v2636, 1.0
  %v2642 = vadd.f32 %v2638, 1.0
  %v2643 = vadd.f32 %v2640, 1.0
  %v2644 = vrcp.pop %v2641
  %v2645 = vmul.f32 1.0, %v2644
  %v2646 = vrcp.pop %v2642
  %v2647 = vmul.f32 1.0, %v2646
  %v2648 = vrcp.pop %v2643
  %v2649 = vmul.f32 1.0, %v2648
  %v2650 = vtanh.pop %v2631
  %v2652 = vrot.slane %v2526, 7
  %v2654 = vmul.f32 %v2647, %v2652
  %v2655 = vmul.f32 %v2645, %v2650
  %v2656 = vadd.f32 %v2654, %v2655
  %v2657 = vtanh.pop %v2656
  %v2658 = vmul.f32 %v2649, %v2657
  %2659 = vst [vmem:[#allocation2] sm:$0x8] %v2658
  %v2660 = vpack.c.bf16 %v2658, %v2658
  %v2662 = vshrl.u32 %v2660, 16
  %v2664 = vrot.slane %v2662, 1
  %2666 = vmatprep.subr.bf16.mxu0 %v2123
  %2667 = vmatpush1.bf16.msra.mxu0 %v2122
  %2668 = vmatprep.subr.bf16.mxu0 %v2119
  %2669 = vmatpush1.bf16.msra.mxu0 %v2118
  %2670 = vmatprep.subr.bf16.mxu0 %v2115
  %2671 = vmatpush1.bf16.msra.mxu0 %v2114
  %2672 = vmatprep.subr.bf16.mxu0 %v2111
  %2673 = vmatpush1.bf16.msra.mxu0 %v2110
  %2674 = vmatprep.subr.bf16.mxu0 %v2107
  %2675 = vmatpush1.bf16.msra.mxu0 %v2106
  %2676 = vmatprep.subr.bf16.mxu0 %v2103
  %2677 = vmatpush1.bf16.msra.mxu0 %v2102
  %2678 = vmatprep.subr.bf16.mxu0 %v2099
  %2679 = vmatpush1.bf16.msra.mxu0 %v2098
  %2680 = vmatprep.subr.bf16.mxu0 %v2095
  %2681 = vmatpush1.bf16.msra.mxu0 %v2094
  %2682 = vmatprep.subr.bf16.mxu0 0
  %2683 = vmatpush2.bf16.msra.mxu0 0
  %2684 = vmatprep.subr.bf16.mxu0 0
  %2685 = vmatpush2.bf16.msra.mxu0 0
  %2686 = vmatprep.subr.bf16.mxu0 0
  %2687 = vmatpush2.bf16.msra.mxu0 0
  %2688 = vmatprep.subr.bf16.mxu0 0
  %2689 = vmatpush2.bf16.msra.mxu0 0
  %2690 = vmatprep.subr.bf16.mxu0 0
  %2691 = vmatpush2.bf16.msra.mxu0 0
  %2692 = vmatprep.subr.bf16.mxu0 0
  %2693 = vmatpush2.bf16.msra.mxu0 0
  %2694 = vmatprep.subr.bf16.mxu0 0
  %2695 = vmatpush2.bf16.msra.mxu0 0
  %2696 = vmatprep.subr.bf16.mxu0 0
  %2697 = vmatpush2.bf16.msra.mxu0 0
  %2698 = vmatprep.mubr.bf16.mxu0 0
  %2699 = vmatmul.mubr.bf16.gmra.mxu0 %v2664
  %v2700 = vpop.f32.mrf.mxu0
  %v2701 = vadd.f32 0.0, %v2700
  %v2702 = vpop.f32.mrf.mxu0
  %v2703 = vadd.f32 0.0, %v2702
  %v2704 = vpop.f32.mrf.mxu0
  %v2705 = vpop.f32.mrf.mxu0
  %2706 = vdwg.mxu0
  %2707 = vmatprep.subr.bf16.mxu0 %v2125
  %2708 = vmatpush1.bf16.msra.mxu0 %v2124
  %2709 = vmatprep.subr.bf16.mxu0 %v2121
  %2710 = vmatpush1.bf16.msra.mxu0 %v2120
  %2711 = vmatprep.subr.bf16.mxu0 %v2117
  %2712 = vmatpush1.bf16.msra.mxu0 %v2116
  %2713 = vmatprep.subr.bf16.mxu0 %v2113
  %2714 = vmatpush1.bf16.msra.mxu0 %v2112
  %2715 = vmatprep.subr.bf16.mxu0 %v2109
  %2716 = vmatpush1.bf16.msra.mxu0 %v2108
  %2717 = vmatprep.subr.bf16.mxu0 %v2105
  %2718 = vmatpush1.bf16.msra.mxu0 %v2104
  %2719 = vmatprep.subr.bf16.mxu0 %v2101
  %2720 = vmatpush1.bf16.msra.mxu0 %v2100
  %2721 = vmatprep.subr.bf16.mxu0 %v2097
  %2722 = vmatpush1.bf16.msra.mxu0 %v2096
  %2723 = vmatprep.subr.bf16.mxu0 0
  %2724 = vmatpush2.bf16.msra.mxu0 0
  %2725 = vmatprep.subr.bf16.mxu0 0
  %2726 = vmatpush2.bf16.msra.mxu0 0
  %2727 = vmatprep.subr.bf16.mxu0 0
  %2728 = vmatpush2.bf16.msra.mxu0 0
  %2729 = vmatprep.subr.bf16.mxu0 0
  %2730 = vmatpush2.bf16.msra.mxu0 0
  %2731 = vmatprep.subr.bf16.mxu0 0
  %2732 = vmatpush2.bf16.msra.mxu0 0
  %2733 = vmatprep.subr.bf16.mxu0 0
  %2734 = vmatpush2.bf16.msra.mxu0 0
  %2735 = vmatprep.subr.bf16.mxu0 0
  %2736 = vmatpush2.bf16.msra.mxu0 0
  %2737 = vmatprep.subr.bf16.mxu0 0
  %2738 = vmatpush2.bf16.msra.mxu0 0
  %2739 = vmatprep.mubr.bf16.mxu0 0
  %2740 = vmatmul.mubr.bf16.gmra.mxu0 %v2664
  %v2741 = vpop.f32.mrf.mxu0
  %v2742 = vadd.f32 0.0, %v2741
  %v2743 = vpop.f32.mrf.mxu0
  %v2744 = vadd.f32 0.0, %v2743
  %v2745 = vpop.f32.mrf.mxu0
  %v2746 = vpop.f32.mrf.mxu0
  %2747 = vdwg.mxu0
  %v2752 = vrot.slane %v2701, 4
  %v2753 = vrot.slane %v2703, 4
  %v2754 = vrot.slane %v2742, 4
  %v2755 = vrot.slane %v2744, 4
  %v2760 = vadd.f32 %v1956, %v2752
  %v2761 = vadd.f32 %v1957, %v2753
  %v2762 = vadd.f32 %v1958, %v2754
  %v2763 = vadd.f32 %v1959, %v2755
  %v2764 = vxor.u32 %v2760, 2147483648
  %v2765 = vxor.u32 %v2761, 2147483648
  %v2766 = vxor.u32 %v2762, 2147483648
  %v2767 = vmul.f32 %v2764, 1.442695
  %v2768 = vpow.pop %v2767
  %v2769 = vmul.f32 %v2765, 1.442695
  %v2770 = vpow.pop %v2769
  %v2771 = vmul.f32 %v2766, 1.442695
  %v2772 = vpow.pop %v2771
  %v2773 = vadd.f32 %v2768, 1.0
  %v2774 = vadd.f32 %v2770, 1.0
  %v2775 = vadd.f32 %v2772, 1.0
  %v2776 = vrcp.pop %v2773
  %v2777 = vmul.f32 1.0, %v2776
  %v2778 = vrcp.pop %v2774
  %v2779 = vmul.f32 1.0, %v2778
  %v2780 = vrcp.pop %v2775
  %v2781 = vmul.f32 1.0, %v2780
  %v2782 = vtanh.pop %v2763
  %v2784 = vrot.slane %v2656, 7
  %v2786 = vmul.f32 %v2779, %v2784
  %v2787 = vmul.f32 %v2777, %v2782
  %v2788 = vadd.f32 %v2786, %v2787
  %v2789 = vtanh.pop %v2788
  %v2790 = vmul.f32 %v2781, %v2789
  %2791 = vst [vmem:[#allocation2] sm:$0x10] %v2790
  %v2792 = vpack.c.bf16 %v2790, %v2790
  %v2794 = vrot.slane %v2792, 2
  %2796 = vmatprep.subr.bf16.mxu0 %v2123
  %2797 = vmatpush1.bf16.msra.mxu0 %v2122
  %2798 = vmatprep.subr.bf16.mxu0 %v2119
  %2799 = vmatpush1.bf16.msra.mxu0 %v2118
  %2800 = vmatprep.subr.bf16.mxu0 %v2115
  %2801 = vmatpush1.bf16.msra.mxu0 %v2114
  %2802 = vmatprep.subr.bf16.mxu0 %v2111
  %2803 = vmatpush1.bf16.msra.mxu0 %v2110
  %2804 = vmatprep.subr.bf16.mxu0 %v2107
  %2805 = vmatpush1.bf16.msra.mxu0 %v2106
  %2806 = vmatprep.subr.bf16.mxu0 %v2103
  %2807 = vmatpush1.bf16.msra.mxu0 %v2102
  %2808 = vmatprep.subr.bf16.mxu0 %v2099
  %2809 = vmatpush1.bf16.msra.mxu0 %v2098
  %2810 = vmatprep.subr.bf16.mxu0 %v2095
  %2811 = vmatpush1.bf16.msra.mxu0 %v2094
  %2812 = vmatprep.subr.bf16.mxu0 0
  %2813 = vmatpush2.bf16.msra.mxu0 0
  %2814 = vmatprep.subr.bf16.mxu0 0
  %2815 = vmatpush2.bf16.msra.mxu0 0
  %2816 = vmatprep.subr.bf16.mxu0 0
  %2817 = vmatpush2.bf16.msra.mxu0 0
  %2818 = vmatprep.subr.bf16.mxu0 0
  %2819 = vmatpush2.bf16.msra.mxu0 0
  %2820 = vmatprep.subr.bf16.mxu0 0
  %2821 = vmatpush2.bf16.msra.mxu0 0
  %2822 = vmatprep.subr.bf16.mxu0 0
  %2823 = vmatpush2.bf16.msra.mxu0 0
  %2824 = vmatprep.subr.bf16.mxu0 0
  %2825 = vmatpush2.bf16.msra.mxu0 0
  %2826 = vmatprep.subr.bf16.mxu0 0
  %2827 = vmatpush2.bf16.msra.mxu0 0
  %2828 = vmatprep.mubr.bf16.mxu0 0
  %2829 = vmatmul.mubr.bf16.gmra.mxu0 %v2794
  %v2830 = vpop.f32.mrf.mxu0
  %v2831 = vadd.f32 0.0, %v2830
  %v2832 = vpop.f32.mrf.mxu0
  %v2833 = vadd.f32 0.0, %v2832
  %v2834 = vpop.f32.mrf.mxu0
  %v2835 = vpop.f32.mrf.mxu0
  %2836 = vdwg.mxu0
  %2837 = vmatprep.subr.bf16.mxu0 %v2125
  %2838 = vmatpush1.bf16.msra.mxu0 %v2124
  %2839 = vmatprep.subr.bf16.mxu0 %v2121
  %2840 = vmatpush1.bf16.msra.mxu0 %v2120
  %2841 = vmatprep.subr.bf16.mxu0 %v2117
  %2842 = vmatpush1.bf16.msra.mxu0 %v2116
  %2843 = vmatprep.subr.bf16.mxu0 %v2113
  %2844 = vmatpush1.bf16.msra.mxu0 %v2112
  %2845 = vmatprep.subr.bf16.mxu0 %v2109
  %2846 = vmatpush1.bf16.msra.mxu0 %v2108
  %2847 = vmatprep.subr.bf16.mxu0 %v2105
  %2848 = vmatpush1.bf16.msra.mxu0 %v2104
  %2849 = vmatprep.subr.bf16.mxu0 %v2101
  %2850 = vmatpush1.bf16.msra.mxu0 %v2100
  %2851 = vmatprep.subr.bf16.mxu0 %v2097
  %2852 = vmatpush1.bf16.msra.mxu0 %v2096
  %2853 = vmatprep.subr.bf16.mxu0 0
  %2854 = vmatpush2.bf16.msra.mxu0 0
  %2855 = vmatprep.subr.bf16.mxu0 0
  %2856 = vmatpush2.bf16.msra.mxu0 0
  %2857 = vmatprep.subr.bf16.mxu0 0
  %2858 = vmatpush2.bf16.msra.mxu0 0
  %2859 = vmatprep.subr.bf16.mxu0 0
  %2860 = vmatpush2.bf16.msra.mxu0 0
  %2861 = vmatprep.subr.bf16.mxu0 0
  %2862 = vmatpush2.bf16.msra.mxu0 0
  %2863 = vmatprep.subr.bf16.mxu0 0
  %2864 = vmatpush2.bf16.msra.mxu0 0
  %2865 = vmatprep.subr.bf16.mxu0 0
  %2866 = vmatpush2.bf16.msra.mxu0 0
  %2867 = vmatprep.subr.bf16.mxu0 0
  %2868 = vmatpush2.bf16.msra.mxu0 0
  %2869 = vmatprep.mubr.bf16.mxu0 0
  %2870 = vmatmul.mubr.bf16.gmra.mxu0 %v2794
  %v2871 = vpop.f32.mrf.mxu0
  %v2872 = vadd.f32 0.0, %v2871
  %v2873 = vpop.f32.mrf.mxu0
  %v2874 = vadd.f32 0.0, %v2873
  %v2875 = vpop.f32.mrf.mxu0
  %v2876 = vpop.f32.mrf.mxu0
  %2877 = vdwg.mxu0
  %v2882 = vrot.slane %v2831, 3
  %v2883 = vrot.slane %v2833, 3
  %v2884 = vrot.slane %v2872, 3
  %v2885 = vrot.slane %v2874, 3
  %v2890 = vadd.f32 %v1956, %v2882
  %v2891 = vadd.f32 %v1957, %v2883
  %v2892 = vadd.f32 %v1958, %v2884
  %v2893 = vadd.f32 %v1959, %v2885
  %v2894 = vxor.u32 %v2890, 2147483648
  %v2895 = vxor.u32 %v2891, 2147483648
  %v2896 = vxor.u32 %v2892, 2147483648
  %v2897 = vmul.f32 %v2894, 1.442695
  %v2898 = vpow.pop %v2897
  %v2899 = vmul.f32 %v2895, 1.442695
  %v2900 = vpow.pop %v2899
  %v2901 = vmul.f32 %v2896, 1.442695
  %v2902 = vpow.pop %v2901
  %v2903 = vadd.f32 %v2898, 1.0
  %v2904 = vadd.f32 %v2900, 1.0
  %v2905 = vadd.f32 %v2902, 1.0
  %v2906 = vrcp.pop %v2903
  %v2907 = vmul.f32 1.0, %v2906
  %v2908 = vrcp.pop %v2904
  %v2909 = vmul.f32 1.0, %v2908
  %v2910 = vrcp.pop %v2905
  %v2911 = vmul.f32 1.0, %v2910
  %v2912 = vtanh.pop %v2893
  %v2914 = vrot.slane %v2788, 7
  %v2916 = vmul.f32 %v2909, %v2914
  %v2917 = vmul.f32 %v2907, %v2912
  %v2918 = vadd.f32 %v2916, %v2917
  %v2919 = vtanh.pop %v2918
  %v2920 = vmul.f32 %v2911, %v2919
  %2921 = vst [vmem:[#allocation2] sm:$0x20] %v2920
  %v2922 = vpack.c.bf16 %v2920, %v2920
  %v2924 = vshrl.u32 %v2922, 16
  %v2926 = vrot.slane %v2924, 2
  %2928 = vmatprep.subr.bf16.mxu0 %v2123
  %2929 = vmatpush1.bf16.msra.mxu0 %v2122
  %2930 = vmatprep.subr.bf16.mxu0 %v2119
  %2931 = vmatpush1.bf16.msra.mxu0 %v2118
  %2932 = vmatprep.subr.bf16.mxu0 %v2115
  %2933 = vmatpush1.bf16.msra.mxu0 %v2114
  %2934 = vmatprep.subr.bf16.mxu0 %v2111
  %2935 = vmatpush1.bf16.msra.mxu0 %v2110
  %2936 = vmatprep.subr.bf16.mxu0 %v2107
  %2937 = vmatpush1.bf16.msra.mxu0 %v2106
  %2938 = vmatprep.subr.bf16.mxu0 %v2103
  %2939 = vmatpush1.bf16.msra.mxu0 %v2102
  %2940 = vmatprep.subr.bf16.mxu0 %v2099
  %2941 = vmatpush1.bf16.msra.mxu0 %v2098
  %2942 = vmatprep.subr.bf16.mxu0 %v2095
  %2943 = vmatpush1.bf16.msra.mxu0 %v2094
  %2944 = vmatprep.subr.bf16.mxu0 0
  %2945 = vmatpush2.bf16.msra.mxu0 0
  %2946 = vmatprep.subr.bf16.mxu0 0
  %2947 = vmatpush2.bf16.msra.mxu0 0
  %2948 = vmatprep.subr.bf16.mxu0 0
  %2949 = vmatpush2.bf16.msra.mxu0 0
  %2950 = vmatprep.subr.bf16.mxu0 0
  %2951 = vmatpush2.bf16.msra.mxu0 0
  %2952 = vmatprep.subr.bf16.mxu0 0
  %2953 = vmatpush2.bf16.msra.mxu0 0
  %2954 = vmatprep.subr.bf16.mxu0 0
  %2955 = vmatpush2.bf16.msra.mxu0 0
  %2956 = vmatprep.subr.bf16.mxu0 0
  %2957 = vmatpush2.bf16.msra.mxu0 0
  %2958 = vmatprep.subr.bf16.mxu0 0
  %2959 = vmatpush2.bf16.msra.mxu0 0
  %2960 = vmatprep.mubr.bf16.mxu0 0
  %2961 = vmatmul.mubr.bf16.gmra.mxu0 %v2926
  %v2962 = vpop.f32.mrf.mxu0
  %v2963 = vadd.f32 0.0, %v2962
  %v2964 = vpop.f32.mrf.mxu0
  %v2965 = vadd.f32 0.0, %v2964
  %v2966 = vpop.f32.mrf.mxu0
  %v2967 = vpop.f32.mrf.mxu0
  %2968 = vdwg.mxu0
  %2969 = vmatprep.subr.bf16.mxu0 %v2125
  %2970 = vmatpush1.bf16.msra.mxu0 %v2124
  %2971 = vmatprep.subr.bf16.mxu0 %v2121
  %2972 = vmatpush1.bf16.msra.mxu0 %v2120
  %2973 = vmatprep.subr.bf16.mxu0 %v2117
  %2974 = vmatpush1.bf16.msra.mxu0 %v2116
  %2975 = vmatprep.subr.bf16.mxu0 %v2113
  %2976 = vmatpush1.bf16.msra.mxu0 %v2112
  %2977 = vmatprep.subr.bf16.mxu0 %v2109
  %2978 = vmatpush1.bf16.msra.mxu0 %v2108
  %2979 = vmatprep.subr.bf16.mxu0 %v2105
  %2980 = vmatpush1.bf16.msra.mxu0 %v2104
  %2981 = vmatprep.subr.bf16.mxu0 %v2101
  %2982 = vmatpush1.bf16.msra.mxu0 %v2100
  %2983 = vmatprep.subr.bf16.mxu0 %v2097
  %2984 = vmatpush1.bf16.msra.mxu0 %v2096
  %2985 = vmatprep.subr.bf16.mxu0 0
  %2986 = vmatpush2.bf16.msra.mxu0 0
  %2987 = vmatprep.subr.bf16.mxu0 0
  %2988 = vmatpush2.bf16.msra.mxu0 0
  %2989 = vmatprep.subr.bf16.mxu0 0
  %2990 = vmatpush2.bf16.msra.mxu0 0
  %2991 = vmatprep.subr.bf16.mxu0 0
  %2992 = vmatpush2.bf16.msra.mxu0 0
  %2993 = vmatprep.subr.bf16.mxu0 0
  %2994 = vmatpush2.bf16.msra.mxu0 0
  %2995 = vmatprep.subr.bf16.mxu0 0
  %2996 = vmatpush2.bf16.msra.mxu0 0
  %2997 = vmatprep.subr.bf16.mxu0 0
  %2998 = vmatpush2.bf16.msra.mxu0 0
  %2999 = vmatprep.subr.bf16.mxu0 0
  %3000 = vmatpush2.bf16.msra.mxu0 0
  %3001 = vmatprep.mubr.bf16.mxu0 0
  %3002 = vmatmul.mubr.bf16.gmra.mxu0 %v2926
  %v3003 = vpop.f32.mrf.mxu0
  %v3004 = vadd.f32 0.0, %v3003
  %v3005 = vpop.f32.mrf.mxu0
  %v3006 = vadd.f32 0.0, %v3005
  %v3007 = vpop.f32.mrf.mxu0
  %v3008 = vpop.f32.mrf.mxu0
  %3009 = vdwg.mxu0
  %v3014 = vrot.slane %v2963, 2
  %v3015 = vrot.slane %v2965, 2
  %v3016 = vrot.slane %v3004, 2
  %v3017 = vrot.slane %v3006, 2
  %v3022 = vadd.f32 %v1956, %v3014
  %v3023 = vadd.f32 %v1957, %v3015
  %v3024 = vadd.f32 %v1958, %v3016
  %v3025 = vadd.f32 %v1959, %v3017
  %v3026 = vxor.u32 %v3022, 2147483648
  %v3027 = vxor.u32 %v3023, 2147483648
  %v3028 = vxor.u32 %v3024, 2147483648
  %v3029 = vmul.f32 %v3026, 1.442695
  %v3030 = vpow.pop %v3029
  %v3031 = vmul.f32 %v3027, 1.442695
  %v3032 = vpow.pop %v3031
  %v3033 = vmul.f32 %v3028, 1.442695
  %v3034 = vpow.pop %v3033
  %v3035 = vadd.f32 %v3030, 1.0
  %v3036 = vadd.f32 %v3032, 1.0
  %v3037 = vadd.f32 %v3034, 1.0
  %v3038 = vrcp.pop %v3035
  %v3039 = vmul.f32 1.0, %v3038
  %v3040 = vrcp.pop %v3036
  %v3041 = vmul.f32 1.0, %v3040
  %v3042 = vrcp.pop %v3037
  %v3043 = vmul.f32 1.0, %v3042
  %v3044 = vtanh.pop %v3025
  %v3046 = vrot.slane %v2918, 7
  %v3048 = vmul.f32 %v3041, %v3046
  %v3049 = vmul.f32 %v3039, %v3044
  %v3050 = vadd.f32 %v3048, %v3049
  %v3051 = vtanh.pop %v3050
  %v3052 = vmul.f32 %v3043, %v3051
  %3053 = vst [vmem:[#allocation2] sm:$0x40] %v3052
  %v3054 = vpack.c.bf16 %v3052, %v3052
  %v3056 = vrot.slane %v3054, 3
  %3058 = vmatprep.subr.bf16.mxu0 %v2123
  %3059 = vmatpush1.bf16.msra.mxu0 %v2122
  %3060 = vmatprep.subr.bf16.mxu0 %v2119
  %3061 = vmatpush1.bf16.msra.mxu0 %v2118
  %3062 = vmatprep.subr.bf16.mxu0 %v2115
  %3063 = vmatpush1.bf16.msra.mxu0 %v2114
  %3064 = vmatprep.subr.bf16.mxu0 %v2111
  %3065 = vmatpush1.bf16.msra.mxu0 %v2110
  %3066 = vmatprep.subr.bf16.mxu0 %v2107
  %3067 = vmatpush1.bf16.msra.mxu0 %v2106
  %3068 = vmatprep.subr.bf16.mxu0 %v2103
  %3069 = vmatpush1.bf16.msra.mxu0 %v2102
  %3070 = vmatprep.subr.bf16.mxu0 %v2099
  %3071 = vmatpush1.bf16.msra.mxu0 %v2098
  %3072 = vmatprep.subr.bf16.mxu0 %v2095
  %3073 = vmatpush1.bf16.msra.mxu0 %v2094
  %3074 = vmatprep.subr.bf16.mxu0 0
  %3075 = vmatpush2.bf16.msra.mxu0 0
  %3076 = vmatprep.subr.bf16.mxu0 0
  %3077 = vmatpush2.bf16.msra.mxu0 0
  %3078 = vmatprep.subr.bf16.mxu0 0
  %3079 = vmatpush2.bf16.msra.mxu0 0
  %3080 = vmatprep.subr.bf16.mxu0 0
  %3081 = vmatpush2.bf16.msra.mxu0 0
  %3082 = vmatprep.subr.bf16.mxu0 0
  %3083 = vmatpush2.bf16.msra.mxu0 0
  %3084 = vmatprep.subr.bf16.mxu0 0
  %3085 = vmatpush2.bf16.msra.mxu0 0
  %3086 = vmatprep.subr.bf16.mxu0 0
  %3087 = vmatpush2.bf16.msra.mxu0 0
  %3088 = vmatprep.subr.bf16.mxu0 0
  %3089 = vmatpush2.bf16.msra.mxu0 0
  %3090 = vmatprep.mubr.bf16.mxu0 0
  %3091 = vmatmul.mubr.bf16.gmra.mxu0 %v3056
  %v3092 = vpop.f32.mrf.mxu0
  %v3093 = vadd.f32 0.0, %v3092
  %v3094 = vpop.f32.mrf.mxu0
  %v3095 = vadd.f32 0.0, %v3094
  %v3096 = vpop.f32.mrf.mxu0
  %v3097 = vpop.f32.mrf.mxu0
  %3098 = vdwg.mxu0
  %3099 = vmatprep.subr.bf16.mxu0 %v2125
  %3100 = vmatpush1.bf16.msra.mxu0 %v2124
  %3101 = vmatprep.subr.bf16.mxu0 %v2121
  %3102 = vmatpush1.bf16.msra.mxu0 %v2120
  %3103 = vmatprep.subr.bf16.mxu0 %v2117
  %3104 = vmatpush1.bf16.msra.mxu0 %v2116
  %3105 = vmatprep.subr.bf16.mxu0 %v2113
  %3106 = vmatpush1.bf16.msra.mxu0 %v2112
  %3107 = vmatprep.subr.bf16.mxu0 %v2109
  %3108 = vmatpush1.bf16.msra.mxu0 %v2108
  %3109 = vmatprep.subr.bf16.mxu0 %v2105
  %3110 = vmatpush1.bf16.msra.mxu0 %v2104
  %3111 = vmatprep.subr.bf16.mxu0 %v2101
  %3112 = vmatpush1.bf16.msra.mxu0 %v2100
  %3113 = vmatprep.subr.bf16.mxu0 %v2097
  %3114 = vmatpush1.bf16.msra.mxu0 %v2096
  %3115 = vmatprep.subr.bf16.mxu0 0
  %3116 = vmatpush2.bf16.msra.mxu0 0
  %3117 = vmatprep.subr.bf16.mxu0 0
  %3118 = vmatpush2.bf16.msra.mxu0 0
  %3119 = vmatprep.subr.bf16.mxu0 0
  %3120 = vmatpush2.bf16.msra.mxu0 0
  %3121 = vmatprep.subr.bf16.mxu0 0
  %3122 = vmatpush2.bf16.msra.mxu0 0
  %3123 = vmatprep.subr.bf16.mxu0 0
  %3124 = vmatpush2.bf16.msra.mxu0 0
  %3125 = vmatprep.subr.bf16.mxu0 0
  %3126 = vmatpush2.bf16.msra.mxu0 0
  %3127 = vmatprep.subr.bf16.mxu0 0
  %3128 = vmatpush2.bf16.msra.mxu0 0
  %3129 = vmatprep.subr.bf16.mxu0 0
  %3130 = vmatpush2.bf16.msra.mxu0 0
  %3131 = vmatprep.mubr.bf16.mxu0 0
  %3132 = vmatmul.mubr.bf16.gmra.mxu0 %v3056
  %v3133 = vpop.f32.mrf.mxu0
  %v3134 = vadd.f32 0.0, %v3133
  %v3135 = vpop.f32.mrf.mxu0
  %v3136 = vadd.f32 0.0, %v3135
  %v3137 = vpop.f32.mrf.mxu0
  %v3138 = vpop.f32.mrf.mxu0
  %3139 = vdwg.mxu0
  %v3144 = vrot.slane %v3093, 1
  %v3145 = vrot.slane %v3095, 1
  %v3146 = vrot.slane %v3134, 1
  %v3147 = vrot.slane %v3136, 1
  %v3152 = vadd.f32 %v1956, %v3144
  %v3153 = vadd.f32 %v1957, %v3145
  %v3154 = vadd.f32 %v1958, %v3146
  %v3155 = vadd.f32 %v1959, %v3147
  %v3156 = vxor.u32 %v3152, 2147483648
  %v3157 = vxor.u32 %v3153, 2147483648
  %v3158 = vxor.u32 %v3154, 2147483648
  %v3159 = vmul.f32 %v3156, 1.442695
  %v3160 = vpow.pop %v3159
  %v3161 = vmul.f32 %v3157, 1.442695
  %v3162 = vpow.pop %v3161
  %v3163 = vmul.f32 %v3158, 1.442695
  %v3164 = vpow.pop %v3163
  %v3165 = vadd.f32 %v3160, 1.0
  %v3166 = vadd.f32 %v3162, 1.0
  %v3167 = vadd.f32 %v3164, 1.0
  %v3168 = vrcp.pop %v3165
  %v3169 = vmul.f32 1.0, %v3168
  %v3170 = vrcp.pop %v3166
  %v3171 = vmul.f32 1.0, %v3170
  %v3172 = vrcp.pop %v3167
  %v3173 = vmul.f32 1.0, %v3172
  %v3174 = vtanh.pop %v3155
  %v3176 = vrot.slane %v3050, 7
  %v3178 = vmul.f32 %v3171, %v3176
  %v3179 = vmul.f32 %v3169, %v3174
  %v3180 = vadd.f32 %v3178, %v3179
  %v3181 = vtanh.pop %v3180
  %v3182 = vmul.f32 %v3173, %v3181
  %3183 = vst [vmem:[#allocation2] sm:$0x80] %v3182
  %v3184 = vld [vmem:[#allocation2] sm:$0xff]
  %v3185 = vld [vmem:[%s9] sm:$0xff]
  %v3186 = vld [vmem:[%s9 + $0x8] sm:$0xff]
  %v3187 = vld [vmem:[%s9 + $0x10] sm:$0xff]
  %v3188 = vld [vmem:[%s9 + $0x18] sm:$0xff]
  %v3189 = vld [vmem:[%s9 + $0x20] sm:$0xff]
  %v3190 = vld [vmem:[%s9 + $0x28] sm:$0xff]
  %v3191 = vld [vmem:[%s9 + $0x30] sm:$0xff]
  %v3192 = vld [vmem:[%s9 + $0x38] sm:$0xff]
  %v3193 = vld [vmem:[%s9 + $0x40] sm:$0xff]
  %v3194 = vld [vmem:[%s9 + $0x48] sm:$0xff]
  %v3195 = vld [vmem:[%s9 + $0x50] sm:$0xff]
  %v3196 = vld [vmem:[%s9 + $0x58] sm:$0xff]
  %v3197 = vld [vmem:[%s9 + $0x60] sm:$0xff]
  %v3198 = vld [vmem:[%s9 + $0x68] sm:$0xff]
  %v3199 = vld [vmem:[%s9 + $0x70] sm:$0xff]
  %v3200 = vld [vmem:[%s9 + $0x78] sm:$0xff]
  %v3201 = vld [vmem:[%s10] sm:$0x1]
  %v3203 = vlaneseq
  %v3204 = vshrl.u32 %v3203, 7
  %v3205 = vsub.s32 0, %v3204
  %v3206 = vrot.slane %v3201, %v3205
  %3208 = vmatprep.subr.mxu0 0.0
  %3209 = vmatpush1.msra.mxu0 %v3200
  %3210 = vmatprep.subr.mxu0 0.0
  %3211 = vmatpush1.msra.mxu0 %v3199
  %3212 = vmatprep.subr.mxu0 0.0
  %3213 = vmatpush1.msra.mxu0 %v3198
  %3214 = vmatprep.subr.mxu0 0.0
  %3215 = vmatpush1.msra.mxu0 %v3197
  %3216 = vmatprep.subr.mxu0 0.0
  %3217 = vmatpush1.msra.mxu0 %v3196
  %3218 = vmatprep.subr.mxu0 0.0
  %3219 = vmatpush1.msra.mxu0 %v3195
  %3220 = vmatprep.subr.mxu0 0.0
  %3221 = vmatpush1.msra.mxu0 %v3194
  %3222 = vmatprep.subr.mxu0 0.0
  %3223 = vmatpush1.msra.mxu0 %v3193
  %3224 = vmatprep.subr.mxu0 0.0
  %3225 = vmatpush1.msra.mxu0 %v3192
  %3226 = vmatprep.subr.mxu0 0.0
  %3227 = vmatpush1.msra.mxu0 %v3191
  %3228 = vmatprep.subr.mxu0 0.0
  %3229 = vmatpush1.msra.mxu0 %v3190
  %3230 = vmatprep.subr.mxu0 0.0
  %3231 = vmatpush1.msra.mxu0 %v3189
  %3232 = vmatprep.subr.mxu0 0.0
  %3233 = vmatpush1.msra.mxu0 %v3188
  %3234 = vmatprep.subr.mxu0 0.0
  %3235 = vmatpush1.msra.mxu0 %v3187
  %3236 = vmatprep.subr.mxu0 0.0
  %3237 = vmatpush1.msra.mxu0 %v3186
  %3238 = vmatprep.subr.mxu0 0.0
  %3239 = vmatpush1.msra.mxu0 %v3185
  %3240 = vmatprep.subr.mxu0 0.0
  %3241 = vmatpush2.msra.mxu0 0.0
  %3242 = vmatprep.subr.mxu0 0.0
  %3243 = vmatpush2.msra.mxu0 0.0
  %3244 = vmatprep.subr.mxu0 0.0
  %3245 = vmatpush2.msra.mxu0 0.0
  %3246 = vmatprep.subr.mxu0 0.0
  %3247 = vmatpush2.msra.mxu0 0.0
  %3248 = vmatprep.subr.mxu0 0.0
  %3249 = vmatpush2.msra.mxu0 0.0
  %3250 = vmatprep.subr.mxu0 0.0
  %3251 = vmatpush2.msra.mxu0 0.0
  %3252 = vmatprep.subr.mxu0 0.0
  %3253 = vmatpush2.msra.mxu0 0.0
  %3254 = vmatprep.subr.mxu0 0.0
  %3255 = vmatpush2.msra.mxu0 0.0
  %3256 = vmatprep.subr.mxu0 0.0
  %3257 = vmatpush2.msra.mxu0 0.0
  %3258 = vmatprep.subr.mxu0 0.0
  %3259 = vmatpush2.msra.mxu0 0.0
  %3260 = vmatprep.subr.mxu0 0.0
  %3261 = vmatpush2.msra.mxu0 0.0
  %3262 = vmatprep.subr.mxu0 0.0
  %3263 = vmatpush2.msra.mxu0 0.0
  %3264 = vmatprep.subr.mxu0 0.0
  %3265 = vmatpush2.msra.mxu0 0.0
  %3266 = vmatprep.subr.mxu0 0.0
  %3267 = vmatpush2.msra.mxu0 0.0
  %3268 = vmatprep.subr.mxu0 0.0
  %3269 = vmatpush2.msra.mxu0 0.0
  %3270 = vmatprep.subr.mxu0 0.0
  %3271 = vmatpush2.msra.mxu0 0.0
  %3272 = vmatprep.mubr.f32.mxu0 0.0
  %3273 = vmatmul.mubr.f32.gmra.mxu0 %v3184
  %v3274 = vpop.f32.mrf.mxu0
  %v3275 = vadd.f32 %v3206, %v3274
  %v3276 = vpop.f32.mrf.mxu0
  %3277 = vdwg.mxu0
  %3278 = vst [vmem:[%s11] sm:$0xff] %v3275
  // Predicated region
  $region46: #{forward.1} parent=0 // pred_check
    _
  $region47: #{forward.1} parent=0 // pred_check_branch
    %3280 = sbr.rel (0) target = $region49
  $region48: #{forward.1} parent=0 // pred_region
    _
  $region49: #{forward.1} parent=0 // pred_fallthru
    _
  // Predicated region
  $region50: #{forward.1} parent=0 // pred_check
    _
  $region51: #{forward.1} parent=0 // pred_check_branch
    %3282 = sbr.rel (0) target = $region53
  $region52: #{forward.1} parent=0 // pred_region
    _
  $region53: #{forward.1} parent=0 // pred_fallthru
    _

</llo_original>
